<compile_context>
chip_gen: v7x
topology: tpu7x:2x2x1
jax: 0.10.0
libtpu: 0.0.40
codegen_flags: <defaults>
</compile_context>

<pallas_src>
import jax
import jax.numpy as jnp
from jax.experimental import pallas as pl
from jax.experimental.pallas import tpu as pltpu

# ----------------------------- model sizes (small demo) -----------------------------
V = 16     # vocab (input_size)
H = 32     # hidden_size
O = 32     # output_size (must equal H for the reference's pointer/generator mix to broadcast)
B = 2      # batch
S = 8      # sequence length
G = 4 * H  # LSTM gate width per direction (gate order i, f, g, o)

assert O == H, "reference module requires output_size == hidden_size"

# ---- packed weight slab (H, W_TOTAL): column offsets --------------------------------
W_ENC_IF = 0                    # encoder fwd  x  -> gates    (H, G)
W_ENC_IB = W_ENC_IF + G         # encoder bwd  x  -> gates    (H, G)
W_ENC_HF = W_ENC_IB + G         # encoder fwd  h  -> gates    (H, G)
W_ENC_HB = W_ENC_HF + G         # encoder bwd  h  -> gates    (H, G)
W_DEC_HH = W_ENC_HB + G         # decoder      h  -> gates    (H, G)
W_DEC_IHB = W_DEC_HH + G        # decoder context -> gates    (H, G)
W_DEC_IHA = W_DEC_IHB + G       # decoder dec_in  -> gates    (O, G)
W_ATT = W_DEC_IHA + G           # [ att_wq (O,H) | att_wkT (H,2H) | att_wo (H,H) ]  width 4H
W_GEN = W_ATT + 4 * H           # [ gen_wa (H,O) | gen_wb (H,O) ]                   width 2O
W_TOTAL = W_GEN + 2 * O         # = 1088

# ---- packed bias / row-vector slab (1, B_TOTAL): column offsets ---------------------
BC_ENC = 0                      # [ enc b_f | enc b_b ]                 width 2G
BC_DEC = BC_ENC + 2 * G         # decoder LSTM bias                     width G
BC_ATT = BC_DEC + G             # [ att bq | att bv | att bo | gen b ]  width 4H
BC_PS = BC_ATT + 4 * H          # [ ps_wa | ps_wb | ps_b | zero pad ]   width 4H
B_TOTAL = BC_PS + 4 * H         # = 640


def _lstm_cell(x_pre, h, c, wh):
    """One LSTM cell step; x_pre already holds x @ W_ih + b (PyTorch gate order i,f,g,o)."""
    gates = x_pre + jnp.dot(h, wh, preferred_element_type=jnp.float32)     # (B, 4H)
    sig = jax.nn.sigmoid(gates)      # full-tile activations (EUP), sliced afterwards
    th = jnp.tanh(gates)
    i = sig[:, 0 * H:1 * H]
    f = sig[:, 1 * H:2 * H]
    g = th[:, 2 * H:3 * H]
    o = sig[:, 3 * H:4 * H]
    c_new = f * c + i * g
    h_new = o * jnp.tanh(c_new)
    return h_new, c_new


# ----------------------------- fused forward kernel -----------------------------
def summarizer_kernel(ids_ref, dec_in_ref, emb_ref, w_ref, wv_ref, b_ref,
                      final_ref, hout_ref, cout_ref, emb_s):
    dec_in = dec_in_ref[...]                                   # (B, O)

    # ---- embedding gather: token ids live in SMEM, table (V,1,H) resident in VMEM ----
    for t in range(S):
        for b in range(B):
            tok = ids_ref[b, t]
            emb_s[pl.ds(t * B + b, 1), :] = emb_ref[tok]       # (1, H)
    emb_flat = emb_s[...]                                      # (S*B, H), row = t*B + b

    # ---- hoisted input projections + biases for BOTH directions: one MXU matmul ----
    xdot = (jnp.dot(emb_flat, w_ref[:, W_ENC_IF:W_ENC_IF + 2 * G],
                    preferred_element_type=jnp.float32)
            + b_ref[:, BC_ENC:BC_ENC + 2 * G])                 # (S*B, 2*4H)

    wh_f = w_ref[:, W_ENC_HF:W_ENC_HF + G]
    wh_b = w_ref[:, W_ENC_HB:W_ENC_HB + G]

    zeros_bh = jnp.zeros((B, H), jnp.float32)
    hf, cf = zeros_bh, zeros_bh
    hb, cb = zeros_bh, zeros_bh
    enc_f = [None] * S
    enc_b = [None] * S
    # fully unrolled S=8 bidirectional scan; only the h @ W_hh dot is on the serial path,
    # state is carried in vregs.
    for t in range(S):
        tb = S - 1 - t
        hf, cf = _lstm_cell(xdot[t * B:(t + 1) * B, 0:G], hf, cf, wh_f)
        hb, cb = _lstm_cell(xdot[tb * B:(tb + 1) * B, G:2 * G], hb, cb, wh_b)
        enc_f[t] = hf
        enc_b[tb] = hb

    # ---- single-head attention (embed_dim=H, kdim=vdim=2H), all in vregs ----
    att_w = w_ref[:, W_ATT:W_ATT + 4 * H]                      # [wq | wkT | wo]
    att_b = b_ref[:, BC_ATT:BC_ATT + 4 * H]                    # [bq | bv | bo | gen_b]
    q = jnp.dot(dec_in, att_w[:, 0:H], preferred_element_type=jnp.float32) + att_b[:, 0:H]
    qk = jnp.dot(q, att_w[:, H:3 * H], preferred_element_type=jnp.float32)     # (B, 2H)
    qk_f, qk_b = qk[:, 0:H], qk[:, H:2 * H]
    scale = 1.0 / float(H) ** 0.5
    # key-projection bias adds a per-batch constant to every score -> cancels in the softmax
    # over the S axis, so omitting it is mathematically exact.
    raw = [(jnp.sum(enc_f[t] * qk_f, axis=-1, keepdims=True)
            + jnp.sum(enc_b[t] * qk_b, axis=-1, keepdims=True)) * scale
           for t in range(S)]                                  # S x (B, 1)
    m = raw[0]
    for t in range(1, S):
        m = jnp.maximum(m, raw[t])
    es = [jnp.exp(r - m) for r in raw]
    denom = es[0]
    for t in range(1, S):
        denom = denom + es[t]
    inv = 1.0 / denom                                          # (B, 1)
    wenc_f, wenc_b = zeros_bh, zeros_bh
    for t in range(S):
        a_t = es[t] * inv                                      # attention weight (B, 1)
        wenc_f = wenc_f + a_t * enc_f[t]
        wenc_b = wenc_b + a_t * enc_b[t]
    ctx = (jnp.dot(wenc_f, wv_ref[0:H, :], preferred_element_type=jnp.float32)
           + jnp.dot(wenc_b, wv_ref[H:2 * H, :], preferred_element_type=jnp.float32)
           + att_b[:, H:2 * H])                                # value proj + bias   (B, H)
    context = (jnp.dot(ctx, att_w[:, 3 * H:4 * H], preferred_element_type=jnp.float32)
               + att_b[:, 2 * H:3 * H])                        # output proj + bias  (B, H)

    # ---- decoder LSTM cell, one step; input = concat(dec_in, context) via split weights ----
    x_pre = (jnp.dot(dec_in, w_ref[:, W_DEC_IHA:W_DEC_IHA + G],
                     preferred_element_type=jnp.float32)
             + jnp.dot(context, w_ref[:, W_DEC_IHB:W_DEC_IHB + G],
                       preferred_element_type=jnp.float32)
             + b_ref[:, BC_DEC:BC_DEC + G])
    # h0 = forward-direction final encoder hidden, c0 = 0 (see TODO in header).
    h_new, c_new = _lstm_cell(x_pre, hf, zeros_bh, w_ref[:, W_DEC_HH:W_DEC_HH + G])

    # ---- output heads; combined = concat(h_new, context) via split weights ----
    ps_row = b_ref[:, BC_PS:BC_PS + 4 * H]                     # [ps_wa | ps_wb | ps_b | pad]
    ps = jax.nn.sigmoid(jnp.sum(h_new * ps_row[:, 0:H], axis=-1, keepdims=True)
                        + jnp.sum(context * ps_row[:, H:2 * H], axis=-1, keepdims=True)
                        + ps_row[:, 2 * H:2 * H + 1])          # (B, 1)

    gen_w = w_ref[:, W_GEN:W_GEN + 2 * O]
    gen = (jnp.dot(h_new, gen_w[:, 0:O], preferred_element_type=jnp.float32)
           + jnp.dot(context, gen_w[:, O:2 * O], preferred_element_type=jnp.float32)
           + att_b[:, 3 * H:4 * H])
    gen = gen - jnp.max(gen, axis=-1, keepdims=True)
    gen_log_softmax = gen - jnp.log(jnp.sum(jnp.exp(gen), axis=-1, keepdims=True))

    pc = context - jnp.max(context, axis=-1, keepdims=True)
    pe = jnp.exp(pc)
    pointer_dist = pe / jnp.sum(pe, axis=-1, keepdims=True)    # (B, H) == (B, O)

    # NOTE: mirrors the reference exactly — mixes a probability with a log-probability.
    final_ref[...] = ps * pointer_dist + (1.0 - ps) * gen_log_softmax
    hout_ref[...] = h_new
    cout_ref[...] = c_new


# ----------------------------- wrapper -----------------------------
@jax.jit
def summarizer_forward(packed, token_ids, sequence_lengths, decoder_input):
    # full-length sequences: pack_padded_sequence is a no-op (see TODO in header)
    del sequence_lengths
    vmem = pl.BlockSpec(memory_space=pltpu.MemorySpace.VMEM)
    smem = pl.BlockSpec(memory_space=pltpu.MemorySpace.SMEM)
    final, h_new, c_new = pl.pallas_call(
        summarizer_kernel,
        out_shape=(
            jax.ShapeDtypeStruct((B, O), jnp.float32),   # final distribution
            jax.ShapeDtypeStruct((B, H), jnp.float32),   # decoder hidden h
            jax.ShapeDtypeStruct((B, H), jnp.float32),   # decoder hidden c
        ),
        in_specs=[smem, vmem, vmem, vmem, vmem, vmem],
        out_specs=(vmem, vmem, vmem),
        scratch_shapes=[pltpu.VMEM((S * B, H), jnp.float32)],   # gathered embeddings
    )(token_ids, decoder_input, packed["emb"], packed["w"], packed["wv"], packed["b"])
    return final, (h_new, c_new)


# ----------------------------- parameters -----------------------------
def init_params(key):
    def u(k, shape, scale=0.1):
        return jax.random.uniform(k, shape, jnp.float32, -scale, scale)

    keys = jax.random.split(key, 24)
    p = {
        "emb": u(keys[0], (V, H)),
        # encoder bi-LSTM (forward / backward direction)
        "enc_wif": u(keys[1], (H, G)), "enc_whf": u(keys[2], (H, G)), "enc_bf": u(keys[3], (1, G)),
        "enc_wib": u(keys[4], (H, G)), "enc_whb": u(keys[5], (H, G)), "enc_bb": u(keys[6], (1, G)),
        # attention (embed_dim=H, kdim=vdim=2H, 1 head)
        "att_wq": u(keys[7], (O, H)), "att_bq": u(keys[8], (1, H)),
        "att_wkT": u(keys[9], (H, 2 * H)),                      # (query-dim, key-feature-dim)
        "att_wv": u(keys[10], (2 * H, H)), "att_bv": u(keys[11], (1, H)),
        "att_wo": u(keys[12], (H, H)), "att_bo": u(keys[13], (1, H)),
        # decoder LSTM cell (input = [dec_in (O), context (H)] -> split weight)
        "dec_wih_a": u(keys[14], (O, G)), "dec_wih_b": u(keys[15], (H, G)),
        "dec_whh": u(keys[16], (H, G)), "dec_bd": u(keys[17], (1, G)),
        # generator Linear(2H -> O), split over [h_new, context]
        "gen_wa": u(keys[18], (H, O)), "gen_wb": u(keys[19], (H, O)), "gen_b": u(keys[20], (1, O)),
        # pointer switch Linear(2H -> 1), stored as row vectors
        "ps_wa": u(keys[21], (1, H)), "ps_wb": u(keys[22], (1, H)), "ps_b": u(keys[23], (1, 1)),
    }
    return p


def pack_params(p):
    """Pack all weights/biases into a few contiguous slabs (few large DMAs, static in-kernel slices)."""
    w_slab = jnp.concatenate([
        p["enc_wif"], p["enc_wib"], p["enc_whf"], p["enc_whb"],
        p["dec_whh"], p["dec_wih_b"], p["dec_wih_a"],
        p["att_wq"], p["att_wkT"], p["att_wo"],
        p["gen_wa"], p["gen_wb"],
    ], axis=1)                                                   # (H, 1088)
    assert w_slab.shape == (H, W_TOTAL)
    b_slab = jnp.concatenate([
        p["enc_bf"], p["enc_bb"], p["dec_bd"],
        p["att_bq"], p["att_bv"], p["att_bo"], p["gen_b"],
        p["ps_wa"], p["ps_wb"], p["ps_b"],
        jnp.zeros((1, 4 * H - 2 * H - 1), jnp.float32),
    ], axis=1)                                                   # (1, 640)
    assert b_slab.shape == (1, B_TOTAL)
    return {
        "emb": p["emb"][:, None, :],     # (V, 1, H): dynamic leading-dim gather inside the kernel
        "w": w_slab,
        "wv": p["att_wv"],               # (2H, H)
        "b": b_slab,
    }


if __name__ == "__main__":
    key = jax.random.PRNGKey(0)
    pkey, tkey = jax.random.split(key)
    params = init_params(pkey)
    packed = pack_params(params)

    token_ids = jax.random.randint(tkey, (B, S), 0, V, dtype=jnp.int32)
    sequence_lengths = jnp.full((B,), S, dtype=jnp.int32)
    decoder_input = jnp.zeros((B, O), dtype=jnp.float32)   # the "None" path of the reference forward

    final_distribution, (dec_h, dec_c) = summarizer_forward(
        packed, token_ids, sequence_lengths, decoder_input)
    jax.block_until_ready((final_distribution, dec_h, dec_c))

    assert final_distribution.shape == (B, O)
    assert dec_h.shape == (B, H) and dec_c.shape == (B, H)
    assert bool(jnp.all(jnp.isfinite(final_distribution)))
    print("KERNEL_OK")
</pallas_src>

<mosaic_0001>
module attributes {stable_mosaic.version = 11 : i64} {
  func.func @summarizer_kernel(%arg0: memref<2x8xi32, #tpu.memory_space<smem>>, %arg1: memref<2x32xf32, #tpu.memory_space<vmem>>, %arg2: memref<16x1x32xf32, #tpu.memory_space<vmem>>, %arg3: memref<32x1088xf32, #tpu.memory_space<vmem>>, %arg4: memref<64x32xf32, #tpu.memory_space<vmem>>, %arg5: memref<1x640xf32, #tpu.memory_space<vmem>>, %arg6: memref<2x32xf32, #tpu.memory_space<vmem>>, %arg7: memref<2x32xf32, #tpu.memory_space<vmem>>, %arg8: memref<2x32xf32, #tpu.memory_space<vmem>>, %arg9: memref<16x32xf32, #tpu.memory_space<vmem>>) attributes {dimension_semantics = [], scalar_prefetch = 0 : i64, scratch_operands = 1 : i64, tpu.core_type = #tpu.core_type<tc>} {
    %c0 = arith.constant 0 : index
    %c0_0 = arith.constant 0 : index
    %0 = vector.load %arg1[%c0, %c0_0] : memref<2x32xf32, #tpu.memory_space<vmem>>, vector<2x32xf32>
    %c0_1 = arith.constant 0 : index
    %c0_2 = arith.constant 0 : index
    %1 = memref.load %arg0[%c0_1, %c0_2] : memref<2x8xi32, #tpu.memory_space<smem>>
    %2 = arith.index_cast %1 : i32 to index
    %c0_3 = arith.constant 0 : index
    %c0_4 = arith.constant 0 : index
    %3 = vector.load %arg2[%2, %c0_3, %c0_4] : memref<16x1x32xf32, #tpu.memory_space<vmem>>, vector<1x1x32xf32>
    %4 = vector.shape_cast %3 : vector<1x1x32xf32> to vector<1x32xf32>
    %c0_5 = arith.constant 0 : index
    %c0_6 = arith.constant 0 : index
    %5 = vector.load %arg9[%c0_5, %c0_6] : memref<16x32xf32, #tpu.memory_space<vmem>>, vector<1x32xf32>
    tpu.vector_store %arg9[%c0_5, %c0_6], %4 {strides = array<i32>} : memref<16x32xf32, #tpu.memory_space<vmem>>, vector<1x32xf32>,
    %c1 = arith.constant 1 : index
    %c0_7 = arith.constant 0 : index
    %6 = memref.load %arg0[%c1, %c0_7] : memref<2x8xi32, #tpu.memory_space<smem>>
    %7 = arith.index_cast %6 : i32 to index
    %c0_8 = arith.constant 0 : index
    %c0_9 = arith.constant 0 : index
    %8 = vector.load %arg2[%7, %c0_8, %c0_9] : memref<16x1x32xf32, #tpu.memory_space<vmem>>, vector<1x1x32xf32>
    %9 = vector.shape_cast %8 : vector<1x1x32xf32> to vector<1x32xf32>
    %c1_10 = arith.constant 1 : index
    %c0_11 = arith.constant 0 : index
    %10 = vector.load %arg9[%c1_10, %c0_11] : memref<16x32xf32, #tpu.memory_space<vmem>>, vector<1x32xf32>
    tpu.vector_store %arg9[%c1_10, %c0_11], %9 {strides = array<i32>} : memref<16x32xf32, #tpu.memory_space<vmem>>, vector<1x32xf32>,
    %c0_12 = arith.constant 0 : index
    %c1_13 = arith.constant 1 : index
    %11 = memref.load %arg0[%c0_12, %c1_13] : memref<2x8xi32, #tpu.memory_space<smem>>
    %12 = arith.index_cast %11 : i32 to index
    %c0_14 = arith.constant 0 : index
    %c0_15 = arith.constant 0 : index
    %13 = vector.load %arg2[%12, %c0_14, %c0_15] : memref<16x1x32xf32, #tpu.memory_space<vmem>>, vector<1x1x32xf32>
    %14 = vector.shape_cast %13 : vector<1x1x32xf32> to vector<1x32xf32>
    %c2 = arith.constant 2 : index
    %c0_16 = arith.constant 0 : index
    %15 = vector.load %arg9[%c2, %c0_16] : memref<16x32xf32, #tpu.memory_space<vmem>>, vector<1x32xf32>
    tpu.vector_store %arg9[%c2, %c0_16], %14 {strides = array<i32>} : memref<16x32xf32, #tpu.memory_space<vmem>>, vector<1x32xf32>,
    %c1_17 = arith.constant 1 : index
    %c1_18 = arith.constant 1 : index
    %16 = memref.load %arg0[%c1_17, %c1_18] : memref<2x8xi32, #tpu.memory_space<smem>>
    %17 = arith.index_cast %16 : i32 to index
    %c0_19 = arith.constant 0 : index
    %c0_20 = arith.constant 0 : index
    %18 = vector.load %arg2[%17, %c0_19, %c0_20] : memref<16x1x32xf32, #tpu.memory_space<vmem>>, vector<1x1x32xf32>
    %19 = vector.shape_cast %18 : vector<1x1x32xf32> to vector<1x32xf32>
    %c3 = arith.constant 3 : index
    %c0_21 = arith.constant 0 : index
    %20 = vector.load %arg9[%c3, %c0_21] : memref<16x32xf32, #tpu.memory_space<vmem>>, vector<1x32xf32>
    tpu.vector_store %arg9[%c3, %c0_21], %19 {strides = array<i32>} : memref<16x32xf32, #tpu.memory_space<vmem>>, vector<1x32xf32>,
    %c0_22 = arith.constant 0 : index
    %c2_23 = arith.constant 2 : index
    %21 = memref.load %arg0[%c0_22, %c2_23] : memref<2x8xi32, #tpu.memory_space<smem>>
    %22 = arith.index_cast %21 : i32 to index
    %c0_24 = arith.constant 0 : index
    %c0_25 = arith.constant 0 : index
    %23 = vector.load %arg2[%22, %c0_24, %c0_25] : memref<16x1x32xf32, #tpu.memory_space<vmem>>, vector<1x1x32xf32>
    %24 = vector.shape_cast %23 : vector<1x1x32xf32> to vector<1x32xf32>
    %c4 = arith.constant 4 : index
    %c0_26 = arith.constant 0 : index
    %25 = vector.load %arg9[%c4, %c0_26] : memref<16x32xf32, #tpu.memory_space<vmem>>, vector<1x32xf32>
    tpu.vector_store %arg9[%c4, %c0_26], %24 {strides = array<i32>} : memref<16x32xf32, #tpu.memory_space<vmem>>, vector<1x32xf32>,
    %c1_27 = arith.constant 1 : index
    %c2_28 = arith.constant 2 : index
    %26 = memref.load %arg0[%c1_27, %c2_28] : memref<2x8xi32, #tpu.memory_space<smem>>
    %27 = arith.index_cast %26 : i32 to index
    %c0_29 = arith.constant 0 : index
    %c0_30 = arith.constant 0 : index
    %28 = vector.load %arg2[%27, %c0_29, %c0_30] : memref<16x1x32xf32, #tpu.memory_space<vmem>>, vector<1x1x32xf32>
    %29 = vector.shape_cast %28 : vector<1x1x32xf32> to vector<1x32xf32>
    %c5 = arith.constant 5 : index
    %c0_31 = arith.constant 0 : index
    %30 = vector.load %arg9[%c5, %c0_31] : memref<16x32xf32, #tpu.memory_space<vmem>>, vector<1x32xf32>
    tpu.vector_store %arg9[%c5, %c0_31], %29 {strides = array<i32>} : memref<16x32xf32, #tpu.memory_space<vmem>>, vector<1x32xf32>,
    %c0_32 = arith.constant 0 : index
    %c3_33 = arith.constant 3 : index
    %31 = memref.load %arg0[%c0_32, %c3_33] : memref<2x8xi32, #tpu.memory_space<smem>>
    %32 = arith.index_cast %31 : i32 to index
    %c0_34 = arith.constant 0 : index
    %c0_35 = arith.constant 0 : index
    %33 = vector.load %arg2[%32, %c0_34, %c0_35] : memref<16x1x32xf32, #tpu.memory_space<vmem>>, vector<1x1x32xf32>
    %34 = vector.shape_cast %33 : vector<1x1x32xf32> to vector<1x32xf32>
    %c6 = arith.constant 6 : index
    %c0_36 = arith.constant 0 : index
    %35 = vector.load %arg9[%c6, %c0_36] : memref<16x32xf32, #tpu.memory_space<vmem>>, vector<1x32xf32>
    tpu.vector_store %arg9[%c6, %c0_36], %34 {strides = array<i32>} : memref<16x32xf32, #tpu.memory_space<vmem>>, vector<1x32xf32>,
    %c1_37 = arith.constant 1 : index
    %c3_38 = arith.constant 3 : index
    %36 = memref.load %arg0[%c1_37, %c3_38] : memref<2x8xi32, #tpu.memory_space<smem>>
    %37 = arith.index_cast %36 : i32 to index
    %c0_39 = arith.constant 0 : index
    %c0_40 = arith.constant 0 : index
    %38 = vector.load %arg2[%37, %c0_39, %c0_40] : memref<16x1x32xf32, #tpu.memory_space<vmem>>, vector<1x1x32xf32>
    %39 = vector.shape_cast %38 : vector<1x1x32xf32> to vector<1x32xf32>
    %c7 = arith.constant 7 : index
    %c0_41 = arith.constant 0 : index
    %40 = vector.load %arg9[%c7, %c0_41] : memref<16x32xf32, #tpu.memory_space<vmem>>, vector<1x32xf32>
    tpu.vector_store %arg9[%c7, %c0_41], %39 {strides = array<i32>} : memref<16x32xf32, #tpu.memory_space<vmem>>, vector<1x32xf32>,
    %c0_42 = arith.constant 0 : index
    %c4_43 = arith.constant 4 : index
    %41 = memref.load %arg0[%c0_42, %c4_43] : memref<2x8xi32, #tpu.memory_space<smem>>
    %42 = arith.index_cast %41 : i32 to index
    %c0_44 = arith.constant 0 : index
    %c0_45 = arith.constant 0 : index
    %43 = vector.load %arg2[%42, %c0_44, %c0_45] : memref<16x1x32xf32, #tpu.memory_space<vmem>>, vector<1x1x32xf32>
    %44 = vector.shape_cast %43 : vector<1x1x32xf32> to vector<1x32xf32>
    %c8 = arith.constant 8 : index
    %c0_46 = arith.constant 0 : index
    %45 = vector.load %arg9[%c8, %c0_46] : memref<16x32xf32, #tpu.memory_space<vmem>>, vector<1x32xf32>
    tpu.vector_store %arg9[%c8, %c0_46], %44 {strides = array<i32>} : memref<16x32xf32, #tpu.memory_space<vmem>>, vector<1x32xf32>,
    %c1_47 = arith.constant 1 : index
    %c4_48 = arith.constant 4 : index
    %46 = memref.load %arg0[%c1_47, %c4_48] : memref<2x8xi32, #tpu.memory_space<smem>>
    %47 = arith.index_cast %46 : i32 to index
    %c0_49 = arith.constant 0 : index
    %c0_50 = arith.constant 0 : index
    %48 = vector.load %arg2[%47, %c0_49, %c0_50] : memref<16x1x32xf32, #tpu.memory_space<vmem>>, vector<1x1x32xf32>
    %49 = vector.shape_cast %48 : vector<1x1x32xf32> to vector<1x32xf32>
    %c9 = arith.constant 9 : index
    %c0_51 = arith.constant 0 : index
    %50 = vector.load %arg9[%c9, %c0_51] : memref<16x32xf32, #tpu.memory_space<vmem>>, vector<1x32xf32>
    tpu.vector_store %arg9[%c9, %c0_51], %49 {strides = array<i32>} : memref<16x32xf32, #tpu.memory_space<vmem>>, vector<1x32xf32>,
    %c0_52 = arith.constant 0 : index
    %c5_53 = arith.constant 5 : index
    %51 = memref.load %arg0[%c0_52, %c5_53] : memref<2x8xi32, #tpu.memory_space<smem>>
    %52 = arith.index_cast %51 : i32 to index
    %c0_54 = arith.constant 0 : index
    %c0_55 = arith.constant 0 : index
    %53 = vector.load %arg2[%52, %c0_54, %c0_55] : memref<16x1x32xf32, #tpu.memory_space<vmem>>, vector<1x1x32xf32>
    %54 = vector.shape_cast %53 : vector<1x1x32xf32> to vector<1x32xf32>
    %c10 = arith.constant 10 : index
    %c0_56 = arith.constant 0 : index
    %55 = vector.load %arg9[%c10, %c0_56] : memref<16x32xf32, #tpu.memory_space<vmem>>, vector<1x32xf32>
    tpu.vector_store %arg9[%c10, %c0_56], %54 {strides = array<i32>} : memref<16x32xf32, #tpu.memory_space<vmem>>, vector<1x32xf32>,
    %c1_57 = arith.constant 1 : index
    %c5_58 = arith.constant 5 : index
    %56 = memref.load %arg0[%c1_57, %c5_58] : memref<2x8xi32, #tpu.memory_space<smem>>
    %57 = arith.index_cast %56 : i32 to index
    %c0_59 = arith.constant 0 : index
    %c0_60 = arith.constant 0 : index
    %58 = vector.load %arg2[%57, %c0_59, %c0_60] : memref<16x1x32xf32, #tpu.memory_space<vmem>>, vector<1x1x32xf32>
    %59 = vector.shape_cast %58 : vector<1x1x32xf32> to vector<1x32xf32>
    %c11 = arith.constant 11 : index
    %c0_61 = arith.constant 0 : index
    %60 = vector.load %arg9[%c11, %c0_61] : memref<16x32xf32, #tpu.memory_space<vmem>>, vector<1x32xf32>
    tpu.vector_store %arg9[%c11, %c0_61], %59 {strides = array<i32>} : memref<16x32xf32, #tpu.memory_space<vmem>>, vector<1x32xf32>,
    %c0_62 = arith.constant 0 : index
    %c6_63 = arith.constant 6 : index
    %61 = memref.load %arg0[%c0_62, %c6_63] : memref<2x8xi32, #tpu.memory_space<smem>>
    %62 = arith.index_cast %61 : i32 to index
    %c0_64 = arith.constant 0 : index
    %c0_65 = arith.constant 0 : index
    %63 = vector.load %arg2[%62, %c0_64, %c0_65] : memref<16x1x32xf32, #tpu.memory_space<vmem>>, vector<1x1x32xf32>
    %64 = vector.shape_cast %63 : vector<1x1x32xf32> to vector<1x32xf32>
    %c12 = arith.constant 12 : index
    %c0_66 = arith.constant 0 : index
    %65 = vector.load %arg9[%c12, %c0_66] : memref<16x32xf32, #tpu.memory_space<vmem>>, vector<1x32xf32>
    tpu.vector_store %arg9[%c12, %c0_66], %64 {strides = array<i32>} : memref<16x32xf32, #tpu.memory_space<vmem>>, vector<1x32xf32>,
    %c1_67 = arith.constant 1 : index
    %c6_68 = arith.constant 6 : index
    %66 = memref.load %arg0[%c1_67, %c6_68] : memref<2x8xi32, #tpu.memory_space<smem>>
    %67 = arith.index_cast %66 : i32 to index
    %c0_69 = arith.constant 0 : index
    %c0_70 = arith.constant 0 : index
    %68 = vector.load %arg2[%67, %c0_69, %c0_70] : memref<16x1x32xf32, #tpu.memory_space<vmem>>, vector<1x1x32xf32>
    %69 = vector.shape_cast %68 : vector<1x1x32xf32> to vector<1x32xf32>
    %c13 = arith.constant 13 : index
    %c0_71 = arith.constant 0 : index
    %70 = vector.load %arg9[%c13, %c0_71] : memref<16x32xf32, #tpu.memory_space<vmem>>, vector<1x32xf32>
    tpu.vector_store %arg9[%c13, %c0_71], %69 {strides = array<i32>} : memref<16x32xf32, #tpu.memory_space<vmem>>, vector<1x32xf32>,
    %c0_72 = arith.constant 0 : index
    %c7_73 = arith.constant 7 : index
    %71 = memref.load %arg0[%c0_72, %c7_73] : memref<2x8xi32, #tpu.memory_space<smem>>
    %72 = arith.index_cast %71 : i32 to index
    %c0_74 = arith.constant 0 : index
    %c0_75 = arith.constant 0 : index
    %73 = vector.load %arg2[%72, %c0_74, %c0_75] : memref<16x1x32xf32, #tpu.memory_space<vmem>>, vector<1x1x32xf32>
    %74 = vector.shape_cast %73 : vector<1x1x32xf32> to vector<1x32xf32>
    %c14 = arith.constant 14 : index
    %c0_76 = arith.constant 0 : index
    %75 = vector.load %arg9[%c14, %c0_76] : memref<16x32xf32, #tpu.memory_space<vmem>>, vector<1x32xf32>
    tpu.vector_store %arg9[%c14, %c0_76], %74 {strides = array<i32>} : memref<16x32xf32, #tpu.memory_space<vmem>>, vector<1x32xf32>,
    %c1_77 = arith.constant 1 : index
    %c7_78 = arith.constant 7 : index
    %76 = memref.load %arg0[%c1_77, %c7_78] : memref<2x8xi32, #tpu.memory_space<smem>>
    %77 = arith.index_cast %76 : i32 to index
    %c0_79 = arith.constant 0 : index
    %c0_80 = arith.constant 0 : index
    %78 = vector.load %arg2[%77, %c0_79, %c0_80] : memref<16x1x32xf32, #tpu.memory_space<vmem>>, vector<1x1x32xf32>
    %79 = vector.shape_cast %78 : vector<1x1x32xf32> to vector<1x32xf32>
    %c15 = arith.constant 15 : index
    %c0_81 = arith.constant 0 : index
    %80 = vector.load %arg9[%c15, %c0_81] : memref<16x32xf32, #tpu.memory_space<vmem>>, vector<1x32xf32>
    tpu.vector_store %arg9[%c15, %c0_81], %79 {strides = array<i32>} : memref<16x32xf32, #tpu.memory_space<vmem>>, vector<1x32xf32>,
    %c0_82 = arith.constant 0 : index
    %c0_83 = arith.constant 0 : index
    %81 = vector.load %arg9[%c0_82, %c0_83] : memref<16x32xf32, #tpu.memory_space<vmem>>, vector<16x32xf32>
    %c0_84 = arith.constant 0 : index
    %c0_85 = arith.constant 0 : index
    %82 = vector.load %arg3[%c0_84, %c0_85] : memref<32x1088xf32, #tpu.memory_space<vmem>>, vector<32x256xf32>
    %cst = arith.constant dense<0.000000e+00> : vector<16x256xf32>
    %83 = tpu.matmul %81, %82, %cst {dimension_numbers = #tpu.dot_dimension_numbers<[1], [0], [0], [1], [0, 0, 1, 1], [], []>} : vector<16x32xf32>, vector<32x256xf32>, vector<16x256xf32> -> vector<16x256xf32>
    %c0_86 = arith.constant 0 : index
    %c0_87 = arith.constant 0 : index
    %84 = vector.load %arg5[%c0_86, %c0_87] : memref<1x640xf32, #tpu.memory_space<vmem>>, vector<1x256xf32>
    %85 = vector.broadcast %84 : vector<1x256xf32> to vector<16x256xf32>
    %86 = arith.addf %83, %85 : vector<16x256xf32>
    %c0_88 = arith.constant 0 : index
    %c256 = arith.constant 256 : index
    %87 = vector.load %arg3[%c0_88, %c256] : memref<32x1088xf32, #tpu.memory_space<vmem>>, vector<32x128xf32>
    %c0_89 = arith.constant 0 : index
    %c384 = arith.constant 384 : index
    %88 = vector.load %arg3[%c0_89, %c384] : memref<32x1088xf32, #tpu.memory_space<vmem>>, vector<32x128xf32>
    %cst_90 = arith.constant 0.000000e+00 : f32
    %89 = vector.broadcast %cst_90 : f32 to vector<2x32xf32>
    %90 = vector.extract_strided_slice %86 {offsets = [0, 0], sizes = [2, 128], strides = [1, 1]} : vector<16x256xf32> to vector<2x128xf32>
    %cst_91 = arith.constant dense<0.000000e+00> : vector<2x128xf32>
    %91 = tpu.matmul %89, %87, %cst_91 {dimension_numbers = #tpu.dot_dimension_numbers<[1], [0], [0], [1], [0, 0, 1, 1], [], []>} : vector<2x32xf32>, vector<32x128xf32>, vector<2x128xf32> -> vector<2x128xf32>
    %92 = arith.addf %90, %91 : vector<2x128xf32>
    %93 = arith.negf %92 : vector<2x128xf32>
    %94 = math.exp %93 : vector<2x128xf32>
    %cst_92 = arith.constant 1.000000e+00 : f32
    %95 = vector.broadcast %cst_92 : f32 to vector<2x128xf32>
    %96 = arith.addf %95, %94 : vector<2x128xf32>
    %97 = arith.divf %95, %96 : vector<2x128xf32>
    %98 = math.tanh %92 : vector<2x128xf32>
    %99 = vector.extract_strided_slice %97 {offsets = [0, 0], sizes = [2, 32], strides = [1, 1]} : vector<2x128xf32> to vector<2x32xf32>
    %100 = vector.extract_strided_slice %97 {offsets = [0, 32], sizes = [2, 32], strides = [1, 1]} : vector<2x128xf32> to vector<2x32xf32>
    %101 = vector.extract_strided_slice %98 {offsets = [0, 64], sizes = [2, 32], strides = [1, 1]} : vector<2x128xf32> to vector<2x32xf32>
    %102 = vector.extract_strided_slice %97 {offsets = [0, 96], sizes = [2, 32], strides = [1, 1]} : vector<2x128xf32> to vector<2x32xf32>
    %103 = arith.mulf %100, %89 : vector<2x32xf32>
    %104 = arith.mulf %99, %101 : vector<2x32xf32>
    %105 = arith.addf %103, %104 : vector<2x32xf32>
    %106 = math.tanh %105 : vector<2x32xf32>
    %107 = arith.mulf %102, %106 : vector<2x32xf32>
    %108 = vector.extract_strided_slice %86 {offsets = [14, 128], sizes = [2, 128], strides = [1, 1]} : vector<16x256xf32> to vector<2x128xf32>
    %cst_93 = arith.constant dense<0.000000e+00> : vector<2x128xf32>
    %109 = tpu.matmul %89, %88, %cst_93 {dimension_numbers = #tpu.dot_dimension_numbers<[1], [0], [0], [1], [0, 0, 1, 1], [], []>} : vector<2x32xf32>, vector<32x128xf32>, vector<2x128xf32> -> vector<2x128xf32>
    %110 = arith.addf %108, %109 : vector<2x128xf32>
    %111 = arith.negf %110 : vector<2x128xf32>
    %112 = math.exp %111 : vector<2x128xf32>
    %cst_94 = arith.constant 1.000000e+00 : f32
    %113 = vector.broadcast %cst_94 : f32 to vector<2x128xf32>
    %114 = arith.addf %113, %112 : vector<2x128xf32>
    %115 = arith.divf %113, %114 : vector<2x128xf32>
    %116 = math.tanh %110 : vector<2x128xf32>
    %117 = vector.extract_strided_slice %115 {offsets = [0, 0], sizes = [2, 32], strides = [1, 1]} : vector<2x128xf32> to vector<2x32xf32>
    %118 = vector.extract_strided_slice %115 {offsets = [0, 32], sizes = [2, 32], strides = [1, 1]} : vector<2x128xf32> to vector<2x32xf32>
    %119 = vector.extract_strided_slice %116 {offsets = [0, 64], sizes = [2, 32], strides = [1, 1]} : vector<2x128xf32> to vector<2x32xf32>
    %120 = vector.extract_strided_slice %115 {offsets = [0, 96], sizes = [2, 32], strides = [1, 1]} : vector<2x128xf32> to vector<2x32xf32>
    %121 = arith.mulf %118, %89 : vector<2x32xf32>
    %122 = arith.mulf %117, %119 : vector<2x32xf32>
    %123 = arith.addf %121, %122 : vector<2x32xf32>
    %124 = math.tanh %123 : vector<2x32xf32>
    %125 = arith.mulf %120, %124 : vector<2x32xf32>
    %126 = vector.extract_strided_slice %86 {offsets = [2, 0], sizes = [2, 128], strides = [1, 1]} : vector<16x256xf32> to vector<2x128xf32>
    %cst_95 = arith.constant dense<0.000000e+00> : vector<2x128xf32>
    %127 = tpu.matmul %107, %87, %cst_95 {dimension_numbers = #tpu.dot_dimension_numbers<[1], [0], [0], [1], [0, 0, 1, 1], [], []>} : vector<2x32xf32>, vector<32x128xf32>, vector<2x128xf32> -> vector<2x128xf32>
    %128 = arith.addf %126, %127 : vector<2x128xf32>
    %129 = arith.negf %128 : vector<2x128xf32>
    %130 = math.exp %129 : vector<2x128xf32>
    %cst_96 = arith.constant 1.000000e+00 : f32
    %131 = vector.broadcast %cst_96 : f32 to vector<2x128xf32>
    %132 = arith.addf %131, %130 : vector<2x128xf32>
    %133 = arith.divf %131, %132 : vector<2x128xf32>
    %134 = math.tanh %128 : vector<2x128xf32>
    %135 = vector.extract_strided_slice %133 {offsets = [0, 0], sizes = [2, 32], strides = [1, 1]} : vector<2x128xf32> to vector<2x32xf32>
    %136 = vector.extract_strided_slice %133 {offsets = [0, 32], sizes = [2, 32], strides = [1, 1]} : vector<2x128xf32> to vector<2x32xf32>
    %137 = vector.extract_strided_slice %134 {offsets = [0, 64], sizes = [2, 32], strides = [1, 1]} : vector<2x128xf32> to vector<2x32xf32>
    %138 = vector.extract_strided_slice %133 {offsets = [0, 96], sizes = [2, 32], strides = [1, 1]} : vector<2x128xf32> to vector<2x32xf32>
    %139 = arith.mulf %136, %105 : vector<2x32xf32>
    %140 = arith.mulf %135, %137 : vector<2x32xf32>
    %141 = arith.addf %139, %140 : vector<2x32xf32>
    %142 = math.tanh %141 : vector<2x32xf32>
    %143 = arith.mulf %138, %142 : vector<2x32xf32>
    %144 = vector.extract_strided_slice %86 {offsets = [12, 128], sizes = [2, 128], strides = [1, 1]} : vector<16x256xf32> to vector<2x128xf32>
    %cst_97 = arith.constant dense<0.000000e+00> : vector<2x128xf32>
    %145 = tpu.matmul %125, %88, %cst_97 {dimension_numbers = #tpu.dot_dimension_numbers<[1], [0], [0], [1], [0, 0, 1, 1], [], []>} : vector<2x32xf32>, vector<32x128xf32>, vector<2x128xf32> -> vector<2x128xf32>
    %146 = arith.addf %144, %145 : vector<2x128xf32>
    %147 = arith.negf %146 : vector<2x128xf32>
    %148 = math.exp %147 : vector<2x128xf32>
    %cst_98 = arith.constant 1.000000e+00 : f32
    %149 = vector.broadcast %cst_98 : f32 to vector<2x128xf32>
    %150 = arith.addf %149, %148 : vector<2x128xf32>
    %151 = arith.divf %149, %150 : vector<2x128xf32>
    %152 = math.tanh %146 : vector<2x128xf32>
    %153 = vector.extract_strided_slice %151 {offsets = [0, 0], sizes = [2, 32], strides = [1, 1]} : vector<2x128xf32> to vector<2x32xf32>
    %154 = vector.extract_strided_slice %151 {offsets = [0, 32], sizes = [2, 32], strides = [1, 1]} : vector<2x128xf32> to vector<2x32xf32>
    %155 = vector.extract_strided_slice %152 {offsets = [0, 64], sizes = [2, 32], strides = [1, 1]} : vector<2x128xf32> to vector<2x32xf32>
    %156 = vector.extract_strided_slice %151 {offsets = [0, 96], sizes = [2, 32], strides = [1, 1]} : vector<2x128xf32> to vector<2x32xf32>
    %157 = arith.mulf %154, %123 : vector<2x32xf32>
    %158 = arith.mulf %153, %155 : vector<2x32xf32>
    %159 = arith.addf %157, %158 : vector<2x32xf32>
    %160 = math.tanh %159 : vector<2x32xf32>
    %161 = arith.mulf %156, %160 : vector<2x32xf32>
    %162 = vector.extract_strided_slice %86 {offsets = [4, 0], sizes = [2, 128], strides = [1, 1]} : vector<16x256xf32> to vector<2x128xf32>
    %cst_99 = arith.constant dense<0.000000e+00> : vector<2x128xf32>
    %163 = tpu.matmul %143, %87, %cst_99 {dimension_numbers = #tpu.dot_dimension_numbers<[1], [0], [0], [1], [0, 0, 1, 1], [], []>} : vector<2x32xf32>, vector<32x128xf32>, vector<2x128xf32> -> vector<2x128xf32>
    %164 = arith.addf %162, %163 : vector<2x128xf32>
    %165 = arith.negf %164 : vector<2x128xf32>
    %166 = math.exp %165 : vector<2x128xf32>
    %cst_100 = arith.constant 1.000000e+00 : f32
    %167 = vector.broadcast %cst_100 : f32 to vector<2x128xf32>
    %168 = arith.addf %167, %166 : vector<2x128xf32>
    %169 = arith.divf %167, %168 : vector<2x128xf32>
    %170 = math.tanh %164 : vector<2x128xf32>
    %171 = vector.extract_strided_slice %169 {offsets = [0, 0], sizes = [2, 32], strides = [1, 1]} : vector<2x128xf32> to vector<2x32xf32>
    %172 = vector.extract_strided_slice %169 {offsets = [0, 32], sizes = [2, 32], strides = [1, 1]} : vector<2x128xf32> to vector<2x32xf32>
    %173 = vector.extract_strided_slice %170 {offsets = [0, 64], sizes = [2, 32], strides = [1, 1]} : vector<2x128xf32> to vector<2x32xf32>
    %174 = vector.extract_strided_slice %169 {offsets = [0, 96], sizes = [2, 32], strides = [1, 1]} : vector<2x128xf32> to vector<2x32xf32>
    %175 = arith.mulf %172, %141 : vector<2x32xf32>
    %176 = arith.mulf %171, %173 : vector<2x32xf32>
    %177 = arith.addf %175, %176 : vector<2x32xf32>
    %178 = math.tanh %177 : vector<2x32xf32>
    %179 = arith.mulf %174, %178 : vector<2x32xf32>
    %180 = vector.extract_strided_slice %86 {offsets = [10, 128], sizes = [2, 128], strides = [1, 1]} : vector<16x256xf32> to vector<2x128xf32>
    %cst_101 = arith.constant dense<0.000000e+00> : vector<2x128xf32>
    %181 = tpu.matmul %161, %88, %cst_101 {dimension_numbers = #tpu.dot_dimension_numbers<[1], [0], [0], [1], [0, 0, 1, 1], [], []>} : vector<2x32xf32>, vector<32x128xf32>, vector<2x128xf32> -> vector<2x128xf32>
    %182 = arith.addf %180, %181 : vector<2x128xf32>
    %183 = arith.negf %182 : vector<2x128xf32>
    %184 = math.exp %183 : vector<2x128xf32>
    %cst_102 = arith.constant 1.000000e+00 : f32
    %185 = vector.broadcast %cst_102 : f32 to vector<2x128xf32>
    %186 = arith.addf %185, %184 : vector<2x128xf32>
    %187 = arith.divf %185, %186 : vector<2x128xf32>
    %188 = math.tanh %182 : vector<2x128xf32>
    %189 = vector.extract_strided_slice %187 {offsets = [0, 0], sizes = [2, 32], strides = [1, 1]} : vector<2x128xf32> to vector<2x32xf32>
    %190 = vector.extract_strided_slice %187 {offsets = [0, 32], sizes = [2, 32], strides = [1, 1]} : vector<2x128xf32> to vector<2x32xf32>
    %191 = vector.extract_strided_slice %188 {offsets = [0, 64], sizes = [2, 32], strides = [1, 1]} : vector<2x128xf32> to vector<2x32xf32>
    %192 = vector.extract_strided_slice %187 {offsets = [0, 96], sizes = [2, 32], strides = [1, 1]} : vector<2x128xf32> to vector<2x32xf32>
    %193 = arith.mulf %190, %159 : vector<2x32xf32>
    %194 = arith.mulf %189, %191 : vector<2x32xf32>
    %195 = arith.addf %193, %194 : vector<2x32xf32>
    %196 = math.tanh %195 : vector<2x32xf32>
    %197 = arith.mulf %192, %196 : vector<2x32xf32>
    %198 = vector.extract_strided_slice %86 {offsets = [6, 0], sizes = [2, 128], strides = [1, 1]} : vector<16x256xf32> to vector<2x128xf32>
    %cst_103 = arith.constant dense<0.000000e+00> : vector<2x128xf32>
    %199 = tpu.matmul %179, %87, %cst_103 {dimension_numbers = #tpu.dot_dimension_numbers<[1], [0], [0], [1], [0, 0, 1, 1], [], []>} : vector<2x32xf32>, vector<32x128xf32>, vector<2x128xf32> -> vector<2x128xf32>
    %200 = arith.addf %198, %199 : vector<2x128xf32>
    %201 = arith.negf %200 : vector<2x128xf32>
    %202 = math.exp %201 : vector<2x128xf32>
    %cst_104 = arith.constant 1.000000e+00 : f32
    %203 = vector.broadcast %cst_104 : f32 to vector<2x128xf32>
    %204 = arith.addf %203, %202 : vector<2x128xf32>
    %205 = arith.divf %203, %204 : vector<2x128xf32>
    %206 = math.tanh %200 : vector<2x128xf32>
    %207 = vector.extract_strided_slice %205 {offsets = [0, 0], sizes = [2, 32], strides = [1, 1]} : vector<2x128xf32> to vector<2x32xf32>
    %208 = vector.extract_strided_slice %205 {offsets = [0, 32], sizes = [2, 32], strides = [1, 1]} : vector<2x128xf32> to vector<2x32xf32>
    %209 = vector.extract_strided_slice %206 {offsets = [0, 64], sizes = [2, 32], strides = [1, 1]} : vector<2x128xf32> to vector<2x32xf32>
    %210 = vector.extract_strided_slice %205 {offsets = [0, 96], sizes = [2, 32], strides = [1, 1]} : vector<2x128xf32> to vector<2x32xf32>
    %211 = arith.mulf %208, %177 : vector<2x32xf32>
    %212 = arith.mulf %207, %209 : vector<2x32xf32>
    %213 = arith.addf %211, %212 : vector<2x32xf32>
    %214 = math.tanh %213 : vector<2x32xf32>
    %215 = arith.mulf %210, %214 : vector<2x32xf32>
    %216 = vector.extract_strided_slice %86 {offsets = [8, 128], sizes = [2, 128], strides = [1, 1]} : vector<16x256xf32> to vector<2x128xf32>
    %cst_105 = arith.constant dense<0.000000e+00> : vector<2x128xf32>
    %217 = tpu.matmul %197, %88, %cst_105 {dimension_numbers = #tpu.dot_dimension_numbers<[1], [0], [0], [1], [0, 0, 1, 1], [], []>} : vector<2x32xf32>, vector<32x128xf32>, vector<2x128xf32> -> vector<2x128xf32>
    %218 = arith.addf %216, %217 : vector<2x128xf32>
    %219 = arith.negf %218 : vector<2x128xf32>
    %220 = math.exp %219 : vector<2x128xf32>
    %cst_106 = arith.constant 1.000000e+00 : f32
    %221 = vector.broadcast %cst_106 : f32 to vector<2x128xf32>
    %222 = arith.addf %221, %220 : vector<2x128xf32>
    %223 = arith.divf %221, %222 : vector<2x128xf32>
    %224 = math.tanh %218 : vector<2x128xf32>
    %225 = vector.extract_strided_slice %223 {offsets = [0, 0], sizes = [2, 32], strides = [1, 1]} : vector<2x128xf32> to vector<2x32xf32>
    %226 = vector.extract_strided_slice %223 {offsets = [0, 32], sizes = [2, 32], strides = [1, 1]} : vector<2x128xf32> to vector<2x32xf32>
    %227 = vector.extract_strided_slice %224 {offsets = [0, 64], sizes = [2, 32], strides = [1, 1]} : vector<2x128xf32> to vector<2x32xf32>
    %228 = vector.extract_strided_slice %223 {offsets = [0, 96], sizes = [2, 32], strides = [1, 1]} : vector<2x128xf32> to vector<2x32xf32>
    %229 = arith.mulf %226, %195 : vector<2x32xf32>
    %230 = arith.mulf %225, %227 : vector<2x32xf32>
    %231 = arith.addf %229, %230 : vector<2x32xf32>
    %232 = math.tanh %231 : vector<2x32xf32>
    %233 = arith.mulf %228, %232 : vector<2x32xf32>
    %234 = vector.extract_strided_slice %86 {offsets = [8, 0], sizes = [2, 128], strides = [1, 1]} : vector<16x256xf32> to vector<2x128xf32>
    %cst_107 = arith.constant dense<0.000000e+00> : vector<2x128xf32>
    %235 = tpu.matmul %215, %87, %cst_107 {dimension_numbers = #tpu.dot_dimension_numbers<[1], [0], [0], [1], [0, 0, 1, 1], [], []>} : vector<2x32xf32>, vector<32x128xf32>, vector<2x128xf32> -> vector<2x128xf32>
    %236 = arith.addf %234, %235 : vector<2x128xf32>
    %237 = arith.negf %236 : vector<2x128xf32>
    %238 = math.exp %237 : vector<2x128xf32>
    %cst_108 = arith.constant 1.000000e+00 : f32
    %239 = vector.broadcast %cst_108 : f32 to vector<2x128xf32>
    %240 = arith.addf %239, %238 : vector<2x128xf32>
    %241 = arith.divf %239, %240 : vector<2x128xf32>
    %242 = math.tanh %236 : vector<2x128xf32>
    %243 = vector.extract_strided_slice %241 {offsets = [0, 0], sizes = [2, 32], strides = [1, 1]} : vector<2x128xf32> to vector<2x32xf32>
    %244 = vector.extract_strided_slice %241 {offsets = [0, 32], sizes = [2, 32], strides = [1, 1]} : vector<2x128xf32> to vector<2x32xf32>
    %245 = vector.extract_strided_slice %242 {offsets = [0, 64], sizes = [2, 32], strides = [1, 1]} : vector<2x128xf32> to vector<2x32xf32>
    %246 = vector.extract_strided_slice %241 {offsets = [0, 96], sizes = [2, 32], strides = [1, 1]} : vector<2x128xf32> to vector<2x32xf32>
    %247 = arith.mulf %244, %213 : vector<2x32xf32>
    %248 = arith.mulf %243, %245 : vector<2x32xf32>
    %249 = arith.addf %247, %248 : vector<2x32xf32>
    %250 = math.tanh %249 : vector<2x32xf32>
    %251 = arith.mulf %246, %250 : vector<2x32xf32>
    %252 = vector.extract_strided_slice %86 {offsets = [6, 128], sizes = [2, 128], strides = [1, 1]} : vector<16x256xf32> to vector<2x128xf32>
    %cst_109 = arith.constant dense<0.000000e+00> : vector<2x128xf32>
    %253 = tpu.matmul %233, %88, %cst_109 {dimension_numbers = #tpu.dot_dimension_numbers<[1], [0], [0], [1], [0, 0, 1, 1], [], []>} : vector<2x32xf32>, vector<32x128xf32>, vector<2x128xf32> -> vector<2x128xf32>
    %254 = arith.addf %252, %253 : vector<2x128xf32>
    %255 = arith.negf %254 : vector<2x128xf32>
    %256 = math.exp %255 : vector<2x128xf32>
    %cst_110 = arith.constant 1.000000e+00 : f32
    %257 = vector.broadcast %cst_110 : f32 to vector<2x128xf32>
    %258 = arith.addf %257, %256 : vector<2x128xf32>
    %259 = arith.divf %257, %258 : vector<2x128xf32>
    %260 = math.tanh %254 : vector<2x128xf32>
    %261 = vector.extract_strided_slice %259 {offsets = [0, 0], sizes = [2, 32], strides = [1, 1]} : vector<2x128xf32> to vector<2x32xf32>
    %262 = vector.extract_strided_slice %259 {offsets = [0, 32], sizes = [2, 32], strides = [1, 1]} : vector<2x128xf32> to vector<2x32xf32>
    %263 = vector.extract_strided_slice %260 {offsets = [0, 64], sizes = [2, 32], strides = [1, 1]} : vector<2x128xf32> to vector<2x32xf32>
    %264 = vector.extract_strided_slice %259 {offsets = [0, 96], sizes = [2, 32], strides = [1, 1]} : vector<2x128xf32> to vector<2x32xf32>
    %265 = arith.mulf %262, %231 : vector<2x32xf32>
    %266 = arith.mulf %261, %263 : vector<2x32xf32>
    %267 = arith.addf %265, %266 : vector<2x32xf32>
    %268 = math.tanh %267 : vector<2x32xf32>
    %269 = arith.mulf %264, %268 : vector<2x32xf32>
    %270 = vector.extract_strided_slice %86 {offsets = [10, 0], sizes = [2, 128], strides = [1, 1]} : vector<16x256xf32> to vector<2x128xf32>
    %cst_111 = arith.constant dense<0.000000e+00> : vector<2x128xf32>
    %271 = tpu.matmul %251, %87, %cst_111 {dimension_numbers = #tpu.dot_dimension_numbers<[1], [0], [0], [1], [0, 0, 1, 1], [], []>} : vector<2x32xf32>, vector<32x128xf32>, vector<2x128xf32> -> vector<2x128xf32>
    %272 = arith.addf %270, %271 : vector<2x128xf32>
    %273 = arith.negf %272 : vector<2x128xf32>
    %274 = math.exp %273 : vector<2x128xf32>
    %cst_112 = arith.constant 1.000000e+00 : f32
    %275 = vector.broadcast %cst_112 : f32 to vector<2x128xf32>
    %276 = arith.addf %275, %274 : vector<2x128xf32>
    %277 = arith.divf %275, %276 : vector<2x128xf32>
    %278 = math.tanh %272 : vector<2x128xf32>
    %279 = vector.extract_strided_slice %277 {offsets = [0, 0], sizes = [2, 32], strides = [1, 1]} : vector<2x128xf32> to vector<2x32xf32>
    %280 = vector.extract_strided_slice %277 {offsets = [0, 32], sizes = [2, 32], strides = [1, 1]} : vector<2x128xf32> to vector<2x32xf32>
    %281 = vector.extract_strided_slice %278 {offsets = [0, 64], sizes = [2, 32], strides = [1, 1]} : vector<2x128xf32> to vector<2x32xf32>
    %282 = vector.extract_strided_slice %277 {offsets = [0, 96], sizes = [2, 32], strides = [1, 1]} : vector<2x128xf32> to vector<2x32xf32>
    %283 = arith.mulf %280, %249 : vector<2x32xf32>
    %284 = arith.mulf %279, %281 : vector<2x32xf32>
    %285 = arith.addf %283, %284 : vector<2x32xf32>
    %286 = math.tanh %285 : vector<2x32xf32>
    %287 = arith.mulf %282, %286 : vector<2x32xf32>
    %288 = vector.extract_strided_slice %86 {offsets = [4, 128], sizes = [2, 128], strides = [1, 1]} : vector<16x256xf32> to vector<2x128xf32>
    %cst_113 = arith.constant dense<0.000000e+00> : vector<2x128xf32>
    %289 = tpu.matmul %269, %88, %cst_113 {dimension_numbers = #tpu.dot_dimension_numbers<[1], [0], [0], [1], [0, 0, 1, 1], [], []>} : vector<2x32xf32>, vector<32x128xf32>, vector<2x128xf32> -> vector<2x128xf32>
    %290 = arith.addf %288, %289 : vector<2x128xf32>
    %291 = arith.negf %290 : vector<2x128xf32>
    %292 = math.exp %291 : vector<2x128xf32>
    %cst_114 = arith.constant 1.000000e+00 : f32
    %293 = vector.broadcast %cst_114 : f32 to vector<2x128xf32>
    %294 = arith.addf %293, %292 : vector<2x128xf32>
    %295 = arith.divf %293, %294 : vector<2x128xf32>
    %296 = math.tanh %290 : vector<2x128xf32>
    %297 = vector.extract_strided_slice %295 {offsets = [0, 0], sizes = [2, 32], strides = [1, 1]} : vector<2x128xf32> to vector<2x32xf32>
    %298 = vector.extract_strided_slice %295 {offsets = [0, 32], sizes = [2, 32], strides = [1, 1]} : vector<2x128xf32> to vector<2x32xf32>
    %299 = vector.extract_strided_slice %296 {offsets = [0, 64], sizes = [2, 32], strides = [1, 1]} : vector<2x128xf32> to vector<2x32xf32>
    %300 = vector.extract_strided_slice %295 {offsets = [0, 96], sizes = [2, 32], strides = [1, 1]} : vector<2x128xf32> to vector<2x32xf32>
    %301 = arith.mulf %298, %267 : vector<2x32xf32>
    %302 = arith.mulf %297, %299 : vector<2x32xf32>
    %303 = arith.addf %301, %302 : vector<2x32xf32>
    %304 = math.tanh %303 : vector<2x32xf32>
    %305 = arith.mulf %300, %304 : vector<2x32xf32>
    %306 = vector.extract_strided_slice %86 {offsets = [12, 0], sizes = [2, 128], strides = [1, 1]} : vector<16x256xf32> to vector<2x128xf32>
    %cst_115 = arith.constant dense<0.000000e+00> : vector<2x128xf32>
    %307 = tpu.matmul %287, %87, %cst_115 {dimension_numbers = #tpu.dot_dimension_numbers<[1], [0], [0], [1], [0, 0, 1, 1], [], []>} : vector<2x32xf32>, vector<32x128xf32>, vector<2x128xf32> -> vector<2x128xf32>
    %308 = arith.addf %306, %307 : vector<2x128xf32>
    %309 = arith.negf %308 : vector<2x128xf32>
    %310 = math.exp %309 : vector<2x128xf32>
    %cst_116 = arith.constant 1.000000e+00 : f32
    %311 = vector.broadcast %cst_116 : f32 to vector<2x128xf32>
    %312 = arith.addf %311, %310 : vector<2x128xf32>
    %313 = arith.divf %311, %312 : vector<2x128xf32>
    %314 = math.tanh %308 : vector<2x128xf32>
    %315 = vector.extract_strided_slice %313 {offsets = [0, 0], sizes = [2, 32], strides = [1, 1]} : vector<2x128xf32> to vector<2x32xf32>
    %316 = vector.extract_strided_slice %313 {offsets = [0, 32], sizes = [2, 32], strides = [1, 1]} : vector<2x128xf32> to vector<2x32xf32>
    %317 = vector.extract_strided_slice %314 {offsets = [0, 64], sizes = [2, 32], strides = [1, 1]} : vector<2x128xf32> to vector<2x32xf32>
    %318 = vector.extract_strided_slice %313 {offsets = [0, 96], sizes = [2, 32], strides = [1, 1]} : vector<2x128xf32> to vector<2x32xf32>
    %319 = arith.mulf %316, %285 : vector<2x32xf32>
    %320 = arith.mulf %315, %317 : vector<2x32xf32>
    %321 = arith.addf %319, %320 : vector<2x32xf32>
    %322 = math.tanh %321 : vector<2x32xf32>
    %323 = arith.mulf %318, %322 : vector<2x32xf32>
    %324 = vector.extract_strided_slice %86 {offsets = [2, 128], sizes = [2, 128], strides = [1, 1]} : vector<16x256xf32> to vector<2x128xf32>
    %cst_117 = arith.constant dense<0.000000e+00> : vector<2x128xf32>
    %325 = tpu.matmul %305, %88, %cst_117 {dimension_numbers = #tpu.dot_dimension_numbers<[1], [0], [0], [1], [0, 0, 1, 1], [], []>} : vector<2x32xf32>, vector<32x128xf32>, vector<2x128xf32> -> vector<2x128xf32>
    %326 = arith.addf %324, %325 : vector<2x128xf32>
    %327 = arith.negf %326 : vector<2x128xf32>
    %328 = math.exp %327 : vector<2x128xf32>
    %cst_118 = arith.constant 1.000000e+00 : f32
    %329 = vector.broadcast %cst_118 : f32 to vector<2x128xf32>
    %330 = arith.addf %329, %328 : vector<2x128xf32>
    %331 = arith.divf %329, %330 : vector<2x128xf32>
    %332 = math.tanh %326 : vector<2x128xf32>
    %333 = vector.extract_strided_slice %331 {offsets = [0, 0], sizes = [2, 32], strides = [1, 1]} : vector<2x128xf32> to vector<2x32xf32>
    %334 = vector.extract_strided_slice %331 {offsets = [0, 32], sizes = [2, 32], strides = [1, 1]} : vector<2x128xf32> to vector<2x32xf32>
    %335 = vector.extract_strided_slice %332 {offsets = [0, 64], sizes = [2, 32], strides = [1, 1]} : vector<2x128xf32> to vector<2x32xf32>
    %336 = vector.extract_strided_slice %331 {offsets = [0, 96], sizes = [2, 32], strides = [1, 1]} : vector<2x128xf32> to vector<2x32xf32>
    %337 = arith.mulf %334, %303 : vector<2x32xf32>
    %338 = arith.mulf %333, %335 : vector<2x32xf32>
    %339 = arith.addf %337, %338 : vector<2x32xf32>
    %340 = math.tanh %339 : vector<2x32xf32>
    %341 = arith.mulf %336, %340 : vector<2x32xf32>
    %342 = vector.extract_strided_slice %86 {offsets = [14, 0], sizes = [2, 128], strides = [1, 1]} : vector<16x256xf32> to vector<2x128xf32>
    %cst_119 = arith.constant dense<0.000000e+00> : vector<2x128xf32>
    %343 = tpu.matmul %323, %87, %cst_119 {dimension_numbers = #tpu.dot_dimension_numbers<[1], [0], [0], [1], [0, 0, 1, 1], [], []>} : vector<2x32xf32>, vector<32x128xf32>, vector<2x128xf32> -> vector<2x128xf32>
    %344 = arith.addf %342, %343 : vector<2x128xf32>
    %345 = arith.negf %344 : vector<2x128xf32>
    %346 = math.exp %345 : vector<2x128xf32>
    %cst_120 = arith.constant 1.000000e+00 : f32
    %347 = vector.broadcast %cst_120 : f32 to vector<2x128xf32>
    %348 = arith.addf %347, %346 : vector<2x128xf32>
    %349 = arith.divf %347, %348 : vector<2x128xf32>
    %350 = math.tanh %344 : vector<2x128xf32>
    %351 = vector.extract_strided_slice %349 {offsets = [0, 0], sizes = [2, 32], strides = [1, 1]} : vector<2x128xf32> to vector<2x32xf32>
    %352 = vector.extract_strided_slice %349 {offsets = [0, 32], sizes = [2, 32], strides = [1, 1]} : vector<2x128xf32> to vector<2x32xf32>
    %353 = vector.extract_strided_slice %350 {offsets = [0, 64], sizes = [2, 32], strides = [1, 1]} : vector<2x128xf32> to vector<2x32xf32>
    %354 = vector.extract_strided_slice %349 {offsets = [0, 96], sizes = [2, 32], strides = [1, 1]} : vector<2x128xf32> to vector<2x32xf32>
    %355 = arith.mulf %352, %321 : vector<2x32xf32>
    %356 = arith.mulf %351, %353 : vector<2x32xf32>
    %357 = arith.addf %355, %356 : vector<2x32xf32>
    %358 = math.tanh %357 : vector<2x32xf32>
    %359 = arith.mulf %354, %358 : vector<2x32xf32>
    %360 = vector.extract_strided_slice %86 {offsets = [0, 128], sizes = [2, 128], strides = [1, 1]} : vector<16x256xf32> to vector<2x128xf32>
    %cst_121 = arith.constant dense<0.000000e+00> : vector<2x128xf32>
    %361 = tpu.matmul %341, %88, %cst_121 {dimension_numbers = #tpu.dot_dimension_numbers<[1], [0], [0], [1], [0, 0, 1, 1], [], []>} : vector<2x32xf32>, vector<32x128xf32>, vector<2x128xf32> -> vector<2x128xf32>
    %362 = arith.addf %360, %361 : vector<2x128xf32>
    %363 = arith.negf %362 : vector<2x128xf32>
    %364 = math.exp %363 : vector<2x128xf32>
    %cst_122 = arith.constant 1.000000e+00 : f32
    %365 = vector.broadcast %cst_122 : f32 to vector<2x128xf32>
    %366 = arith.addf %365, %364 : vector<2x128xf32>
    %367 = arith.divf %365, %366 : vector<2x128xf32>
    %368 = math.tanh %362 : vector<2x128xf32>
    %369 = vector.extract_strided_slice %367 {offsets = [0, 0], sizes = [2, 32], strides = [1, 1]} : vector<2x128xf32> to vector<2x32xf32>
    %370 = vector.extract_strided_slice %367 {offsets = [0, 32], sizes = [2, 32], strides = [1, 1]} : vector<2x128xf32> to vector<2x32xf32>
    %371 = vector.extract_strided_slice %368 {offsets = [0, 64], sizes = [2, 32], strides = [1, 1]} : vector<2x128xf32> to vector<2x32xf32>
    %372 = vector.extract_strided_slice %367 {offsets = [0, 96], sizes = [2, 32], strides = [1, 1]} : vector<2x128xf32> to vector<2x32xf32>
    %373 = arith.mulf %370, %339 : vector<2x32xf32>
    %374 = arith.mulf %369, %371 : vector<2x32xf32>
    %375 = arith.addf %373, %374 : vector<2x32xf32>
    %376 = math.tanh %375 : vector<2x32xf32>
    %377 = arith.mulf %372, %376 : vector<2x32xf32>
    %c0_123 = arith.constant 0 : index
    %c896 = arith.constant 896 : index
    %378 = vector.load %arg3[%c0_123, %c896] : memref<32x1088xf32, #tpu.memory_space<vmem>>, vector<32x128xf32>
    %c0_124 = arith.constant 0 : index
    %c384_125 = arith.constant 384 : index
    %379 = vector.load %arg5[%c0_124, %c384_125] : memref<1x640xf32, #tpu.memory_space<vmem>>, vector<1x128xf32>
    %380 = vector.extract_strided_slice %378 {offsets = [0, 0], sizes = [32, 32], strides = [1, 1]} : vector<32x128xf32> to vector<32x32xf32>
    %cst_126 = arith.constant dense<0.000000e+00> : vector<2x32xf32>
    %381 = tpu.matmul %0, %380, %cst_126 {dimension_numbers = #tpu.dot_dimension_numbers<[1], [0], [0], [1], [0, 0, 1, 1], [], []>} : vector<2x32xf32>, vector<32x32xf32>, vector<2x32xf32> -> vector<2x32xf32>
    %382 = vector.extract_strided_slice %379 {offsets = [0, 0], sizes = [1, 32], strides = [1, 1]} : vector<1x128xf32> to vector<1x32xf32>
    %383 = vector.broadcast %382 : vector<1x32xf32> to vector<2x32xf32>
    %384 = arith.addf %381, %383 : vector<2x32xf32>
    %385 = vector.extract_strided_slice %378 {offsets = [0, 32], sizes = [32, 64], strides = [1, 1]} : vector<32x128xf32> to vector<32x64xf32>
    %cst_127 = arith.constant dense<0.000000e+00> : vector<2x64xf32>
    %386 = tpu.matmul %384, %385, %cst_127 {dimension_numbers = #tpu.dot_dimension_numbers<[1], [0], [0], [1], [0, 0, 1, 1], [], []>} : vector<2x32xf32>, vector<32x64xf32>, vector<2x64xf32> -> vector<2x64xf32>
    %387 = vector.extract_strided_slice %386 {offsets = [0, 0], sizes = [2, 32], strides = [1, 1]} : vector<2x64xf32> to vector<2x32xf32>
    %388 = vector.extract_strided_slice %386 {offsets = [0, 32], sizes = [2, 32], strides = [1, 1]} : vector<2x64xf32> to vector<2x32xf32>
    %389 = arith.mulf %107, %387 : vector<2x32xf32>
    %cst_128 = arith.constant dense<0.000000e+00> : vector<2xf32>
    %390 = vector.multi_reduction <add>, %389, %cst_128 [1] : vector<2x32xf32> to vector<2xf32>
    %391 = vector.shape_cast %390 : vector<2xf32> to vector<2x1xf32>
    %392 = arith.mulf %377, %388 : vector<2x32xf32>
    %cst_129 = arith.constant dense<0.000000e+00> : vector<2xf32>
    %393 = vector.multi_reduction <add>, %392, %cst_129 [1] : vector<2x32xf32> to vector<2xf32>
    %394 = vector.shape_cast %393 : vector<2xf32> to vector<2x1xf32>
    %395 = arith.addf %391, %394 : vector<2x1xf32>
    %cst_130 = arith.constant 0.176776692 : f32
    %396 = vector.broadcast %cst_130 : f32 to vector<2x1xf32>
    %397 = arith.mulf %395, %396 : vector<2x1xf32>
    %398 = arith.mulf %143, %387 : vector<2x32xf32>
    %cst_131 = arith.constant dense<0.000000e+00> : vector<2xf32>
    %399 = vector.multi_reduction <add>, %398, %cst_131 [1] : vector<2x32xf32> to vector<2xf32>
    %400 = vector.shape_cast %399 : vector<2xf32> to vector<2x1xf32>
    %401 = arith.mulf %341, %388 : vector<2x32xf32>
    %cst_132 = arith.constant dense<0.000000e+00> : vector<2xf32>
    %402 = vector.multi_reduction <add>, %401, %cst_132 [1] : vector<2x32xf32> to vector<2xf32>
    %403 = vector.shape_cast %402 : vector<2xf32> to vector<2x1xf32>
    %404 = arith.addf %400, %403 : vector<2x1xf32>
    %cst_133 = arith.constant 0.176776692 : f32
    %405 = vector.broadcast %cst_133 : f32 to vector<2x1xf32>
    %406 = arith.mulf %404, %405 : vector<2x1xf32>
    %407 = arith.mulf %179, %387 : vector<2x32xf32>
    %cst_134 = arith.constant dense<0.000000e+00> : vector<2xf32>
    %408 = vector.multi_reduction <add>, %407, %cst_134 [1] : vector<2x32xf32> to vector<2xf32>
    %409 = vector.shape_cast %408 : vector<2xf32> to vector<2x1xf32>
    %410 = arith.mulf %305, %388 : vector<2x32xf32>
    %cst_135 = arith.constant dense<0.000000e+00> : vector<2xf32>
    %411 = vector.multi_reduction <add>, %410, %cst_135 [1] : vector<2x32xf32> to vector<2xf32>
    %412 = vector.shape_cast %411 : vector<2xf32> to vector<2x1xf32>
    %413 = arith.addf %409, %412 : vector<2x1xf32>
    %cst_136 = arith.constant 0.176776692 : f32
    %414 = vector.broadcast %cst_136 : f32 to vector<2x1xf32>
    %415 = arith.mulf %413, %414 : vector<2x1xf32>
    %416 = arith.mulf %215, %387 : vector<2x32xf32>
    %cst_137 = arith.constant dense<0.000000e+00> : vector<2xf32>
    %417 = vector.multi_reduction <add>, %416, %cst_137 [1] : vector<2x32xf32> to vector<2xf32>
    %418 = vector.shape_cast %417 : vector<2xf32> to vector<2x1xf32>
    %419 = arith.mulf %269, %388 : vector<2x32xf32>
    %cst_138 = arith.constant dense<0.000000e+00> : vector<2xf32>
    %420 = vector.multi_reduction <add>, %419, %cst_138 [1] : vector<2x32xf32> to vector<2xf32>
    %421 = vector.shape_cast %420 : vector<2xf32> to vector<2x1xf32>
    %422 = arith.addf %418, %421 : vector<2x1xf32>
    %cst_139 = arith.constant 0.176776692 : f32
    %423 = vector.broadcast %cst_139 : f32 to vector<2x1xf32>
    %424 = arith.mulf %422, %423 : vector<2x1xf32>
    %425 = arith.mulf %251, %387 : vector<2x32xf32>
    %cst_140 = arith.constant dense<0.000000e+00> : vector<2xf32>
    %426 = vector.multi_reduction <add>, %425, %cst_140 [1] : vector<2x32xf32> to vector<2xf32>
    %427 = vector.shape_cast %426 : vector<2xf32> to vector<2x1xf32>
    %428 = arith.mulf %233, %388 : vector<2x32xf32>
    %cst_141 = arith.constant dense<0.000000e+00> : vector<2xf32>
    %429 = vector.multi_reduction <add>, %428, %cst_141 [1] : vector<2x32xf32> to vector<2xf32>
    %430 = vector.shape_cast %429 : vector<2xf32> to vector<2x1xf32>
    %431 = arith.addf %427, %430 : vector<2x1xf32>
    %cst_142 = arith.constant 0.176776692 : f32
    %432 = vector.broadcast %cst_142 : f32 to vector<2x1xf32>
    %433 = arith.mulf %431, %432 : vector<2x1xf32>
    %434 = arith.mulf %287, %387 : vector<2x32xf32>
    %cst_143 = arith.constant dense<0.000000e+00> : vector<2xf32>
    %435 = vector.multi_reduction <add>, %434, %cst_143 [1] : vector<2x32xf32> to vector<2xf32>
    %436 = vector.shape_cast %435 : vector<2xf32> to vector<2x1xf32>
    %437 = arith.mulf %197, %388 : vector<2x32xf32>
    %cst_144 = arith.constant dense<0.000000e+00> : vector<2xf32>
    %438 = vector.multi_reduction <add>, %437, %cst_144 [1] : vector<2x32xf32> to vector<2xf32>
    %439 = vector.shape_cast %438 : vector<2xf32> to vector<2x1xf32>
    %440 = arith.addf %436, %439 : vector<2x1xf32>
    %cst_145 = arith.constant 0.176776692 : f32
    %441 = vector.broadcast %cst_145 : f32 to vector<2x1xf32>
    %442 = arith.mulf %440, %441 : vector<2x1xf32>
    %443 = arith.mulf %323, %387 : vector<2x32xf32>
    %cst_146 = arith.constant dense<0.000000e+00> : vector<2xf32>
    %444 = vector.multi_reduction <add>, %443, %cst_146 [1] : vector<2x32xf32> to vector<2xf32>
    %445 = vector.shape_cast %444 : vector<2xf32> to vector<2x1xf32>
    %446 = arith.mulf %161, %388 : vector<2x32xf32>
    %cst_147 = arith.constant dense<0.000000e+00> : vector<2xf32>
    %447 = vector.multi_reduction <add>, %446, %cst_147 [1] : vector<2x32xf32> to vector<2xf32>
    %448 = vector.shape_cast %447 : vector<2xf32> to vector<2x1xf32>
    %449 = arith.addf %445, %448 : vector<2x1xf32>
    %cst_148 = arith.constant 0.176776692 : f32
    %450 = vector.broadcast %cst_148 : f32 to vector<2x1xf32>
    %451 = arith.mulf %449, %450 : vector<2x1xf32>
    %452 = arith.mulf %359, %387 : vector<2x32xf32>
    %cst_149 = arith.constant dense<0.000000e+00> : vector<2xf32>
    %453 = vector.multi_reduction <add>, %452, %cst_149 [1] : vector<2x32xf32> to vector<2xf32>
    %454 = vector.shape_cast %453 : vector<2xf32> to vector<2x1xf32>
    %455 = arith.mulf %125, %388 : vector<2x32xf32>
    %cst_150 = arith.constant dense<0.000000e+00> : vector<2xf32>
    %456 = vector.multi_reduction <add>, %455, %cst_150 [1] : vector<2x32xf32> to vector<2xf32>
    %457 = vector.shape_cast %456 : vector<2xf32> to vector<2x1xf32>
    %458 = arith.addf %454, %457 : vector<2x1xf32>
    %cst_151 = arith.constant 0.176776692 : f32
    %459 = vector.broadcast %cst_151 : f32 to vector<2x1xf32>
    %460 = arith.mulf %458, %459 : vector<2x1xf32>
    %461 = arith.maximumf %397, %406 : vector<2x1xf32>
    %462 = arith.maximumf %461, %415 : vector<2x1xf32>
    %463 = arith.maximumf %462, %424 : vector<2x1xf32>
    %464 = arith.maximumf %463, %433 : vector<2x1xf32>
    %465 = arith.maximumf %464, %442 : vector<2x1xf32>
    %466 = arith.maximumf %465, %451 : vector<2x1xf32>
    %467 = arith.maximumf %466, %460 : vector<2x1xf32>
    %468 = arith.subf %397, %467 : vector<2x1xf32>
    %469 = math.exp %468 : vector<2x1xf32>
    %470 = arith.subf %406, %467 : vector<2x1xf32>
    %471 = math.exp %470 : vector<2x1xf32>
    %472 = arith.subf %415, %467 : vector<2x1xf32>
    %473 = math.exp %472 : vector<2x1xf32>
    %474 = arith.subf %424, %467 : vector<2x1xf32>
    %475 = math.exp %474 : vector<2x1xf32>
    %476 = arith.subf %433, %467 : vector<2x1xf32>
    %477 = math.exp %476 : vector<2x1xf32>
    %478 = arith.subf %442, %467 : vector<2x1xf32>
    %479 = math.exp %478 : vector<2x1xf32>
    %480 = arith.subf %451, %467 : vector<2x1xf32>
    %481 = math.exp %480 : vector<2x1xf32>
    %482 = arith.subf %460, %467 : vector<2x1xf32>
    %483 = math.exp %482 : vector<2x1xf32>
    %484 = arith.addf %469, %471 : vector<2x1xf32>
    %485 = arith.addf %484, %473 : vector<2x1xf32>
    %486 = arith.addf %485, %475 : vector<2x1xf32>
    %487 = arith.addf %486, %477 : vector<2x1xf32>
    %488 = arith.addf %487, %479 : vector<2x1xf32>
    %489 = arith.addf %488, %481 : vector<2x1xf32>
    %490 = arith.addf %489, %483 : vector<2x1xf32>
    %cst_152 = arith.constant 1.000000e+00 : f32
    %491 = vector.broadcast %cst_152 : f32 to vector<2x1xf32>
    %492 = arith.divf %491, %490 : vector<2x1xf32>
    %493 = arith.mulf %469, %492 : vector<2x1xf32>
    %494 = vector.broadcast %493 : vector<2x1xf32> to vector<2x32xf32>
    %495 = arith.mulf %494, %107 : vector<2x32xf32>
    %496 = arith.addf %89, %495 : vector<2x32xf32>
    %497 = vector.broadcast %493 : vector<2x1xf32> to vector<2x32xf32>
    %498 = arith.mulf %497, %377 : vector<2x32xf32>
    %499 = arith.addf %89, %498 : vector<2x32xf32>
    %500 = arith.mulf %471, %492 : vector<2x1xf32>
    %501 = vector.broadcast %500 : vector<2x1xf32> to vector<2x32xf32>
    %502 = arith.mulf %501, %143 : vector<2x32xf32>
    %503 = arith.addf %496, %502 : vector<2x32xf32>
    %504 = vector.broadcast %500 : vector<2x1xf32> to vector<2x32xf32>
    %505 = arith.mulf %504, %341 : vector<2x32xf32>
    %506 = arith.addf %499, %505 : vector<2x32xf32>
    %507 = arith.mulf %473, %492 : vector<2x1xf32>
    %508 = vector.broadcast %507 : vector<2x1xf32> to vector<2x32xf32>
    %509 = arith.mulf %508, %179 : vector<2x32xf32>
    %510 = arith.addf %503, %509 : vector<2x32xf32>
    %511 = vector.broadcast %507 : vector<2x1xf32> to vector<2x32xf32>
    %512 = arith.mulf %511, %305 : vector<2x32xf32>
    %513 = arith.addf %506, %512 : vector<2x32xf32>
    %514 = arith.mulf %475, %492 : vector<2x1xf32>
    %515 = vector.broadcast %514 : vector<2x1xf32> to vector<2x32xf32>
    %516 = arith.mulf %515, %215 : vector<2x32xf32>
    %517 = arith.addf %510, %516 : vector<2x32xf32>
    %518 = vector.broadcast %514 : vector<2x1xf32> to vector<2x32xf32>
    %519 = arith.mulf %518, %269 : vector<2x32xf32>
    %520 = arith.addf %513, %519 : vector<2x32xf32>
    %521 = arith.mulf %477, %492 : vector<2x1xf32>
    %522 = vector.broadcast %521 : vector<2x1xf32> to vector<2x32xf32>
    %523 = arith.mulf %522, %251 : vector<2x32xf32>
    %524 = arith.addf %517, %523 : vector<2x32xf32>
    %525 = vector.broadcast %521 : vector<2x1xf32> to vector<2x32xf32>
    %526 = arith.mulf %525, %233 : vector<2x32xf32>
    %527 = arith.addf %520, %526 : vector<2x32xf32>
    %528 = arith.mulf %479, %492 : vector<2x1xf32>
    %529 = vector.broadcast %528 : vector<2x1xf32> to vector<2x32xf32>
    %530 = arith.mulf %529, %287 : vector<2x32xf32>
    %531 = arith.addf %524, %530 : vector<2x32xf32>
    %532 = vector.broadcast %528 : vector<2x1xf32> to vector<2x32xf32>
    %533 = arith.mulf %532, %197 : vector<2x32xf32>
    %534 = arith.addf %527, %533 : vector<2x32xf32>
    %535 = arith.mulf %481, %492 : vector<2x1xf32>
    %536 = vector.broadcast %535 : vector<2x1xf32> to vector<2x32xf32>
    %537 = arith.mulf %536, %323 : vector<2x32xf32>
    %538 = arith.addf %531, %537 : vector<2x32xf32>
    %539 = vector.broadcast %535 : vector<2x1xf32> to vector<2x32xf32>
    %540 = arith.mulf %539, %161 : vector<2x32xf32>
    %541 = arith.addf %534, %540 : vector<2x32xf32>
    %542 = arith.mulf %483, %492 : vector<2x1xf32>
    %543 = vector.broadcast %542 : vector<2x1xf32> to vector<2x32xf32>
    %544 = arith.mulf %543, %359 : vector<2x32xf32>
    %545 = arith.addf %538, %544 : vector<2x32xf32>
    %546 = vector.broadcast %542 : vector<2x1xf32> to vector<2x32xf32>
    %547 = arith.mulf %546, %125 : vector<2x32xf32>
    %548 = arith.addf %541, %547 : vector<2x32xf32>
    %c0_153 = arith.constant 0 : index
    %c0_154 = arith.constant 0 : index
    %549 = vector.load %arg4[%c0_153, %c0_154] : memref<64x32xf32, #tpu.memory_space<vmem>>, vector<32x32xf32>
    %cst_155 = arith.constant dense<0.000000e+00> : vector<2x32xf32>
    %550 = tpu.matmul %545, %549, %cst_155 {dimension_numbers = #tpu.dot_dimension_numbers<[1], [0], [0], [1], [0, 0, 1, 1], [], []>} : vector<2x32xf32>, vector<32x32xf32>, vector<2x32xf32> -> vector<2x32xf32>
    %c32 = arith.constant 32 : index
    %c0_156 = arith.constant 0 : index
    %551 = vector.load %arg4[%c32, %c0_156] : memref<64x32xf32, #tpu.memory_space<vmem>>, vector<32x32xf32>
    %cst_157 = arith.constant dense<0.000000e+00> : vector<2x32xf32>
    %552 = tpu.matmul %548, %551, %cst_157 {dimension_numbers = #tpu.dot_dimension_numbers<[1], [0], [0], [1], [0, 0, 1, 1], [], []>} : vector<2x32xf32>, vector<32x32xf32>, vector<2x32xf32> -> vector<2x32xf32>
    %553 = arith.addf %550, %552 : vector<2x32xf32>
    %554 = vector.extract_strided_slice %379 {offsets = [0, 32], sizes = [1, 32], strides = [1, 1]} : vector<1x128xf32> to vector<1x32xf32>
    %555 = vector.broadcast %554 : vector<1x32xf32> to vector<2x32xf32>
    %556 = arith.addf %553, %555 : vector<2x32xf32>
    %557 = vector.extract_strided_slice %378 {offsets = [0, 96], sizes = [32, 32], strides = [1, 1]} : vector<32x128xf32> to vector<32x32xf32>
    %cst_158 = arith.constant dense<0.000000e+00> : vector<2x32xf32>
    %558 = tpu.matmul %556, %557, %cst_158 {dimension_numbers = #tpu.dot_dimension_numbers<[1], [0], [0], [1], [0, 0, 1, 1], [], []>} : vector<2x32xf32>, vector<32x32xf32>, vector<2x32xf32> -> vector<2x32xf32>
    %559 = vector.extract_strided_slice %379 {offsets = [0, 64], sizes = [1, 32], strides = [1, 1]} : vector<1x128xf32> to vector<1x32xf32>
    %560 = vector.broadcast %559 : vector<1x32xf32> to vector<2x32xf32>
    %561 = arith.addf %558, %560 : vector<2x32xf32>
    %c0_159 = arith.constant 0 : index
    %c768 = arith.constant 768 : index
    %562 = vector.load %arg3[%c0_159, %c768] : memref<32x1088xf32, #tpu.memory_space<vmem>>, vector<32x128xf32>
    %cst_160 = arith.constant dense<0.000000e+00> : vector<2x128xf32>
    %563 = tpu.matmul %0, %562, %cst_160 {dimension_numbers = #tpu.dot_dimension_numbers<[1], [0], [0], [1], [0, 0, 1, 1], [], []>} : vector<2x32xf32>, vector<32x128xf32>, vector<2x128xf32> -> vector<2x128xf32>
    %c0_161 = arith.constant 0 : index
    %c640 = arith.constant 640 : index
    %564 = vector.load %arg3[%c0_161, %c640] : memref<32x1088xf32, #tpu.memory_space<vmem>>, vector<32x128xf32>
    %cst_162 = arith.constant dense<0.000000e+00> : vector<2x128xf32>
    %565 = tpu.matmul %561, %564, %cst_162 {dimension_numbers = #tpu.dot_dimension_numbers<[1], [0], [0], [1], [0, 0, 1, 1], [], []>} : vector<2x32xf32>, vector<32x128xf32>, vector<2x128xf32> -> vector<2x128xf32>
    %566 = arith.addf %563, %565 : vector<2x128xf32>
    %c0_163 = arith.constant 0 : index
    %c256_164 = arith.constant 256 : index
    %567 = vector.load %arg5[%c0_163, %c256_164] : memref<1x640xf32, #tpu.memory_space<vmem>>, vector<1x128xf32>
    %568 = vector.broadcast %567 : vector<1x128xf32> to vector<2x128xf32>
    %569 = arith.addf %566, %568 : vector<2x128xf32>
    %c0_165 = arith.constant 0 : index
    %c512 = arith.constant 512 : index
    %570 = vector.load %arg3[%c0_165, %c512] : memref<32x1088xf32, #tpu.memory_space<vmem>>, vector<32x128xf32>
    %cst_166 = arith.constant dense<0.000000e+00> : vector<2x128xf32>
    %571 = tpu.matmul %359, %570, %cst_166 {dimension_numbers = #tpu.dot_dimension_numbers<[1], [0], [0], [1], [0, 0, 1, 1], [], []>} : vector<2x32xf32>, vector<32x128xf32>, vector<2x128xf32> -> vector<2x128xf32>
    %572 = arith.addf %569, %571 : vector<2x128xf32>
    %573 = arith.negf %572 : vector<2x128xf32>
    %574 = math.exp %573 : vector<2x128xf32>
    %cst_167 = arith.constant 1.000000e+00 : f32
    %575 = vector.broadcast %cst_167 : f32 to vector<2x128xf32>
    %576 = arith.addf %575, %574 : vector<2x128xf32>
    %577 = arith.divf %575, %576 : vector<2x128xf32>
    %578 = math.tanh %572 : vector<2x128xf32>
    %579 = vector.extract_strided_slice %577 {offsets = [0, 0], sizes = [2, 32], strides = [1, 1]} : vector<2x128xf32> to vector<2x32xf32>
    %580 = vector.extract_strided_slice %577 {offsets = [0, 32], sizes = [2, 32], strides = [1, 1]} : vector<2x128xf32> to vector<2x32xf32>
    %581 = vector.extract_strided_slice %578 {offsets = [0, 64], sizes = [2, 32], strides = [1, 1]} : vector<2x128xf32> to vector<2x32xf32>
    %582 = vector.extract_strided_slice %577 {offsets = [0, 96], sizes = [2, 32], strides = [1, 1]} : vector<2x128xf32> to vector<2x32xf32>
    %583 = arith.mulf %580, %89 : vector<2x32xf32>
    %584 = arith.mulf %579, %581 : vector<2x32xf32>
    %585 = arith.addf %583, %584 : vector<2x32xf32>
    %586 = math.tanh %585 : vector<2x32xf32>
    %587 = arith.mulf %582, %586 : vector<2x32xf32>
    %c0_168 = arith.constant 0 : index
    %c512_169 = arith.constant 512 : index
    %588 = vector.load %arg5[%c0_168, %c512_169] : memref<1x640xf32, #tpu.memory_space<vmem>>, vector<1x128xf32>
    %589 = vector.extract_strided_slice %588 {offsets = [0, 0], sizes = [1, 32], strides = [1, 1]} : vector<1x128xf32> to vector<1x32xf32>
    %590 = vector.broadcast %589 : vector<1x32xf32> to vector<2x32xf32>
    %591 = arith.mulf %587, %590 : vector<2x32xf32>
    %cst_170 = arith.constant dense<0.000000e+00> : vector<2xf32>
    %592 = vector.multi_reduction <add>, %591, %cst_170 [1] : vector<2x32xf32> to vector<2xf32>
    %593 = vector.shape_cast %592 : vector<2xf32> to vector<2x1xf32>
    %594 = vector.extract_strided_slice %588 {offsets = [0, 32], sizes = [1, 32], strides = [1, 1]} : vector<1x128xf32> to vector<1x32xf32>
    %595 = vector.broadcast %594 : vector<1x32xf32> to vector<2x32xf32>
    %596 = arith.mulf %561, %595 : vector<2x32xf32>
    %cst_171 = arith.constant dense<0.000000e+00> : vector<2xf32>
    %597 = vector.multi_reduction <add>, %596, %cst_171 [1] : vector<2x32xf32> to vector<2xf32>
    %598 = vector.shape_cast %597 : vector<2xf32> to vector<2x1xf32>
    %599 = arith.addf %593, %598 : vector<2x1xf32>
    %600 = vector.extract_strided_slice %588 {offsets = [0, 64], sizes = [1, 1], strides = [1, 1]} : vector<1x128xf32> to vector<1x1xf32>
    %601 = vector.broadcast %600 : vector<1x1xf32> to vector<2x1xf32>
    %602 = arith.addf %599, %601 : vector<2x1xf32>
    %603 = arith.negf %602 : vector<2x1xf32>
    %604 = math.exp %603 : vector<2x1xf32>
    %cst_172 = arith.constant 1.000000e+00 : f32
    %605 = vector.broadcast %cst_172 : f32 to vector<2x1xf32>
    %606 = arith.addf %605, %604 : vector<2x1xf32>
    %607 = arith.divf %605, %606 : vector<2x1xf32>
    %c0_173 = arith.constant 0 : index
    %c1024 = arith.constant 1024 : index
    %608 = vector.load %arg3[%c0_173, %c1024] : memref<32x1088xf32, #tpu.memory_space<vmem>>, vector<32x64xf32>
    %609 = vector.extract_strided_slice %608 {offsets = [0, 0], sizes = [32, 32], strides = [1, 1]} : vector<32x64xf32> to vector<32x32xf32>
    %cst_174 = arith.constant dense<0.000000e+00> : vector<2x32xf32>
    %610 = tpu.matmul %587, %609, %cst_174 {dimension_numbers = #tpu.dot_dimension_numbers<[1], [0], [0], [1], [0, 0, 1, 1], [], []>} : vector<2x32xf32>, vector<32x32xf32>, vector<2x32xf32> -> vector<2x32xf32>
    %611 = vector.extract_strided_slice %608 {offsets = [0, 32], sizes = [32, 32], strides = [1, 1]} : vector<32x64xf32> to vector<32x32xf32>
    %cst_175 = arith.constant dense<0.000000e+00> : vector<2x32xf32>
    %612 = tpu.matmul %561, %611, %cst_175 {dimension_numbers = #tpu.dot_dimension_numbers<[1], [0], [0], [1], [0, 0, 1, 1], [], []>} : vector<2x32xf32>, vector<32x32xf32>, vector<2x32xf32> -> vector<2x32xf32>
    %613 = arith.addf %610, %612 : vector<2x32xf32>
    %614 = vector.extract_strided_slice %379 {offsets = [0, 96], sizes = [1, 32], strides = [1, 1]} : vector<1x128xf32> to vector<1x32xf32>
    %615 = vector.broadcast %614 : vector<1x32xf32> to vector<2x32xf32>
    %616 = arith.addf %613, %615 : vector<2x32xf32>
    %cst_176 = arith.constant dense<0xFF800000> : vector<2xf32>
    %617 = vector.multi_reduction <maximumf>, %616, %cst_176 [1] : vector<2x32xf32> to vector<2xf32>
    %618 = vector.shape_cast %617 : vector<2xf32> to vector<2x1xf32>
    %619 = vector.broadcast %618 : vector<2x1xf32> to vector<2x32xf32>
    %620 = arith.subf %616, %619 : vector<2x32xf32>
    %621 = math.exp %620 : vector<2x32xf32>
    %cst_177 = arith.constant dense<0.000000e+00> : vector<2xf32>
    %622 = vector.multi_reduction <add>, %621, %cst_177 [1] : vector<2x32xf32> to vector<2xf32>
    %623 = vector.shape_cast %622 : vector<2xf32> to vector<2x1xf32>
    %624 = math.log %623 : vector<2x1xf32>
    %625 = vector.broadcast %624 : vector<2x1xf32> to vector<2x32xf32>
    %626 = arith.subf %620, %625 : vector<2x32xf32>
    %cst_178 = arith.constant dense<0xFF800000> : vector<2xf32>
    %627 = vector.multi_reduction <maximumf>, %561, %cst_178 [1] : vector<2x32xf32> to vector<2xf32>
    %628 = vector.shape_cast %627 : vector<2xf32> to vector<2x1xf32>
    %629 = vector.broadcast %628 : vector<2x1xf32> to vector<2x32xf32>
    %630 = arith.subf %561, %629 : vector<2x32xf32>
    %631 = math.exp %630 : vector<2x32xf32>
    %cst_179 = arith.constant dense<0.000000e+00> : vector<2xf32>
    %632 = vector.multi_reduction <add>, %631, %cst_179 [1] : vector<2x32xf32> to vector<2xf32>
    %633 = vector.shape_cast %632 : vector<2xf32> to vector<2x1xf32>
    %634 = vector.broadcast %633 : vector<2x1xf32> to vector<2x32xf32>
    %635 = arith.divf %631, %634 : vector<2x32xf32>
    %636 = vector.broadcast %607 : vector<2x1xf32> to vector<2x32xf32>
    %637 = arith.mulf %636, %635 : vector<2x32xf32>
    %cst_180 = arith.constant 1.000000e+00 : f32
    %638 = vector.broadcast %cst_180 : f32 to vector<2x1xf32>
    %639 = arith.subf %638, %607 : vector<2x1xf32>
    %640 = vector.broadcast %639 : vector<2x1xf32> to vector<2x32xf32>
    %641 = arith.mulf %640, %626 : vector<2x32xf32>
    %642 = arith.addf %637, %641 : vector<2x32xf32>
    %c0_181 = arith.constant 0 : index
    %c0_182 = arith.constant 0 : index
    %643 = vector.load %arg6[%c0_181, %c0_182] : memref<2x32xf32, #tpu.memory_space<vmem>>, vector<2x32xf32>
    tpu.vector_store %arg6[%c0_181, %c0_182], %642 {strides = array<i32>} : memref<2x32xf32, #tpu.memory_space<vmem>>, vector<2x32xf32>,
    %c0_183 = arith.constant 0 : index
    %c0_184 = arith.constant 0 : index
    %644 = vector.load %arg7[%c0_183, %c0_184] : memref<2x32xf32, #tpu.memory_space<vmem>>, vector<2x32xf32>
    tpu.vector_store %arg7[%c0_183, %c0_184], %587 {strides = array<i32>} : memref<2x32xf32, #tpu.memory_space<vmem>>, vector<2x32xf32>,
    %c0_185 = arith.constant 0 : index
    %c0_186 = arith.constant 0 : index
    %645 = vector.load %arg8[%c0_185, %c0_186] : memref<2x32xf32, #tpu.memory_space<vmem>>, vector<2x32xf32>
    tpu.vector_store %arg8[%c0_185, %c0_186], %585 {strides = array<i32>} : memref<2x32xf32, #tpu.memory_space<vmem>>, vector<2x32xf32>,
    return
  }
}

</mosaic_0001>

<llo_original>
// kernel: summarizer_forward.1
$region0: #{summarizer_forward.1}
  #allocation0 [shape = 'u32[]', space=smem, size = 0x4, offset = 0x4, fixed_abs, tag = 'smem constant byte address 0x4 - core index']
  #allocation1 [shape = 'u32[144,128]{1,0:T(1,128)}', space=vmem, size = 0x12000, scoped, tag = 'internal scratch']
  #allocation2 [shape = 'f32[16,32]{1,0:T(8,128)}', space=vmem, size = 0x2000, scoped, tag = 'scratch operand']
  %s0 = inlined_call_operand.vmem [shape: s32[2,8], index: 0, kind: input, shape index: {}]
  %s1 = inlined_call_operand.vmem [shape: f32[2,32], index: 1, kind: input, shape index: {}]
  %s2 = inlined_call_operand.vmem [shape: f32[16,1,32], index: 2, kind: input, shape index: {}]
  %s3 = inlined_call_operand.hbm [shape: f32[32,1088], index: 3, kind: input, shape index: {}]
  %s4 = inlined_call_operand.vmem [shape: f32[64,32], index: 4, kind: input, shape index: {}]
  %s5 = inlined_call_operand.vmem [shape: f32[1,640], index: 5, kind: input, shape index: {}]
  %s6 = inlined_call_operand.hbm [shape: f32[2,32], index: 6, kind: output, shape index: {0}]
  %s7 = inlined_call_operand.hbm [shape: f32[2,32], index: 7, kind: output, shape index: {1}]
  %s8 = inlined_call_operand.hbm [shape: f32[2,32], index: 8, kind: output, shape index: {2}]
  %9 = xla_tuple %s6, %s7, %s8
  %s10 = sld [smem:[#allocation0]]
  $region58: #{summarizer_forward.1} parent=0
    _
  %s12 = ssub.s32 1, %s10
  %s13 = scalar_select 0, %s12, %s10
  $region1: #{summarizer_forward.1} parent=0
    #allocation3 [shape = 'u8[1024]{0}', space=smem, size = 0x400, scoped, tag = 'input window, operand 0, single buffered']
    #allocation4 [shape = 's32[1]{0}', space=sflag, size = 0x4, scoped, tag = 'scoped memory for summarizer_forward.1']
    #allocation5 [shape = 's32[1]{0}', space=sflag, size = 0x4, scoped, tag = 'scoped memory for summarizer_forward.1']
    #allocation6 [shape = 's32[1]{0}', space=sflag, size = 0x4, scoped, tag = 'scoped memory for summarizer_forward.1']
    #allocation7 [shape = 'u8[147456]{0}', space=vmem, size = 0x24000, scoped, tag = 'input window, operand 3, single buffered']
    #allocation8 [shape = 'u8[1024]{0}', space=vmem, size = 0x400, scoped, tag = 'output window, operand 0, single buffered']
    #allocation9 [shape = 'u8[1024]{0}', space=vmem, size = 0x400, scoped, tag = 'output window, operand 1, single buffered']
    #allocation10 [shape = 's32[1]{0}', space=sflag, size = 0x4, scoped, tag = 'scoped memory for summarizer_forward.1']
    #allocation11 [shape = 'u8[1024]{0}', space=vmem, size = 0x400, scoped, tag = 'output window, operand 2, single buffered']
    %14 = vsyncpa [#allocation6], 0
    %15 = vsyncpa [#allocation4], 0
    %16 = vsyncpa [#allocation5], 0
    %17 = vsyncpa [#allocation10], 0
    // Predicated region
    $region2: #{summarizer_forward.1} parent=1 // pred_check
      _
    $region3: #{summarizer_forward.1} parent=1 // pred_check_branch
      %19 = sbr.rel (0) target = $region5
    $region4: #{summarizer_forward.1} parent=1 // pred_region
      %s21 = ssub.s32 32, 32
      %22 = vsyncadd [#allocation6], %s21
      %s24 = sshll.u32 %s0, 4
      %s25 = int_to_ptr.vmem [resolvable:$true] %s24
      %27 = dma.vmem_to_smem %s25, 32, [#allocation3], [#allocation6]
    $region5: #{summarizer_forward.1} parent=1 // pred_fallthru
      _
    // Predicated region
    $region6: #{summarizer_forward.1} parent=1 // pred_check
      _
    $region7: #{summarizer_forward.1} parent=1 // pred_check_branch
      %29 = sbr.rel (0) target = $region9
    $region8: #{summarizer_forward.1} parent=1 // pred_region
      _
    $region9: #{summarizer_forward.1} parent=1 // pred_fallthru
      _
    // Predicated region
    $region10: #{summarizer_forward.1} parent=1 // pred_check
      _
    $region11: #{summarizer_forward.1} parent=1 // pred_check_branch
      %31 = sbr.rel (0) target = $region13
    $region12: #{summarizer_forward.1} parent=1 // pred_region
      _
    $region13: #{summarizer_forward.1} parent=1 // pred_fallthru
      _
    // Predicated region
    $region14: #{summarizer_forward.1} parent=1 // pred_check
      _
    $region15: #{summarizer_forward.1} parent=1 // pred_check_branch
      %33 = sbr.rel (0) target = $region17
    $region16: #{summarizer_forward.1} parent=1 // pred_region
      %s35 = ssub.s32 4608, 4608
      %36 = vsyncadd [#allocation4], %s35
      %s37 = sshll.u32 [#allocation7], 4
      %s38 = int_to_ptr.vmem [resolvable:$true] %s37
      %43 = dma.hbm_to_vmem [thread:$0]  %s3, 4608, %s38, [#allocation4], 1152, 1152, 72
    $region17: #{summarizer_forward.1} parent=1 // pred_fallthru
      _
    // Predicated region
    $region18: #{summarizer_forward.1} parent=1 // pred_check
      _
    $region19: #{summarizer_forward.1} parent=1 // pred_check_branch
      %45 = sbr.rel (0) target = $region21
    $region20: #{summarizer_forward.1} parent=1 // pred_region
      _
    $region21: #{summarizer_forward.1} parent=1 // pred_fallthru
      _
    // Predicated region
    $region22: #{summarizer_forward.1} parent=1 // pred_check
      _
    $region23: #{summarizer_forward.1} parent=1 // pred_check_branch
      %47 = sbr.rel (0) target = $region25
    $region24: #{summarizer_forward.1} parent=1 // pred_region
      _
    $region25: #{summarizer_forward.1} parent=1 // pred_fallthru
      _
    // Predicated region
    $region26: #{summarizer_forward.1} parent=1 // pred_check
      _
    $region27: #{summarizer_forward.1} parent=1 // pred_check_branch
      %49 = sbr.rel (0) target = $region29
    $region28: #{summarizer_forward.1} parent=1 // pred_region
      %50 = dma.done [#allocation6], 32
    $region29: #{summarizer_forward.1} parent=1 // pred_fallthru
      _
    // Predicated region
    $region30: #{summarizer_forward.1} parent=1 // pred_check
      _
    $region31: #{summarizer_forward.1} parent=1 // pred_check_branch
      %52 = sbr.rel (0) target = $region33
    $region32: #{summarizer_forward.1} parent=1 // pred_region
      %53 = dma.done [#allocation4], 4608
    $region33: #{summarizer_forward.1} parent=1 // pred_fallthru
      _
    %54 = sfence
    %v55 = vld [vmem:[%s1] sm:$0x3]
    %s56 = sld [smem:[#allocation3]]
    %s57 = scalar_lea.vmem %s2, %s56
    %v58 = vld [vmem:[%s57] sm:$0x1]
    %vm59 = vcmask 253952
    %60 = vst.msk [vmem:[#allocation2] sm:$0x1] %vm59, %v58
    %s61 = sld [smem:[#allocation3 + $0x80]]
    %s62 = scalar_lea.vmem %s2, %s61
    %v63 = vld [vmem:[%s62] sm:$0x1]
    %64 = vst.msk [vmem:[#allocation2 + $0x1] sm:$0x1] %vm59, %v63
    %s65 = sld [smem:[#allocation3 + $0x1]]
    %s66 = scalar_lea.vmem %s2, %s65
    %v67 = vld [vmem:[%s66] sm:$0x1]
    %68 = vst.msk [vmem:[#allocation2 + $0x2] sm:$0x1] %vm59, %v67
    %s69 = sld [smem:[#allocation3 + $0x81]]
    %s70 = scalar_lea.vmem %s2, %s69
    %v71 = vld [vmem:[%s70] sm:$0x1]
    %72 = vst.msk [vmem:[#allocation2 + $0x3] sm:$0x1] %vm59, %v71
    %s73 = sld [smem:[#allocation3 + $0x2]]
    %s74 = scalar_lea.vmem %s2, %s73
    %v75 = vld [vmem:[%s74] sm:$0x1]
    %76 = vst.msk [vmem:[#allocation2 + $0x4] sm:$0x1] %vm59, %v75
    %s77 = sld [smem:[#allocation3 + $0x82]]
    %s78 = scalar_lea.vmem %s2, %s77
    %v79 = vld [vmem:[%s78] sm:$0x1]
    %80 = vst.msk [vmem:[#allocation2 + $0x5] sm:$0x1] %vm59, %v79
    %s81 = sld [smem:[#allocation3 + $0x3]]
    %s82 = scalar_lea.vmem %s2, %s81
    %v83 = vld [vmem:[%s82] sm:$0x1]
    %84 = vst.msk [vmem:[#allocation2 + $0x6] sm:$0x1] %vm59, %v83
    %s85 = sld [smem:[#allocation3 + $0x83]]
    %s86 = scalar_lea.vmem %s2, %s85
    %v87 = vld [vmem:[%s86] sm:$0x1]
    %88 = vst.msk [vmem:[#allocation2 + $0x7] sm:$0x1] %vm59, %v87
    %s89 = sld [smem:[#allocation3 + $0x4]]
    %s90 = scalar_lea.vmem %s2, %s89
    %v91 = vld [vmem:[%s90] sm:$0x1]
    %92 = vst.msk [vmem:[#allocation2 + $0x8] sm:$0x1] %vm59, %v91
    %s93 = sld [smem:[#allocation3 + $0x84]]
    %s94 = scalar_lea.vmem %s2, %s93
    %v95 = vld [vmem:[%s94] sm:$0x1]
    %96 = vst.msk [vmem:[#allocation2 + $0x9] sm:$0x1] %vm59, %v95
    %s97 = sld [smem:[#allocation3 + $0x5]]
    %s98 = scalar_lea.vmem %s2, %s97
    %v99 = vld [vmem:[%s98] sm:$0x1]
    %100 = vst.msk [vmem:[#allocation2 + $0xa] sm:$0x1] %vm59, %v99
    %s101 = sld [smem:[#allocation3 + $0x85]]
    %s102 = scalar_lea.vmem %s2, %s101
    %v103 = vld [vmem:[%s102] sm:$0x1]
    %104 = vst.msk [vmem:[#allocation2 + $0xb] sm:$0x1] %vm59, %v103
    %s105 = sld [smem:[#allocation3 + $0x6]]
    %s106 = scalar_lea.vmem %s2, %s105
    %v107 = vld [vmem:[%s106] sm:$0x1]
    %108 = vst.msk [vmem:[#allocation2 + $0xc] sm:$0x1] %vm59, %v107
    %s109 = sld [smem:[#allocation3 + $0x86]]
    %s110 = scalar_lea.vmem %s2, %s109
    %v111 = vld [vmem:[%s110] sm:$0x1]
    %112 = vst.msk [vmem:[#allocation2 + $0xd] sm:$0x1] %vm59, %v111
    %s113 = sld [smem:[#allocation3 + $0x7]]
    %s114 = scalar_lea.vmem %s2, %s113
    %v115 = vld [vmem:[%s114] sm:$0x1]
    %116 = vst.msk [vmem:[#allocation2 + $0xe] sm:$0x1] %vm59, %v115
    %s117 = sld [smem:[#allocation3 + $0x87]]
    %s118 = scalar_lea.vmem %s2, %s117
    %v119 = vld [vmem:[%s118] sm:$0x1]
    %120 = vst.msk [vmem:[#allocation2 + $0xf] sm:$0x1] %vm59, %v119
    %v121 = vld [vmem:[#allocation2] sm:$0xff]
    %v122 = vld [vmem:[#allocation2 + $0x8] sm:$0xff]
    %v123 = vld [vmem:[#allocation7] sm:$0xff]
    %v124 = vld [vmem:[#allocation7 + $0x8] sm:$0xff]
    %v125 = vld [vmem:[#allocation7 + $0x48] sm:$0xff]
    %v126 = vld [vmem:[#allocation7 + $0x50] sm:$0xff]
    %v127 = vld [vmem:[#allocation7 + $0x90] sm:$0xff]
    %v128 = vld [vmem:[#allocation7 + $0x98] sm:$0xff]
    %v129 = vld [vmem:[#allocation7 + $0xd8] sm:$0xff]
    %v130 = vld [vmem:[#allocation7 + $0xe0] sm:$0xff]
    %v131 = vld [vmem:[%s5] sm:$0x3]
    %v133 = vlaneseq
    %v134 = vshrl.u32 %v133, 7
    %v135 = vsub.s32 0, %v134
    %v136 = vrot.slane %v131, %v135
    %v137 = vlaneseq
    %v138 = vshrl.u32 %v137, 7
    %v139 = vsub.s32 1, %v138
    %v140 = vrot.slane %v131, %v139
    %vm143 = vcmask 261120
    %v145 = vsel %vm143, %v121, 0
    %v148 = vsel %vm143, %v122, 0
    %150 = vmatprep.subr.mxu0 %v124
    %151 = vmatpush1.msra.mxu0 %v123
    %152 = vmatprep.subr.mxu0 %v126
    %153 = vmatpush1.msra.mxu0 %v125
    %154 = vmatprep.subr.mxu0 %v128
    %155 = vmatpush1.msra.mxu0 %v127
    %156 = vmatprep.subr.mxu0 %v130
    %157 = vmatpush1.msra.mxu0 %v129
    %158 = vmatprep.subr.mxu0 0.0
    %159 = vmatpush1.msra.mxu0 0.0
    %160 = vmatprep.subr.mxu0 0.0
    %161 = vmatpush1.msra.mxu0 0.0
    %162 = vmatprep.subr.mxu0 0.0
    %163 = vmatpush1.msra.mxu0 0.0
    %164 = vmatprep.subr.mxu0 0.0
    %165 = vmatpush1.msra.mxu0 0.0
    %166 = vmatprep.subr.mxu0 0.0
    %167 = vmatpush1.msra.mxu0 0.0
    %168 = vmatprep.subr.mxu0 0.0
    %169 = vmatpush1.msra.mxu0 0.0
    %170 = vmatprep.subr.mxu0 0.0
    %171 = vmatpush1.msra.mxu0 0.0
    %172 = vmatprep.subr.mxu0 0.0
    %173 = vmatpush1.msra.mxu0 0.0
    %174 = vmatprep.subr.mxu0 0.0
    %175 = vmatpush1.msra.mxu0 0.0
    %176 = vmatprep.subr.mxu0 0.0
    %177 = vmatpush1.msra.mxu0 0.0
    %178 = vmatprep.subr.mxu0 0.0
    %179 = vmatpush1.msra.mxu0 0.0
    %180 = vmatprep.subr.mxu0 0.0
    %181 = vmatpush1.msra.mxu0 0.0
    %182 = vmatprep.subr.mxu0 0.0
    %183 = vmatpush1.msra.mxu0 0.0
    %184 = vmatprep.subr.mxu0 0.0
    %185 = vmatpush1.msra.mxu0 0.0
    %186 = vmatprep.subr.mxu0 0.0
    %187 = vmatpush1.msra.mxu0 0.0
    %188 = vmatprep.subr.mxu0 0.0
    %189 = vmatpush1.msra.mxu0 0.0
    %190 = vmatprep.subr.mxu0 0.0
    %191 = vmatpush1.msra.mxu0 0.0
    %192 = vmatprep.subr.mxu0 0.0
    %193 = vmatpush1.msra.mxu0 0.0
    %194 = vmatprep.subr.mxu0 0.0
    %195 = vmatpush1.msra.mxu0 0.0
    %196 = vmatprep.subr.mxu0 0.0
    %197 = vmatpush1.msra.mxu0 0.0
    %198 = vmatprep.subr.mxu0 0.0
    %199 = vmatpush1.msra.mxu0 0.0
    %200 = vmatprep.subr.mxu0 0.0
    %201 = vmatpush1.msra.mxu0 0.0
    %202 = vmatprep.subr.mxu0 0.0
    %203 = vmatpush1.msra.mxu0 0.0
    %204 = vmatprep.subr.mxu0 0.0
    %205 = vmatpush1.msra.mxu0 0.0
    %206 = vmatprep.subr.mxu0 0.0
    %207 = vmatpush1.msra.mxu0 0.0
    %208 = vmatprep.subr.mxu0 0.0
    %209 = vmatpush1.msra.mxu0 0.0
    %210 = vmatprep.subr.mxu0 0.0
    %211 = vmatpush1.msra.mxu0 0.0
    %212 = vmatprep.subr.mxu0 0.0
    %213 = vmatpush1.msra.mxu0 0.0
    %214 = vmatprep.mubr.f32.mxu0 0.0
    %215 = vmatmul.mubr.f32.gmra.mrb[0].mxu0 %v145
    %v216 = vpop.f32.mrb[0].mxu0
    %v217 = vadd.f32 %v136, %v216
    %v218 = vpop.f32.mrb[0].mxu0
    %v219 = vadd.f32 %v140, %v218
    %220 = vmatprep.mubr.f32.mxu0 0.0
    %221 = vmatmul.mubr.f32.gmra.mrb[0].mxu0 %v148
    %v222 = vpop.f32.mrb[0].mxu0
    %v223 = vadd.f32 %v136, %v222
    %v224 = vpop.f32.mrb[0].mxu0
    %v225 = vadd.f32 %v140, %v224
    %226 = vdwg.mxu0
    %v227 = vld [vmem:[#allocation7 + $0x10] sm:$0xff]
    %v228 = vld [vmem:[#allocation7 + $0x58] sm:$0xff]
    %v229 = vld [vmem:[#allocation7 + $0xa0] sm:$0xff]
    %v230 = vld [vmem:[#allocation7 + $0xe8] sm:$0xff]
    %v231 = vld [vmem:[#allocation7 + $0x18] sm:$0xff]
    %v232 = vld [vmem:[#allocation7 + $0x60] sm:$0xff]
    %v233 = vld [vmem:[#allocation7 + $0xa8] sm:$0xff]
    %v234 = vld [vmem:[#allocation7 + $0xf0] sm:$0xff]
    %v236 = vsel %vm143, 0.0, 0
    %238 = vmatprep.subr.mxu0 0.0
    %239 = vmatpush1.msra.mxu0 %v227
    %240 = vmatprep.subr.mxu0 0.0
    %241 = vmatpush1.msra.mxu0 %v228
    %242 = vmatprep.subr.mxu0 0.0
    %243 = vmatpush1.msra.mxu0 %v229
    %244 = vmatprep.subr.mxu0 0.0
    %245 = vmatpush1.msra.mxu0 %v230
    %246 = vmatprep.subr.mxu0 0.0
    %247 = vmatpush1.msra.mxu0 0.0
    %248 = vmatprep.subr.mxu0 0.0
    %249 = vmatpush1.msra.mxu0 0.0
    %250 = vmatprep.subr.mxu0 0.0
    %251 = vmatpush1.msra.mxu0 0.0
    %252 = vmatprep.subr.mxu0 0.0
    %253 = vmatpush1.msra.mxu0 0.0
    %254 = vmatprep.subr.mxu0 0.0
    %255 = vmatpush1.msra.mxu0 0.0
    %256 = vmatprep.subr.mxu0 0.0
    %257 = vmatpush1.msra.mxu0 0.0
    %258 = vmatprep.subr.mxu0 0.0
    %259 = vmatpush1.msra.mxu0 0.0
    %260 = vmatprep.subr.mxu0 0.0
    %261 = vmatpush1.msra.mxu0 0.0
    %262 = vmatprep.subr.mxu0 0.0
    %263 = vmatpush1.msra.mxu0 0.0
    %264 = vmatprep.subr.mxu0 0.0
    %265 = vmatpush1.msra.mxu0 0.0
    %266 = vmatprep.subr.mxu0 0.0
    %267 = vmatpush1.msra.mxu0 0.0
    %268 = vmatprep.subr.mxu0 0.0
    %269 = vmatpush1.msra.mxu0 0.0
    %270 = vmatprep.subr.mxu0 0.0
    %271 = vmatpush1.msra.mxu0 0.0
    %272 = vmatprep.subr.mxu0 0.0
    %273 = vmatpush1.msra.mxu0 0.0
    %274 = vmatprep.subr.mxu0 0.0
    %275 = vmatpush1.msra.mxu0 0.0
    %276 = vmatprep.subr.mxu0 0.0
    %277 = vmatpush1.msra.mxu0 0.0
    %278 = vmatprep.subr.mxu0 0.0
    %279 = vmatpush1.msra.mxu0 0.0
    %280 = vmatprep.subr.mxu0 0.0
    %281 = vmatpush1.msra.mxu0 0.0
    %282 = vmatprep.subr.mxu0 0.0
    %283 = vmatpush1.msra.mxu0 0.0
    %284 = vmatprep.subr.mxu0 0.0
    %285 = vmatpush1.msra.mxu0 0.0
    %286 = vmatprep.subr.mxu0 0.0
    %287 = vmatpush1.msra.mxu0 0.0
    %288 = vmatprep.subr.mxu0 0.0
    %289 = vmatpush1.msra.mxu0 0.0
    %290 = vmatprep.subr.mxu0 0.0
    %291 = vmatpush1.msra.mxu0 0.0
    %292 = vmatprep.subr.mxu0 0.0
    %293 = vmatpush1.msra.mxu0 0.0
    %294 = vmatprep.subr.mxu0 0.0
    %295 = vmatpush1.msra.mxu0 0.0
    %296 = vmatprep.subr.mxu0 0.0
    %297 = vmatpush1.msra.mxu0 0.0
    %298 = vmatprep.subr.mxu0 0.0
    %299 = vmatpush1.msra.mxu0 0.0
    %300 = vmatprep.subr.mxu0 0.0
    %301 = vmatpush1.msra.mxu0 0.0
    %302 = vmatprep.mubr.f32.mxu0 0.0
    %303 = vmatmul.mubr.f32.gmra.mrb[0].mxu0 %v236
    %v304 = vpop.f32.mrb[0].mxu0
    %v305 = vadd.f32 0.0, %v304
    %v306 = vpop.f32.mrb[0].mxu0
    %307 = vdwg.mxu0
    %v308 = vadd.f32 %v217, %v305
    %v309 = vxor.u32 %v308, 2147483648
    %v310 = vmul.f32 %v309, 1.442695
    %v311 = vpow.pop %v310
    %v312 = vadd.f32 %v311, 1.0
    %v313 = vrcp.pop %v312
    %v314 = vmul.f32 1.0, %v313
    %v315 = vtanh.pop %v308
    %v316 = vmul.f32 %v314, 0.0
    %318 = vrot.lane.b32.xlu0 %v315, 64
    %v319 = vpop.permute.xlu0 %318
    %v321 = vmul.f32 %v314, %v319
    %323 = vrot.lane.b32.xlu0 %v321, 32
    %v324 = vpop.permute.xlu0 %323
    %v326 = vadd.f32 %v316, %v324
    %v327 = vtanh.pop %v326
    %329 = vrot.lane.b32.xlu0 %v327, 64
    %v330 = vpop.permute.xlu0 %329
    %v332 = vmul.f32 %v314, %v330
    %333 = vmatprep.subr.mxu0 0.0
    %334 = vmatpush1.msra.mxu0 %v231
    %335 = vmatprep.subr.mxu0 0.0
    %336 = vmatpush1.msra.mxu0 %v232
    %337 = vmatprep.subr.mxu0 0.0
    %338 = vmatpush1.msra.mxu0 %v233
    %339 = vmatprep.subr.mxu0 0.0
    %340 = vmatpush1.msra.mxu0 %v234
    %341 = vmatprep.subr.mxu0 0.0
    %342 = vmatpush1.msra.mxu0 0.0
    %343 = vmatprep.subr.mxu0 0.0
    %344 = vmatpush1.msra.mxu0 0.0
    %345 = vmatprep.subr.mxu0 0.0
    %346 = vmatpush1.msra.mxu0 0.0
    %347 = vmatprep.subr.mxu0 0.0
    %348 = vmatpush1.msra.mxu0 0.0
    %349 = vmatprep.subr.mxu0 0.0
    %350 = vmatpush1.msra.mxu0 0.0
    %351 = vmatprep.subr.mxu0 0.0
    %352 = vmatpush1.msra.mxu0 0.0
    %353 = vmatprep.subr.mxu0 0.0
    %354 = vmatpush1.msra.mxu0 0.0
    %355 = vmatprep.subr.mxu0 0.0
    %356 = vmatpush1.msra.mxu0 0.0
    %357 = vmatprep.subr.mxu0 0.0
    %358 = vmatpush1.msra.mxu0 0.0
    %359 = vmatprep.subr.mxu0 0.0
    %360 = vmatpush1.msra.mxu0 0.0
    %361 = vmatprep.subr.mxu0 0.0
    %362 = vmatpush1.msra.mxu0 0.0
    %363 = vmatprep.subr.mxu0 0.0
    %364 = vmatpush1.msra.mxu0 0.0
    %365 = vmatprep.subr.mxu0 0.0
    %366 = vmatpush1.msra.mxu0 0.0
    %367 = vmatprep.subr.mxu0 0.0
    %368 = vmatpush1.msra.mxu0 0.0
    %369 = vmatprep.subr.mxu0 0.0
    %370 = vmatpush1.msra.mxu0 0.0
    %371 = vmatprep.subr.mxu0 0.0
    %372 = vmatpush1.msra.mxu0 0.0
    %373 = vmatprep.subr.mxu0 0.0
    %374 = vmatpush1.msra.mxu0 0.0
    %375 = vmatprep.subr.mxu0 0.0
    %376 = vmatpush1.msra.mxu0 0.0
    %377 = vmatprep.subr.mxu0 0.0
    %378 = vmatpush1.msra.mxu0 0.0
    %379 = vmatprep.subr.mxu0 0.0
    %380 = vmatpush1.msra.mxu0 0.0
    %381 = vmatprep.subr.mxu0 0.0
    %382 = vmatpush1.msra.mxu0 0.0
    %383 = vmatprep.subr.mxu0 0.0
    %384 = vmatpush1.msra.mxu0 0.0
    %385 = vmatprep.subr.mxu0 0.0
    %386 = vmatpush1.msra.mxu0 0.0
    %387 = vmatprep.subr.mxu0 0.0
    %388 = vmatpush1.msra.mxu0 0.0
    %389 = vmatprep.subr.mxu0 0.0
    %390 = vmatpush1.msra.mxu0 0.0
    %391 = vmatprep.subr.mxu0 0.0
    %392 = vmatpush1.msra.mxu0 0.0
    %393 = vmatprep.subr.mxu0 0.0
    %394 = vmatpush1.msra.mxu0 0.0
    %395 = vmatprep.subr.mxu0 0.0
    %396 = vmatpush1.msra.mxu0 0.0
    %397 = vmatprep.mubr.f32.mxu0 0.0
    %398 = vmatmul.mubr.f32.gmra.mrb[0].mxu0 %v236
    %v399 = vpop.f32.mrb[0].mxu0
    %v400 = vadd.f32 0.0, %v399
    %v401 = vpop.f32.mrb[0].mxu0
    %402 = vdwg.mxu0
    %v404 = vrot.slane %v400, 2
    %v406 = vadd.f32 %v225, %v404
    %v407 = vxor.u32 %v406, 2147483648
    %v408 = vmul.f32 %v407, 1.442695
    %v409 = vpow.pop %v408
    %v410 = vadd.f32 %v409, 1.0
    %v411 = vrcp.pop %v410
    %v412 = vmul.f32 1.0, %v411
    %v413 = vtanh.pop %v406
    %v414 = vmul.f32 %v412, 0.0
    %416 = vrot.lane.b32.xlu0 %v413, 64
    %v417 = vpop.permute.xlu0 %416
    %v419 = vmul.f32 %v412, %v417
    %421 = vrot.lane.b32.xlu0 %v419, 32
    %v422 = vpop.permute.xlu0 %421
    %v424 = vadd.f32 %v414, %v422
    %v425 = vtanh.pop %v424
    %427 = vrot.lane.b32.xlu0 %v425, 64
    %v428 = vpop.permute.xlu0 %427
    %v430 = vmul.f32 %v412, %v428
    %432 = vrot.lane.b32.xlu0 %v332, 32
    %v433 = vpop.permute.xlu0 %432
    %v434 = vsel %vm143, %v433, 0
    %436 = vmatprep.subr.mxu0 0.0
    %437 = vmatpush1.msra.mxu0 %v227
    %438 = vmatprep.subr.mxu0 0.0
    %439 = vmatpush1.msra.mxu0 %v228
    %440 = vmatprep.subr.mxu0 0.0
    %441 = vmatpush1.msra.mxu0 %v229
    %442 = vmatprep.subr.mxu0 0.0
    %443 = vmatpush1.msra.mxu0 %v230
    %444 = vmatprep.subr.mxu0 0.0
    %445 = vmatpush1.msra.mxu0 0.0
    %446 = vmatprep.subr.mxu0 0.0
    %447 = vmatpush1.msra.mxu0 0.0
    %448 = vmatprep.subr.mxu0 0.0
    %449 = vmatpush1.msra.mxu0 0.0
    %450 = vmatprep.subr.mxu0 0.0
    %451 = vmatpush1.msra.mxu0 0.0
    %452 = vmatprep.subr.mxu0 0.0
    %453 = vmatpush1.msra.mxu0 0.0
    %454 = vmatprep.subr.mxu0 0.0
    %455 = vmatpush1.msra.mxu0 0.0
    %456 = vmatprep.subr.mxu0 0.0
    %457 = vmatpush1.msra.mxu0 0.0
    %458 = vmatprep.subr.mxu0 0.0
    %459 = vmatpush1.msra.mxu0 0.0
    %460 = vmatprep.subr.mxu0 0.0
    %461 = vmatpush1.msra.mxu0 0.0
    %462 = vmatprep.subr.mxu0 0.0
    %463 = vmatpush1.msra.mxu0 0.0
    %464 = vmatprep.subr.mxu0 0.0
    %465 = vmatpush1.msra.mxu0 0.0
    %466 = vmatprep.subr.mxu0 0.0
    %467 = vmatpush1.msra.mxu0 0.0
    %468 = vmatprep.subr.mxu0 0.0
    %469 = vmatpush1.msra.mxu0 0.0
    %470 = vmatprep.subr.mxu0 0.0
    %471 = vmatpush1.msra.mxu0 0.0
    %472 = vmatprep.subr.mxu0 0.0
    %473 = vmatpush1.msra.mxu0 0.0
    %474 = vmatprep.subr.mxu0 0.0
    %475 = vmatpush1.msra.mxu0 0.0
    %476 = vmatprep.subr.mxu0 0.0
    %477 = vmatpush1.msra.mxu0 0.0
    %478 = vmatprep.subr.mxu0 0.0
    %479 = vmatpush1.msra.mxu0 0.0
    %480 = vmatprep.subr.mxu0 0.0
    %481 = vmatpush1.msra.mxu0 0.0
    %482 = vmatprep.subr.mxu0 0.0
    %483 = vmatpush1.msra.mxu0 0.0
    %484 = vmatprep.subr.mxu0 0.0
    %485 = vmatpush1.msra.mxu0 0.0
    %486 = vmatprep.subr.mxu0 0.0
    %487 = vmatpush1.msra.mxu0 0.0
    %488 = vmatprep.subr.mxu0 0.0
    %489 = vmatpush1.msra.mxu0 0.0
    %490 = vmatprep.subr.mxu0 0.0
    %491 = vmatpush1.msra.mxu0 0.0
    %492 = vmatprep.subr.mxu0 0.0
    %493 = vmatpush1.msra.mxu0 0.0
    %494 = vmatprep.subr.mxu0 0.0
    %495 = vmatpush1.msra.mxu0 0.0
    %496 = vmatprep.subr.mxu0 0.0
    %497 = vmatpush1.msra.mxu0 0.0
    %498 = vmatprep.subr.mxu0 0.0
    %499 = vmatpush1.msra.mxu0 0.0
    %500 = vmatprep.mubr.f32.mxu0 0.0
    %501 = vmatmul.mubr.f32.gmra.mrb[0].mxu0 %v434
    %v502 = vpop.f32.mrb[0].mxu0
    %v503 = vadd.f32 0.0, %v502
    %v504 = vpop.f32.mrb[0].mxu0
    %505 = vdwg.mxu0
    %v507 = vrot.slane %v503, 6
    %v509 = vadd.f32 %v217, %v507
    %v510 = vxor.u32 %v509, 2147483648
    %v511 = vmul.f32 %v510, 1.442695
    %v512 = vpow.pop %v511
    %v513 = vadd.f32 %v512, 1.0
    %v514 = vrcp.pop %v513
    %v515 = vmul.f32 1.0, %v514
    %v516 = vtanh.pop %v509
    %v518 = vrot.slane %v326, 6
    %v520 = vmul.f32 %v515, %v518
    %522 = vrot.lane.b32.xlu0 %v516, 64
    %v523 = vpop.permute.xlu0 %522
    %v525 = vmul.f32 %v515, %v523
    %527 = vrot.lane.b32.xlu0 %v525, 32
    %v528 = vpop.permute.xlu0 %527
    %v530 = vadd.f32 %v520, %v528
    %v531 = vtanh.pop %v530
    %533 = vrot.lane.b32.xlu0 %v531, 64
    %v534 = vpop.permute.xlu0 %533
    %v536 = vmul.f32 %v515, %v534
    %v538 = vrot.slane %v430, 6
    %539 = vrot.lane.b32.xlu0 %v538, 32
    %v540 = vpop.permute.xlu0 %539
    %v541 = vsel %vm143, %v540, 0
    %543 = vmatprep.subr.mxu0 0.0
    %544 = vmatpush1.msra.mxu0 %v231
    %545 = vmatprep.subr.mxu0 0.0
    %546 = vmatpush1.msra.mxu0 %v232
    %547 = vmatprep.subr.mxu0 0.0
    %548 = vmatpush1.msra.mxu0 %v233
    %549 = vmatprep.subr.mxu0 0.0
    %550 = vmatpush1.msra.mxu0 %v234
    %551 = vmatprep.subr.mxu0 0.0
    %552 = vmatpush1.msra.mxu0 0.0
    %553 = vmatprep.subr.mxu0 0.0
    %554 = vmatpush1.msra.mxu0 0.0
    %555 = vmatprep.subr.mxu0 0.0
    %556 = vmatpush1.msra.mxu0 0.0
    %557 = vmatprep.subr.mxu0 0.0
    %558 = vmatpush1.msra.mxu0 0.0
    %559 = vmatprep.subr.mxu0 0.0
    %560 = vmatpush1.msra.mxu0 0.0
    %561 = vmatprep.subr.mxu0 0.0
    %562 = vmatpush1.msra.mxu0 0.0
    %563 = vmatprep.subr.mxu0 0.0
    %564 = vmatpush1.msra.mxu0 0.0
    %565 = vmatprep.subr.mxu0 0.0
    %566 = vmatpush1.msra.mxu0 0.0
    %567 = vmatprep.subr.mxu0 0.0
    %568 = vmatpush1.msra.mxu0 0.0
    %569 = vmatprep.subr.mxu0 0.0
    %570 = vmatpush1.msra.mxu0 0.0
    %571 = vmatprep.subr.mxu0 0.0
    %572 = vmatpush1.msra.mxu0 0.0
    %573 = vmatprep.subr.mxu0 0.0
    %574 = vmatpush1.msra.mxu0 0.0
    %575 = vmatprep.subr.mxu0 0.0
    %576 = vmatpush1.msra.mxu0 0.0
    %577 = vmatprep.subr.mxu0 0.0
    %578 = vmatpush1.msra.mxu0 0.0
    %579 = vmatprep.subr.mxu0 0.0
    %580 = vmatpush1.msra.mxu0 0.0
    %581 = vmatprep.subr.mxu0 0.0
    %582 = vmatpush1.msra.mxu0 0.0
    %583 = vmatprep.subr.mxu0 0.0
    %584 = vmatpush1.msra.mxu0 0.0
    %585 = vmatprep.subr.mxu0 0.0
    %586 = vmatpush1.msra.mxu0 0.0
    %587 = vmatprep.subr.mxu0 0.0
    %588 = vmatpush1.msra.mxu0 0.0
    %589 = vmatprep.subr.mxu0 0.0
    %590 = vmatpush1.msra.mxu0 0.0
    %591 = vmatprep.subr.mxu0 0.0
    %592 = vmatpush1.msra.mxu0 0.0
    %593 = vmatprep.subr.mxu0 0.0
    %594 = vmatpush1.msra.mxu0 0.0
    %595 = vmatprep.subr.mxu0 0.0
    %596 = vmatpush1.msra.mxu0 0.0
    %597 = vmatprep.subr.mxu0 0.0
    %598 = vmatpush1.msra.mxu0 0.0
    %599 = vmatprep.subr.mxu0 0.0
    %600 = vmatpush1.msra.mxu0 0.0
    %601 = vmatprep.subr.mxu0 0.0
    %602 = vmatpush1.msra.mxu0 0.0
    %603 = vmatprep.subr.mxu0 0.0
    %604 = vmatpush1.msra.mxu0 0.0
    %605 = vmatprep.subr.mxu0 0.0
    %606 = vmatpush1.msra.mxu0 0.0
    %607 = vmatprep.mubr.f32.mxu0 0.0
    %608 = vmatmul.mubr.f32.gmra.mrb[0].mxu0 %v541
    %v609 = vpop.f32.mrb[0].mxu0
    %v610 = vadd.f32 0.0, %v609
    %v611 = vpop.f32.mrb[0].mxu0
    %612 = vdwg.mxu0
    %v614 = vrot.slane %v610, 4
    %v616 = vadd.f32 %v225, %v614
    %v617 = vxor.u32 %v616, 2147483648
    %v618 = vmul.f32 %v617, 1.442695
    %v619 = vpow.pop %v618
    %v620 = vadd.f32 %v619, 1.0
    %v621 = vrcp.pop %v620
    %v622 = vmul.f32 1.0, %v621
    %v623 = vtanh.pop %v616
    %v625 = vrot.slane %v424, 2
    %v627 = vmul.f32 %v622, %v625
    %629 = vrot.lane.b32.xlu0 %v623, 64
    %v630 = vpop.permute.xlu0 %629
    %v632 = vmul.f32 %v622, %v630
    %634 = vrot.lane.b32.xlu0 %v632, 32
    %v635 = vpop.permute.xlu0 %634
    %v637 = vadd.f32 %v627, %v635
    %v638 = vtanh.pop %v637
    %640 = vrot.lane.b32.xlu0 %v638, 64
    %v641 = vpop.permute.xlu0 %640
    %v643 = vmul.f32 %v622, %v641
    %v645 = vrot.slane %v536, 2
    %646 = vrot.lane.b32.xlu0 %v645, 32
    %v647 = vpop.permute.xlu0 %646
    %v648 = vsel %vm143, %v647, 0
    %650 = vmatprep.subr.mxu0 0.0
    %651 = vmatpush1.msra.mxu0 %v227
    %652 = vmatprep.subr.mxu0 0.0
    %653 = vmatpush1.msra.mxu0 %v228
    %654 = vmatprep.subr.mxu0 0.0
    %655 = vmatpush1.msra.mxu0 %v229
    %656 = vmatprep.subr.mxu0 0.0
    %657 = vmatpush1.msra.mxu0 %v230
    %658 = vmatprep.subr.mxu0 0.0
    %659 = vmatpush1.msra.mxu0 0.0
    %660 = vmatprep.subr.mxu0 0.0
    %661 = vmatpush1.msra.mxu0 0.0
    %662 = vmatprep.subr.mxu0 0.0
    %663 = vmatpush1.msra.mxu0 0.0
    %664 = vmatprep.subr.mxu0 0.0
    %665 = vmatpush1.msra.mxu0 0.0
    %666 = vmatprep.subr.mxu0 0.0
    %667 = vmatpush1.msra.mxu0 0.0
    %668 = vmatprep.subr.mxu0 0.0
    %669 = vmatpush1.msra.mxu0 0.0
    %670 = vmatprep.subr.mxu0 0.0
    %671 = vmatpush1.msra.mxu0 0.0
    %672 = vmatprep.subr.mxu0 0.0
    %673 = vmatpush1.msra.mxu0 0.0
    %674 = vmatprep.subr.mxu0 0.0
    %675 = vmatpush1.msra.mxu0 0.0
    %676 = vmatprep.subr.mxu0 0.0
    %677 = vmatpush1.msra.mxu0 0.0
    %678 = vmatprep.subr.mxu0 0.0
    %679 = vmatpush1.msra.mxu0 0.0
    %680 = vmatprep.subr.mxu0 0.0
    %681 = vmatpush1.msra.mxu0 0.0
    %682 = vmatprep.subr.mxu0 0.0
    %683 = vmatpush1.msra.mxu0 0.0
    %684 = vmatprep.subr.mxu0 0.0
    %685 = vmatpush1.msra.mxu0 0.0
    %686 = vmatprep.subr.mxu0 0.0
    %687 = vmatpush1.msra.mxu0 0.0
    %688 = vmatprep.subr.mxu0 0.0
    %689 = vmatpush1.msra.mxu0 0.0
    %690 = vmatprep.subr.mxu0 0.0
    %691 = vmatpush1.msra.mxu0 0.0
    %692 = vmatprep.subr.mxu0 0.0
    %693 = vmatpush1.msra.mxu0 0.0
    %694 = vmatprep.subr.mxu0 0.0
    %695 = vmatpush1.msra.mxu0 0.0
    %696 = vmatprep.subr.mxu0 0.0
    %697 = vmatpush1.msra.mxu0 0.0
    %698 = vmatprep.subr.mxu0 0.0
    %699 = vmatpush1.msra.mxu0 0.0
    %700 = vmatprep.subr.mxu0 0.0
    %701 = vmatpush1.msra.mxu0 0.0
    %702 = vmatprep.subr.mxu0 0.0
    %703 = vmatpush1.msra.mxu0 0.0
    %704 = vmatprep.subr.mxu0 0.0
    %705 = vmatpush1.msra.mxu0 0.0
    %706 = vmatprep.subr.mxu0 0.0
    %707 = vmatpush1.msra.mxu0 0.0
    %708 = vmatprep.subr.mxu0 0.0
    %709 = vmatpush1.msra.mxu0 0.0
    %710 = vmatprep.subr.mxu0 0.0
    %711 = vmatpush1.msra.mxu0 0.0
    %712 = vmatprep.subr.mxu0 0.0
    %713 = vmatpush1.msra.mxu0 0.0
    %714 = vmatprep.mubr.f32.mxu0 0.0
    %715 = vmatmul.mubr.f32.gmra.mrb[0].mxu0 %v648
    %v716 = vpop.f32.mrb[0].mxu0
    %v717 = vadd.f32 0.0, %v716
    %v718 = vpop.f32.mrb[0].mxu0
    %719 = vdwg.mxu0
    %v721 = vrot.slane %v717, 4
    %v723 = vadd.f32 %v217, %v721
    %v724 = vxor.u32 %v723, 2147483648
    %v725 = vmul.f32 %v724, 1.442695
    %v726 = vpow.pop %v725
    %v727 = vadd.f32 %v726, 1.0
    %v728 = vrcp.pop %v727
    %v729 = vmul.f32 1.0, %v728
    %v730 = vtanh.pop %v723
    %v732 = vrot.slane %v530, 6
    %v734 = vmul.f32 %v729, %v732
    %736 = vrot.lane.b32.xlu0 %v730, 64
    %v737 = vpop.permute.xlu0 %736
    %v739 = vmul.f32 %v729, %v737
    %741 = vrot.lane.b32.xlu0 %v739, 32
    %v742 = vpop.permute.xlu0 %741
    %v744 = vadd.f32 %v734, %v742
    %v745 = vtanh.pop %v744
    %747 = vrot.lane.b32.xlu0 %v745, 64
    %v748 = vpop.permute.xlu0 %747
    %v750 = vmul.f32 %v729, %v748
    %v752 = vrot.slane %v643, 4
    %753 = vrot.lane.b32.xlu0 %v752, 32
    %v754 = vpop.permute.xlu0 %753
    %v755 = vsel %vm143, %v754, 0
    %757 = vmatprep.subr.mxu0 0.0
    %758 = vmatpush1.msra.mxu0 %v231
    %759 = vmatprep.subr.mxu0 0.0
    %760 = vmatpush1.msra.mxu0 %v232
    %761 = vmatprep.subr.mxu0 0.0
    %762 = vmatpush1.msra.mxu0 %v233
    %763 = vmatprep.subr.mxu0 0.0
    %764 = vmatpush1.msra.mxu0 %v234
    %765 = vmatprep.subr.mxu0 0.0
    %766 = vmatpush1.msra.mxu0 0.0
    %767 = vmatprep.subr.mxu0 0.0
    %768 = vmatpush1.msra.mxu0 0.0
    %769 = vmatprep.subr.mxu0 0.0
    %770 = vmatpush1.msra.mxu0 0.0
    %771 = vmatprep.subr.mxu0 0.0
    %772 = vmatpush1.msra.mxu0 0.0
    %773 = vmatprep.subr.mxu0 0.0
    %774 = vmatpush1.msra.mxu0 0.0
    %775 = vmatprep.subr.mxu0 0.0
    %776 = vmatpush1.msra.mxu0 0.0
    %777 = vmatprep.subr.mxu0 0.0
    %778 = vmatpush1.msra.mxu0 0.0
    %779 = vmatprep.subr.mxu0 0.0
    %780 = vmatpush1.msra.mxu0 0.0
    %781 = vmatprep.subr.mxu0 0.0
    %782 = vmatpush1.msra.mxu0 0.0
    %783 = vmatprep.subr.mxu0 0.0
    %784 = vmatpush1.msra.mxu0 0.0
    %785 = vmatprep.subr.mxu0 0.0
    %786 = vmatpush1.msra.mxu0 0.0
    %787 = vmatprep.subr.mxu0 0.0
    %788 = vmatpush1.msra.mxu0 0.0
    %789 = vmatprep.subr.mxu0 0.0
    %790 = vmatpush1.msra.mxu0 0.0
    %791 = vmatprep.subr.mxu0 0.0
    %792 = vmatpush1.msra.mxu0 0.0
    %793 = vmatprep.subr.mxu0 0.0
    %794 = vmatpush1.msra.mxu0 0.0
    %795 = vmatprep.subr.mxu0 0.0
    %796 = vmatpush1.msra.mxu0 0.0
    %797 = vmatprep.subr.mxu0 0.0
    %798 = vmatpush1.msra.mxu0 0.0
    %799 = vmatprep.subr.mxu0 0.0
    %800 = vmatpush1.msra.mxu0 0.0
    %801 = vmatprep.subr.mxu0 0.0
    %802 = vmatpush1.msra.mxu0 0.0
    %803 = vmatprep.subr.mxu0 0.0
    %804 = vmatpush1.msra.mxu0 0.0
    %805 = vmatprep.subr.mxu0 0.0
    %806 = vmatpush1.msra.mxu0 0.0
    %807 = vmatprep.subr.mxu0 0.0
    %808 = vmatpush1.msra.mxu0 0.0
    %809 = vmatprep.subr.mxu0 0.0
    %810 = vmatpush1.msra.mxu0 0.0
    %811 = vmatprep.subr.mxu0 0.0
    %812 = vmatpush1.msra.mxu0 0.0
    %813 = vmatprep.subr.mxu0 0.0
    %814 = vmatpush1.msra.mxu0 0.0
    %815 = vmatprep.subr.mxu0 0.0
    %816 = vmatpush1.msra.mxu0 0.0
    %817 = vmatprep.subr.mxu0 0.0
    %818 = vmatpush1.msra.mxu0 0.0
    %819 = vmatprep.subr.mxu0 0.0
    %820 = vmatpush1.msra.mxu0 0.0
    %821 = vmatprep.mubr.f32.mxu0 0.0
    %822 = vmatmul.mubr.f32.gmra.mrb[0].mxu0 %v755
    %v823 = vpop.f32.mrb[0].mxu0
    %v824 = vadd.f32 0.0, %v823
    %v825 = vpop.f32.mrb[0].mxu0
    %826 = vdwg.mxu0
    %v828 = vrot.slane %v824, 6
    %v830 = vadd.f32 %v225, %v828
    %v831 = vxor.u32 %v830, 2147483648
    %v832 = vmul.f32 %v831, 1.442695
    %v833 = vpow.pop %v832
    %v834 = vadd.f32 %v833, 1.0
    %v835 = vrcp.pop %v834
    %v836 = vmul.f32 1.0, %v835
    %v837 = vtanh.pop %v830
    %v839 = vrot.slane %v637, 2
    %v841 = vmul.f32 %v836, %v839
    %843 = vrot.lane.b32.xlu0 %v837, 64
    %v844 = vpop.permute.xlu0 %843
    %v846 = vmul.f32 %v836, %v844
    %848 = vrot.lane.b32.xlu0 %v846, 32
    %v849 = vpop.permute.xlu0 %848
    %v851 = vadd.f32 %v841, %v849
    %v852 = vtanh.pop %v851
    %854 = vrot.lane.b32.xlu0 %v852, 64
    %v855 = vpop.permute.xlu0 %854
    %v857 = vmul.f32 %v836, %v855
    %v859 = vrot.slane %v750, 4
    %860 = vrot.lane.b32.xlu0 %v859, 32
    %v861 = vpop.permute.xlu0 %860
    %v862 = vsel %vm143, %v861, 0
    %864 = vmatprep.subr.mxu0 0.0
    %865 = vmatpush1.msra.mxu0 %v227
    %866 = vmatprep.subr.mxu0 0.0
    %867 = vmatpush1.msra.mxu0 %v228
    %868 = vmatprep.subr.mxu0 0.0
    %869 = vmatpush1.msra.mxu0 %v229
    %870 = vmatprep.subr.mxu0 0.0
    %871 = vmatpush1.msra.mxu0 %v230
    %872 = vmatprep.subr.mxu0 0.0
    %873 = vmatpush1.msra.mxu0 0.0
    %874 = vmatprep.subr.mxu0 0.0
    %875 = vmatpush1.msra.mxu0 0.0
    %876 = vmatprep.subr.mxu0 0.0
    %877 = vmatpush1.msra.mxu0 0.0
    %878 = vmatprep.subr.mxu0 0.0
    %879 = vmatpush1.msra.mxu0 0.0
    %880 = vmatprep.subr.mxu0 0.0
    %881 = vmatpush1.msra.mxu0 0.0
    %882 = vmatprep.subr.mxu0 0.0
    %883 = vmatpush1.msra.mxu0 0.0
    %884 = vmatprep.subr.mxu0 0.0
    %885 = vmatpush1.msra.mxu0 0.0
    %886 = vmatprep.subr.mxu0 0.0
    %887 = vmatpush1.msra.mxu0 0.0
    %888 = vmatprep.subr.mxu0 0.0
    %889 = vmatpush1.msra.mxu0 0.0
    %890 = vmatprep.subr.mxu0 0.0
    %891 = vmatpush1.msra.mxu0 0.0
    %892 = vmatprep.subr.mxu0 0.0
    %893 = vmatpush1.msra.mxu0 0.0
    %894 = vmatprep.subr.mxu0 0.0
    %895 = vmatpush1.msra.mxu0 0.0
    %896 = vmatprep.subr.mxu0 0.0
    %897 = vmatpush1.msra.mxu0 0.0
    %898 = vmatprep.subr.mxu0 0.0
    %899 = vmatpush1.msra.mxu0 0.0
    %900 = vmatprep.subr.mxu0 0.0
    %901 = vmatpush1.msra.mxu0 0.0
    %902 = vmatprep.subr.mxu0 0.0
    %903 = vmatpush1.msra.mxu0 0.0
    %904 = vmatprep.subr.mxu0 0.0
    %905 = vmatpush1.msra.mxu0 0.0
    %906 = vmatprep.subr.mxu0 0.0
    %907 = vmatpush1.msra.mxu0 0.0
    %908 = vmatprep.subr.mxu0 0.0
    %909 = vmatpush1.msra.mxu0 0.0
    %910 = vmatprep.subr.mxu0 0.0
    %911 = vmatpush1.msra.mxu0 0.0
    %912 = vmatprep.subr.mxu0 0.0
    %913 = vmatpush1.msra.mxu0 0.0
    %914 = vmatprep.subr.mxu0 0.0
    %915 = vmatpush1.msra.mxu0 0.0
    %916 = vmatprep.subr.mxu0 0.0
    %917 = vmatpush1.msra.mxu0 0.0
    %918 = vmatprep.subr.mxu0 0.0
    %919 = vmatpush1.msra.mxu0 0.0
    %920 = vmatprep.subr.mxu0 0.0
    %921 = vmatpush1.msra.mxu0 0.0
    %922 = vmatprep.subr.mxu0 0.0
    %923 = vmatpush1.msra.mxu0 0.0
    %924 = vmatprep.subr.mxu0 0.0
    %925 = vmatpush1.msra.mxu0 0.0
    %926 = vmatprep.subr.mxu0 0.0
    %927 = vmatpush1.msra.mxu0 0.0
    %928 = vmatprep.mubr.f32.mxu0 0.0
    %929 = vmatmul.mubr.f32.gmra.mrb[0].mxu0 %v862
    %v930 = vpop.f32.mrb[0].mxu0
    %v931 = vadd.f32 0.0, %v930
    %v932 = vpop.f32.mrb[0].mxu0
    %933 = vdwg.mxu0
    %v935 = vrot.slane %v931, 2
    %v937 = vadd.f32 %v217, %v935
    %v938 = vxor.u32 %v937, 2147483648
    %v939 = vmul.f32 %v938, 1.442695
    %v940 = vpow.pop %v939
    %v941 = vadd.f32 %v940, 1.0
    %v942 = vrcp.pop %v941
    %v943 = vmul.f32 1.0, %v942
    %v944 = vtanh.pop %v937
    %v946 = vrot.slane %v744, 6
    %v948 = vmul.f32 %v943, %v946
    %950 = vrot.lane.b32.xlu0 %v944, 64
    %v951 = vpop.permute.xlu0 %950
    %v953 = vmul.f32 %v943, %v951
    %955 = vrot.lane.b32.xlu0 %v953, 32
    %v956 = vpop.permute.xlu0 %955
    %v958 = vadd.f32 %v948, %v956
    %v959 = vtanh.pop %v958
    %961 = vrot.lane.b32.xlu0 %v959, 64
    %v962 = vpop.permute.xlu0 %961
    %v964 = vmul.f32 %v943, %v962
    %v966 = vrot.slane %v857, 2
    %967 = vrot.lane.b32.xlu0 %v966, 32
    %v968 = vpop.permute.xlu0 %967
    %v969 = vsel %vm143, %v968, 0
    %971 = vmatprep.subr.mxu0 0.0
    %972 = vmatpush1.msra.mxu0 %v231
    %973 = vmatprep.subr.mxu0 0.0
    %974 = vmatpush1.msra.mxu0 %v232
    %975 = vmatprep.subr.mxu0 0.0
    %976 = vmatpush1.msra.mxu0 %v233
    %977 = vmatprep.subr.mxu0 0.0
    %978 = vmatpush1.msra.mxu0 %v234
    %979 = vmatprep.subr.mxu0 0.0
    %980 = vmatpush1.msra.mxu0 0.0
    %981 = vmatprep.subr.mxu0 0.0
    %982 = vmatpush1.msra.mxu0 0.0
    %983 = vmatprep.subr.mxu0 0.0
    %984 = vmatpush1.msra.mxu0 0.0
    %985 = vmatprep.subr.mxu0 0.0
    %986 = vmatpush1.msra.mxu0 0.0
    %987 = vmatprep.subr.mxu0 0.0
    %988 = vmatpush1.msra.mxu0 0.0
    %989 = vmatprep.subr.mxu0 0.0
    %990 = vmatpush1.msra.mxu0 0.0
    %991 = vmatprep.subr.mxu0 0.0
    %992 = vmatpush1.msra.mxu0 0.0
    %993 = vmatprep.subr.mxu0 0.0
    %994 = vmatpush1.msra.mxu0 0.0
    %995 = vmatprep.subr.mxu0 0.0
    %996 = vmatpush1.msra.mxu0 0.0
    %997 = vmatprep.subr.mxu0 0.0
    %998 = vmatpush1.msra.mxu0 0.0
    %999 = vmatprep.subr.mxu0 0.0
    %1000 = vmatpush1.msra.mxu0 0.0
    %1001 = vmatprep.subr.mxu0 0.0
    %1002 = vmatpush1.msra.mxu0 0.0
    %1003 = vmatprep.subr.mxu0 0.0
    %1004 = vmatpush1.msra.mxu0 0.0
    %1005 = vmatprep.subr.mxu0 0.0
    %1006 = vmatpush1.msra.mxu0 0.0
    %1007 = vmatprep.subr.mxu0 0.0
    %1008 = vmatpush1.msra.mxu0 0.0
    %1009 = vmatprep.subr.mxu0 0.0
    %1010 = vmatpush1.msra.mxu0 0.0
    %1011 = vmatprep.subr.mxu0 0.0
    %1012 = vmatpush1.msra.mxu0 0.0
    %1013 = vmatprep.subr.mxu0 0.0
    %1014 = vmatpush1.msra.mxu0 0.0
    %1015 = vmatprep.subr.mxu0 0.0
    %1016 = vmatpush1.msra.mxu0 0.0
    %1017 = vmatprep.subr.mxu0 0.0
    %1018 = vmatpush1.msra.mxu0 0.0
    %1019 = vmatprep.subr.mxu0 0.0
    %1020 = vmatpush1.msra.mxu0 0.0
    %1021 = vmatprep.subr.mxu0 0.0
    %1022 = vmatpush1.msra.mxu0 0.0
    %1023 = vmatprep.subr.mxu0 0.0
    %1024 = vmatpush1.msra.mxu0 0.0
    %1025 = vmatprep.subr.mxu0 0.0
    %1026 = vmatpush1.msra.mxu0 0.0
    %1027 = vmatprep.subr.mxu0 0.0
    %1028 = vmatpush1.msra.mxu0 0.0
    %1029 = vmatprep.subr.mxu0 0.0
    %1030 = vmatpush1.msra.mxu0 0.0
    %1031 = vmatprep.subr.mxu0 0.0
    %1032 = vmatpush1.msra.mxu0 0.0
    %1033 = vmatprep.subr.mxu0 0.0
    %1034 = vmatpush1.msra.mxu0 0.0
    %1035 = vmatprep.mubr.f32.mxu0 0.0
    %1036 = vmatmul.mubr.f32.gmra.mrb[0].mxu0 %v969
    %v1037 = vpop.f32.mrb[0].mxu0
    %v1038 = vadd.f32 0.0, %v1037
    %v1039 = vpop.f32.mrb[0].mxu0
    %1040 = vdwg.mxu0
    %v1041 = vadd.f32 %v225, %v1038
    %v1042 = vxor.u32 %v1041, 2147483648
    %v1043 = vmul.f32 %v1042, 1.442695
    %v1044 = vpow.pop %v1043
    %v1045 = vadd.f32 %v1044, 1.0
    %v1046 = vrcp.pop %v1045
    %v1047 = vmul.f32 1.0, %v1046
    %v1048 = vtanh.pop %v1041
    %v1050 = vrot.slane %v851, 2
    %v1052 = vmul.f32 %v1047, %v1050
    %1054 = vrot.lane.b32.xlu0 %v1048, 64
    %v1055 = vpop.permute.xlu0 %1054
    %v1057 = vmul.f32 %v1047, %v1055
    %1059 = vrot.lane.b32.xlu0 %v1057, 32
    %v1060 = vpop.permute.xlu0 %1059
    %v1062 = vadd.f32 %v1052, %v1060
    %v1063 = vtanh.pop %v1062
    %1065 = vrot.lane.b32.xlu0 %v1063, 64
    %v1066 = vpop.permute.xlu0 %1065
    %v1068 = vmul.f32 %v1047, %v1066
    %v1070 = vrot.slane %v964, 6
    %1071 = vrot.lane.b32.xlu0 %v1070, 32
    %v1072 = vpop.permute.xlu0 %1071
    %v1073 = vsel %vm143, %v1072, 0
    %1075 = vmatprep.subr.mxu0 0.0
    %1076 = vmatpush1.msra.mxu0 %v227
    %1077 = vmatprep.subr.mxu0 0.0
    %1078 = vmatpush1.msra.mxu0 %v228
    %1079 = vmatprep.subr.mxu0 0.0
    %1080 = vmatpush1.msra.mxu0 %v229
    %1081 = vmatprep.subr.mxu0 0.0
    %1082 = vmatpush1.msra.mxu0 %v230
    %1083 = vmatprep.subr.mxu0 0.0
    %1084 = vmatpush1.msra.mxu0 0.0
    %1085 = vmatprep.subr.mxu0 0.0
    %1086 = vmatpush1.msra.mxu0 0.0
    %1087 = vmatprep.subr.mxu0 0.0
    %1088 = vmatpush1.msra.mxu0 0.0
    %1089 = vmatprep.subr.mxu0 0.0
    %1090 = vmatpush1.msra.mxu0 0.0
    %1091 = vmatprep.subr.mxu0 0.0
    %1092 = vmatpush1.msra.mxu0 0.0
    %1093 = vmatprep.subr.mxu0 0.0
    %1094 = vmatpush1.msra.mxu0 0.0
    %1095 = vmatprep.subr.mxu0 0.0
    %1096 = vmatpush1.msra.mxu0 0.0
    %1097 = vmatprep.subr.mxu0 0.0
    %1098 = vmatpush1.msra.mxu0 0.0
    %1099 = vmatprep.subr.mxu0 0.0
    %1100 = vmatpush1.msra.mxu0 0.0
    %1101 = vmatprep.subr.mxu0 0.0
    %1102 = vmatpush1.msra.mxu0 0.0
    %1103 = vmatprep.subr.mxu0 0.0
    %1104 = vmatpush1.msra.mxu0 0.0
    %1105 = vmatprep.subr.mxu0 0.0
    %1106 = vmatpush1.msra.mxu0 0.0
    %1107 = vmatprep.subr.mxu0 0.0
    %1108 = vmatpush1.msra.mxu0 0.0
    %1109 = vmatprep.subr.mxu0 0.0
    %1110 = vmatpush1.msra.mxu0 0.0
    %1111 = vmatprep.subr.mxu0 0.0
    %1112 = vmatpush1.msra.mxu0 0.0
    %1113 = vmatprep.subr.mxu0 0.0
    %1114 = vmatpush1.msra.mxu0 0.0
    %1115 = vmatprep.subr.mxu0 0.0
    %1116 = vmatpush1.msra.mxu0 0.0
    %1117 = vmatprep.subr.mxu0 0.0
    %1118 = vmatpush1.msra.mxu0 0.0
    %1119 = vmatprep.subr.mxu0 0.0
    %1120 = vmatpush1.msra.mxu0 0.0
    %1121 = vmatprep.subr.mxu0 0.0
    %1122 = vmatpush1.msra.mxu0 0.0
    %1123 = vmatprep.subr.mxu0 0.0
    %1124 = vmatpush1.msra.mxu0 0.0
    %1125 = vmatprep.subr.mxu0 0.0
    %1126 = vmatpush1.msra.mxu0 0.0
    %1127 = vmatprep.subr.mxu0 0.0
    %1128 = vmatpush1.msra.mxu0 0.0
    %1129 = vmatprep.subr.mxu0 0.0
    %1130 = vmatpush1.msra.mxu0 0.0
    %1131 = vmatprep.subr.mxu0 0.0
    %1132 = vmatpush1.msra.mxu0 0.0
    %1133 = vmatprep.subr.mxu0 0.0
    %1134 = vmatpush1.msra.mxu0 0.0
    %1135 = vmatprep.subr.mxu0 0.0
    %1136 = vmatpush1.msra.mxu0 0.0
    %1137 = vmatprep.subr.mxu0 0.0
    %1138 = vmatpush1.msra.mxu0 0.0
    %1139 = vmatprep.mubr.f32.mxu0 0.0
    %1140 = vmatmul.mubr.f32.gmra.mrb[0].mxu0 %v1073
    %v1141 = vpop.f32.mrb[0].mxu0
    %v1142 = vadd.f32 0.0, %v1141
    %v1143 = vpop.f32.mrb[0].mxu0
    %1144 = vdwg.mxu0
    %v1145 = vadd.f32 %v223, %v1142
    %v1146 = vxor.u32 %v1145, 2147483648
    %v1147 = vmul.f32 %v1146, 1.442695
    %v1148 = vpow.pop %v1147
    %v1149 = vadd.f32 %v1148, 1.0
    %v1150 = vrcp.pop %v1149
    %v1151 = vmul.f32 1.0, %v1150
    %v1152 = vtanh.pop %v1145
    %v1154 = vrot.slane %v958, 6
    %v1156 = vmul.f32 %v1151, %v1154
    %1158 = vrot.lane.b32.xlu0 %v1152, 64
    %v1159 = vpop.permute.xlu0 %1158
    %v1161 = vmul.f32 %v1151, %v1159
    %1163 = vrot.lane.b32.xlu0 %v1161, 32
    %v1164 = vpop.permute.xlu0 %1163
    %v1166 = vadd.f32 %v1156, %v1164
    %v1167 = vtanh.pop %v1166
    %1169 = vrot.lane.b32.xlu0 %v1167, 64
    %v1170 = vpop.permute.xlu0 %1169
    %v1172 = vmul.f32 %v1151, %v1170
    %1174 = vrot.lane.b32.xlu0 %v1068, 32
    %v1175 = vpop.permute.xlu0 %1174
    %v1176 = vsel %vm143, %v1175, 0
    %1178 = vmatprep.subr.mxu0 0.0
    %1179 = vmatpush1.msra.mxu0 %v231
    %1180 = vmatprep.subr.mxu0 0.0
    %1181 = vmatpush1.msra.mxu0 %v232
    %1182 = vmatprep.subr.mxu0 0.0
    %1183 = vmatpush1.msra.mxu0 %v233
    %1184 = vmatprep.subr.mxu0 0.0
    %1185 = vmatpush1.msra.mxu0 %v234
    %1186 = vmatprep.subr.mxu0 0.0
    %1187 = vmatpush1.msra.mxu0 0.0
    %1188 = vmatprep.subr.mxu0 0.0
    %1189 = vmatpush1.msra.mxu0 0.0
    %1190 = vmatprep.subr.mxu0 0.0
    %1191 = vmatpush1.msra.mxu0 0.0
    %1192 = vmatprep.subr.mxu0 0.0
    %1193 = vmatpush1.msra.mxu0 0.0
    %1194 = vmatprep.subr.mxu0 0.0
    %1195 = vmatpush1.msra.mxu0 0.0
    %1196 = vmatprep.subr.mxu0 0.0
    %1197 = vmatpush1.msra.mxu0 0.0
    %1198 = vmatprep.subr.mxu0 0.0
    %1199 = vmatpush1.msra.mxu0 0.0
    %1200 = vmatprep.subr.mxu0 0.0
    %1201 = vmatpush1.msra.mxu0 0.0
    %1202 = vmatprep.subr.mxu0 0.0
    %1203 = vmatpush1.msra.mxu0 0.0
    %1204 = vmatprep.subr.mxu0 0.0
    %1205 = vmatpush1.msra.mxu0 0.0
    %1206 = vmatprep.subr.mxu0 0.0
    %1207 = vmatpush1.msra.mxu0 0.0
    %1208 = vmatprep.subr.mxu0 0.0
    %1209 = vmatpush1.msra.mxu0 0.0
    %1210 = vmatprep.subr.mxu0 0.0
    %1211 = vmatpush1.msra.mxu0 0.0
    %1212 = vmatprep.subr.mxu0 0.0
    %1213 = vmatpush1.msra.mxu0 0.0
    %1214 = vmatprep.subr.mxu0 0.0
    %1215 = vmatpush1.msra.mxu0 0.0
    %1216 = vmatprep.subr.mxu0 0.0
    %1217 = vmatpush1.msra.mxu0 0.0
    %1218 = vmatprep.subr.mxu0 0.0
    %1219 = vmatpush1.msra.mxu0 0.0
    %1220 = vmatprep.subr.mxu0 0.0
    %1221 = vmatpush1.msra.mxu0 0.0
    %1222 = vmatprep.subr.mxu0 0.0
    %1223 = vmatpush1.msra.mxu0 0.0
    %1224 = vmatprep.subr.mxu0 0.0
    %1225 = vmatpush1.msra.mxu0 0.0
    %1226 = vmatprep.subr.mxu0 0.0
    %1227 = vmatpush1.msra.mxu0 0.0
    %1228 = vmatprep.subr.mxu0 0.0
    %1229 = vmatpush1.msra.mxu0 0.0
    %1230 = vmatprep.subr.mxu0 0.0
    %1231 = vmatpush1.msra.mxu0 0.0
    %1232 = vmatprep.subr.mxu0 0.0
    %1233 = vmatpush1.msra.mxu0 0.0
    %1234 = vmatprep.subr.mxu0 0.0
    %1235 = vmatpush1.msra.mxu0 0.0
    %1236 = vmatprep.subr.mxu0 0.0
    %1237 = vmatpush1.msra.mxu0 0.0
    %1238 = vmatprep.subr.mxu0 0.0
    %1239 = vmatpush1.msra.mxu0 0.0
    %1240 = vmatprep.subr.mxu0 0.0
    %1241 = vmatpush1.msra.mxu0 0.0
    %1242 = vmatprep.mubr.f32.mxu0 0.0
    %1243 = vmatmul.mubr.f32.gmra.mrb[0].mxu0 %v1176
    %v1244 = vpop.f32.mrb[0].mxu0
    %v1245 = vadd.f32 0.0, %v1244
    %v1246 = vpop.f32.mrb[0].mxu0
    %1247 = vdwg.mxu0
    %v1249 = vrot.slane %v1245, 2
    %v1251 = vadd.f32 %v219, %v1249
    %v1252 = vxor.u32 %v1251, 2147483648
    %v1253 = vmul.f32 %v1252, 1.442695
    %v1254 = vpow.pop %v1253
    %v1255 = vadd.f32 %v1254, 1.0
    %v1256 = vrcp.pop %v1255
    %v1257 = vmul.f32 1.0, %v1256
    %v1258 = vtanh.pop %v1251
    %v1260 = vrot.slane %v1062, 2
    %v1262 = vmul.f32 %v1257, %v1260
    %1264 = vrot.lane.b32.xlu0 %v1258, 64
    %v1265 = vpop.permute.xlu0 %1264
    %v1267 = vmul.f32 %v1257, %v1265
    %1269 = vrot.lane.b32.xlu0 %v1267, 32
    %v1270 = vpop.permute.xlu0 %1269
    %v1272 = vadd.f32 %v1262, %v1270
    %v1273 = vtanh.pop %v1272
    %1275 = vrot.lane.b32.xlu0 %v1273, 64
    %v1276 = vpop.permute.xlu0 %1275
    %v1278 = vmul.f32 %v1257, %v1276
    %1280 = vrot.lane.b32.xlu0 %v1172, 32
    %v1281 = vpop.permute.xlu0 %1280
    %v1282 = vsel %vm143, %v1281, 0
    %1284 = vmatprep.subr.mxu0 0.0
    %1285 = vmatpush1.msra.mxu0 %v227
    %1286 = vmatprep.subr.mxu0 0.0
    %1287 = vmatpush1.msra.mxu0 %v228
    %1288 = vmatprep.subr.mxu0 0.0
    %1289 = vmatpush1.msra.mxu0 %v229
    %1290 = vmatprep.subr.mxu0 0.0
    %1291 = vmatpush1.msra.mxu0 %v230
    %1292 = vmatprep.subr.mxu0 0.0
    %1293 = vmatpush1.msra.mxu0 0.0
    %1294 = vmatprep.subr.mxu0 0.0
    %1295 = vmatpush1.msra.mxu0 0.0
    %1296 = vmatprep.subr.mxu0 0.0
    %1297 = vmatpush1.msra.mxu0 0.0
    %1298 = vmatprep.subr.mxu0 0.0
    %1299 = vmatpush1.msra.mxu0 0.0
    %1300 = vmatprep.subr.mxu0 0.0
    %1301 = vmatpush1.msra.mxu0 0.0
    %1302 = vmatprep.subr.mxu0 0.0
    %1303 = vmatpush1.msra.mxu0 0.0
    %1304 = vmatprep.subr.mxu0 0.0
    %1305 = vmatpush1.msra.mxu0 0.0
    %1306 = vmatprep.subr.mxu0 0.0
    %1307 = vmatpush1.msra.mxu0 0.0
    %1308 = vmatprep.subr.mxu0 0.0
    %1309 = vmatpush1.msra.mxu0 0.0
    %1310 = vmatprep.subr.mxu0 0.0
    %1311 = vmatpush1.msra.mxu0 0.0
    %1312 = vmatprep.subr.mxu0 0.0
    %1313 = vmatpush1.msra.mxu0 0.0
    %1314 = vmatprep.subr.mxu0 0.0
    %1315 = vmatpush1.msra.mxu0 0.0
    %1316 = vmatprep.subr.mxu0 0.0
    %1317 = vmatpush1.msra.mxu0 0.0
    %1318 = vmatprep.subr.mxu0 0.0
    %1319 = vmatpush1.msra.mxu0 0.0
    %1320 = vmatprep.subr.mxu0 0.0
    %1321 = vmatpush1.msra.mxu0 0.0
    %1322 = vmatprep.subr.mxu0 0.0
    %1323 = vmatpush1.msra.mxu0 0.0
    %1324 = vmatprep.subr.mxu0 0.0
    %1325 = vmatpush1.msra.mxu0 0.0
    %1326 = vmatprep.subr.mxu0 0.0
    %1327 = vmatpush1.msra.mxu0 0.0
    %1328 = vmatprep.subr.mxu0 0.0
    %1329 = vmatpush1.msra.mxu0 0.0
    %1330 = vmatprep.subr.mxu0 0.0
    %1331 = vmatpush1.msra.mxu0 0.0
    %1332 = vmatprep.subr.mxu0 0.0
    %1333 = vmatpush1.msra.mxu0 0.0
    %1334 = vmatprep.subr.mxu0 0.0
    %1335 = vmatpush1.msra.mxu0 0.0
    %1336 = vmatprep.subr.mxu0 0.0
    %1337 = vmatpush1.msra.mxu0 0.0
    %1338 = vmatprep.subr.mxu0 0.0
    %1339 = vmatpush1.msra.mxu0 0.0
    %1340 = vmatprep.subr.mxu0 0.0
    %1341 = vmatpush1.msra.mxu0 0.0
    %1342 = vmatprep.subr.mxu0 0.0
    %1343 = vmatpush1.msra.mxu0 0.0
    %1344 = vmatprep.subr.mxu0 0.0
    %1345 = vmatpush1.msra.mxu0 0.0
    %1346 = vmatprep.subr.mxu0 0.0
    %1347 = vmatpush1.msra.mxu0 0.0
    %1348 = vmatprep.mubr.f32.mxu0 0.0
    %1349 = vmatmul.mubr.f32.gmra.mrb[0].mxu0 %v1282
    %v1350 = vpop.f32.mrb[0].mxu0
    %v1351 = vadd.f32 0.0, %v1350
    %v1352 = vpop.f32.mrb[0].mxu0
    %1353 = vdwg.mxu0
    %v1355 = vrot.slane %v1351, 6
    %v1357 = vadd.f32 %v223, %v1355
    %v1358 = vxor.u32 %v1357, 2147483648
    %v1359 = vmul.f32 %v1358, 1.442695
    %v1360 = vpow.pop %v1359
    %v1361 = vadd.f32 %v1360, 1.0
    %v1362 = vrcp.pop %v1361
    %v1363 = vmul.f32 1.0, %v1362
    %v1364 = vtanh.pop %v1357
    %v1366 = vrot.slane %v1166, 6
    %v1368 = vmul.f32 %v1363, %v1366
    %1370 = vrot.lane.b32.xlu0 %v1364, 64
    %v1371 = vpop.permute.xlu0 %1370
    %v1373 = vmul.f32 %v1363, %v1371
    %1375 = vrot.lane.b32.xlu0 %v1373, 32
    %v1376 = vpop.permute.xlu0 %1375
    %v1378 = vadd.f32 %v1368, %v1376
    %v1379 = vtanh.pop %v1378
    %1381 = vrot.lane.b32.xlu0 %v1379, 64
    %v1382 = vpop.permute.xlu0 %1381
    %v1384 = vmul.f32 %v1363, %v1382
    %v1386 = vrot.slane %v1278, 6
    %1387 = vrot.lane.b32.xlu0 %v1386, 32
    %v1388 = vpop.permute.xlu0 %1387
    %v1389 = vsel %vm143, %v1388, 0
    %1391 = vmatprep.subr.mxu0 0.0
    %1392 = vmatpush1.msra.mxu0 %v231
    %1393 = vmatprep.subr.mxu0 0.0
    %1394 = vmatpush1.msra.mxu0 %v232
    %1395 = vmatprep.subr.mxu0 0.0
    %1396 = vmatpush1.msra.mxu0 %v233
    %1397 = vmatprep.subr.mxu0 0.0
    %1398 = vmatpush1.msra.mxu0 %v234
    %1399 = vmatprep.subr.mxu0 0.0
    %1400 = vmatpush1.msra.mxu0 0.0
    %1401 = vmatprep.subr.mxu0 0.0
    %1402 = vmatpush1.msra.mxu0 0.0
    %1403 = vmatprep.subr.mxu0 0.0
    %1404 = vmatpush1.msra.mxu0 0.0
    %1405 = vmatprep.subr.mxu0 0.0
    %1406 = vmatpush1.msra.mxu0 0.0
    %1407 = vmatprep.subr.mxu0 0.0
    %1408 = vmatpush1.msra.mxu0 0.0
    %1409 = vmatprep.subr.mxu0 0.0
    %1410 = vmatpush1.msra.mxu0 0.0
    %1411 = vmatprep.subr.mxu0 0.0
    %1412 = vmatpush1.msra.mxu0 0.0
    %1413 = vmatprep.subr.mxu0 0.0
    %1414 = vmatpush1.msra.mxu0 0.0
    %1415 = vmatprep.subr.mxu0 0.0
    %1416 = vmatpush1.msra.mxu0 0.0
    %1417 = vmatprep.subr.mxu0 0.0
    %1418 = vmatpush1.msra.mxu0 0.0
    %1419 = vmatprep.subr.mxu0 0.0
    %1420 = vmatpush1.msra.mxu0 0.0
    %1421 = vmatprep.subr.mxu0 0.0
    %1422 = vmatpush1.msra.mxu0 0.0
    %1423 = vmatprep.subr.mxu0 0.0
    %1424 = vmatpush1.msra.mxu0 0.0
    %1425 = vmatprep.subr.mxu0 0.0
    %1426 = vmatpush1.msra.mxu0 0.0
    %1427 = vmatprep.subr.mxu0 0.0
    %1428 = vmatpush1.msra.mxu0 0.0
    %1429 = vmatprep.subr.mxu0 0.0
    %1430 = vmatpush1.msra.mxu0 0.0
    %1431 = vmatprep.subr.mxu0 0.0
    %1432 = vmatpush1.msra.mxu0 0.0
    %1433 = vmatprep.subr.mxu0 0.0
    %1434 = vmatpush1.msra.mxu0 0.0
    %1435 = vmatprep.subr.mxu0 0.0
    %1436 = vmatpush1.msra.mxu0 0.0
    %1437 = vmatprep.subr.mxu0 0.0
    %1438 = vmatpush1.msra.mxu0 0.0
    %1439 = vmatprep.subr.mxu0 0.0
    %1440 = vmatpush1.msra.mxu0 0.0
    %1441 = vmatprep.subr.mxu0 0.0
    %1442 = vmatpush1.msra.mxu0 0.0
    %1443 = vmatprep.subr.mxu0 0.0
    %1444 = vmatpush1.msra.mxu0 0.0
    %1445 = vmatprep.subr.mxu0 0.0
    %1446 = vmatpush1.msra.mxu0 0.0
    %1447 = vmatprep.subr.mxu0 0.0
    %1448 = vmatpush1.msra.mxu0 0.0
    %1449 = vmatprep.subr.mxu0 0.0
    %1450 = vmatpush1.msra.mxu0 0.0
    %1451 = vmatprep.subr.mxu0 0.0
    %1452 = vmatpush1.msra.mxu0 0.0
    %1453 = vmatprep.subr.mxu0 0.0
    %1454 = vmatpush1.msra.mxu0 0.0
    %1455 = vmatprep.mubr.f32.mxu0 0.0
    %1456 = vmatmul.mubr.f32.gmra.mrb[0].mxu0 %v1389
    %v1457 = vpop.f32.mrb[0].mxu0
    %v1458 = vadd.f32 0.0, %v1457
    %v1459 = vpop.f32.mrb[0].mxu0
    %1460 = vdwg.mxu0
    %v1462 = vrot.slane %v1458, 4
    %v1464 = vadd.f32 %v219, %v1462
    %v1465 = vxor.u32 %v1464, 2147483648
    %v1466 = vmul.f32 %v1465, 1.442695
    %v1467 = vpow.pop %v1466
    %v1468 = vadd.f32 %v1467, 1.0
    %v1469 = vrcp.pop %v1468
    %v1470 = vmul.f32 1.0, %v1469
    %v1471 = vtanh.pop %v1464
    %v1473 = vrot.slane %v1272, 2
    %v1475 = vmul.f32 %v1470, %v1473
    %1477 = vrot.lane.b32.xlu0 %v1471, 64
    %v1478 = vpop.permute.xlu0 %1477
    %v1480 = vmul.f32 %v1470, %v1478
    %1482 = vrot.lane.b32.xlu0 %v1480, 32
    %v1483 = vpop.permute.xlu0 %1482
    %v1485 = vadd.f32 %v1475, %v1483
    %v1486 = vtanh.pop %v1485
    %1488 = vrot.lane.b32.xlu0 %v1486, 64
    %v1489 = vpop.permute.xlu0 %1488
    %v1491 = vmul.f32 %v1470, %v1489
    %v1493 = vrot.slane %v1384, 2
    %1494 = vrot.lane.b32.xlu0 %v1493, 32
    %v1495 = vpop.permute.xlu0 %1494
    %v1496 = vsel %vm143, %v1495, 0
    %1498 = vmatprep.subr.mxu0 0.0
    %1499 = vmatpush1.msra.mxu0 %v227
    %1500 = vmatprep.subr.mxu0 0.0
    %1501 = vmatpush1.msra.mxu0 %v228
    %1502 = vmatprep.subr.mxu0 0.0
    %1503 = vmatpush1.msra.mxu0 %v229
    %1504 = vmatprep.subr.mxu0 0.0
    %1505 = vmatpush1.msra.mxu0 %v230
    %1506 = vmatprep.subr.mxu0 0.0
    %1507 = vmatpush1.msra.mxu0 0.0
    %1508 = vmatprep.subr.mxu0 0.0
    %1509 = vmatpush1.msra.mxu0 0.0
    %1510 = vmatprep.subr.mxu0 0.0
    %1511 = vmatpush1.msra.mxu0 0.0
    %1512 = vmatprep.subr.mxu0 0.0
    %1513 = vmatpush1.msra.mxu0 0.0
    %1514 = vmatprep.subr.mxu0 0.0
    %1515 = vmatpush1.msra.mxu0 0.0
    %1516 = vmatprep.subr.mxu0 0.0
    %1517 = vmatpush1.msra.mxu0 0.0
    %1518 = vmatprep.subr.mxu0 0.0
    %1519 = vmatpush1.msra.mxu0 0.0
    %1520 = vmatprep.subr.mxu0 0.0
    %1521 = vmatpush1.msra.mxu0 0.0
    %1522 = vmatprep.subr.mxu0 0.0
    %1523 = vmatpush1.msra.mxu0 0.0
    %1524 = vmatprep.subr.mxu0 0.0
    %1525 = vmatpush1.msra.mxu0 0.0
    %1526 = vmatprep.subr.mxu0 0.0
    %1527 = vmatpush1.msra.mxu0 0.0
    %1528 = vmatprep.subr.mxu0 0.0
    %1529 = vmatpush1.msra.mxu0 0.0
    %1530 = vmatprep.subr.mxu0 0.0
    %1531 = vmatpush1.msra.mxu0 0.0
    %1532 = vmatprep.subr.mxu0 0.0
    %1533 = vmatpush1.msra.mxu0 0.0
    %1534 = vmatprep.subr.mxu0 0.0
    %1535 = vmatpush1.msra.mxu0 0.0
    %1536 = vmatprep.subr.mxu0 0.0
    %1537 = vmatpush1.msra.mxu0 0.0
    %1538 = vmatprep.subr.mxu0 0.0
    %1539 = vmatpush1.msra.mxu0 0.0
    %1540 = vmatprep.subr.mxu0 0.0
    %1541 = vmatpush1.msra.mxu0 0.0
    %1542 = vmatprep.subr.mxu0 0.0
    %1543 = vmatpush1.msra.mxu0 0.0
    %1544 = vmatprep.subr.mxu0 0.0
    %1545 = vmatpush1.msra.mxu0 0.0
    %1546 = vmatprep.subr.mxu0 0.0
    %1547 = vmatpush1.msra.mxu0 0.0
    %1548 = vmatprep.subr.mxu0 0.0
    %1549 = vmatpush1.msra.mxu0 0.0
    %1550 = vmatprep.subr.mxu0 0.0
    %1551 = vmatpush1.msra.mxu0 0.0
    %1552 = vmatprep.subr.mxu0 0.0
    %1553 = vmatpush1.msra.mxu0 0.0
    %1554 = vmatprep.subr.mxu0 0.0
    %1555 = vmatpush1.msra.mxu0 0.0
    %1556 = vmatprep.subr.mxu0 0.0
    %1557 = vmatpush1.msra.mxu0 0.0
    %1558 = vmatprep.subr.mxu0 0.0
    %1559 = vmatpush1.msra.mxu0 0.0
    %1560 = vmatprep.subr.mxu0 0.0
    %1561 = vmatpush1.msra.mxu0 0.0
    %1562 = vmatprep.mubr.f32.mxu0 0.0
    %1563 = vmatmul.mubr.f32.gmra.mrb[0].mxu0 %v1496
    %v1564 = vpop.f32.mrb[0].mxu0
    %v1565 = vadd.f32 0.0, %v1564
    %v1566 = vpop.f32.mrb[0].mxu0
    %1567 = vdwg.mxu0
    %v1569 = vrot.slane %v1565, 4
    %v1571 = vadd.f32 %v223, %v1569
    %v1572 = vxor.u32 %v1571, 2147483648
    %v1573 = vmul.f32 %v1572, 1.442695
    %v1574 = vpow.pop %v1573
    %v1575 = vadd.f32 %v1574, 1.0
    %v1576 = vrcp.pop %v1575
    %v1577 = vmul.f32 1.0, %v1576
    %v1578 = vtanh.pop %v1571
    %v1580 = vrot.slane %v1378, 6
    %v1582 = vmul.f32 %v1577, %v1580
    %1584 = vrot.lane.b32.xlu0 %v1578, 64
    %v1585 = vpop.permute.xlu0 %1584
    %v1587 = vmul.f32 %v1577, %v1585
    %1589 = vrot.lane.b32.xlu0 %v1587, 32
    %v1590 = vpop.permute.xlu0 %1589
    %v1592 = vadd.f32 %v1582, %v1590
    %v1593 = vtanh.pop %v1592
    %1595 = vrot.lane.b32.xlu0 %v1593, 64
    %v1596 = vpop.permute.xlu0 %1595
    %v1598 = vmul.f32 %v1577, %v1596
    %v1600 = vrot.slane %v1491, 4
    %1601 = vrot.lane.b32.xlu0 %v1600, 32
    %v1602 = vpop.permute.xlu0 %1601
    %v1603 = vsel %vm143, %v1602, 0
    %1605 = vmatprep.subr.mxu0 0.0
    %1606 = vmatpush1.msra.mxu0 %v231
    %1607 = vmatprep.subr.mxu0 0.0
    %1608 = vmatpush1.msra.mxu0 %v232
    %1609 = vmatprep.subr.mxu0 0.0
    %1610 = vmatpush1.msra.mxu0 %v233
    %1611 = vmatprep.subr.mxu0 0.0
    %1612 = vmatpush1.msra.mxu0 %v234
    %1613 = vmatprep.subr.mxu0 0.0
    %1614 = vmatpush1.msra.mxu0 0.0
    %1615 = vmatprep.subr.mxu0 0.0
    %1616 = vmatpush1.msra.mxu0 0.0
    %1617 = vmatprep.subr.mxu0 0.0
    %1618 = vmatpush1.msra.mxu0 0.0
    %1619 = vmatprep.subr.mxu0 0.0
    %1620 = vmatpush1.msra.mxu0 0.0
    %1621 = vmatprep.subr.mxu0 0.0
    %1622 = vmatpush1.msra.mxu0 0.0
    %1623 = vmatprep.subr.mxu0 0.0
    %1624 = vmatpush1.msra.mxu0 0.0
    %1625 = vmatprep.subr.mxu0 0.0
    %1626 = vmatpush1.msra.mxu0 0.0
    %1627 = vmatprep.subr.mxu0 0.0
    %1628 = vmatpush1.msra.mxu0 0.0
    %1629 = vmatprep.subr.mxu0 0.0
    %1630 = vmatpush1.msra.mxu0 0.0
    %1631 = vmatprep.subr.mxu0 0.0
    %1632 = vmatpush1.msra.mxu0 0.0
    %1633 = vmatprep.subr.mxu0 0.0
    %1634 = vmatpush1.msra.mxu0 0.0
    %1635 = vmatprep.subr.mxu0 0.0
    %1636 = vmatpush1.msra.mxu0 0.0
    %1637 = vmatprep.subr.mxu0 0.0
    %1638 = vmatpush1.msra.mxu0 0.0
    %1639 = vmatprep.subr.mxu0 0.0
    %1640 = vmatpush1.msra.mxu0 0.0
    %1641 = vmatprep.subr.mxu0 0.0
    %1642 = vmatpush1.msra.mxu0 0.0
    %1643 = vmatprep.subr.mxu0 0.0
    %1644 = vmatpush1.msra.mxu0 0.0
    %1645 = vmatprep.subr.mxu0 0.0
    %1646 = vmatpush1.msra.mxu0 0.0
    %1647 = vmatprep.subr.mxu0 0.0
    %1648 = vmatpush1.msra.mxu0 0.0
    %1649 = vmatprep.subr.mxu0 0.0
    %1650 = vmatpush1.msra.mxu0 0.0
    %1651 = vmatprep.subr.mxu0 0.0
    %1652 = vmatpush1.msra.mxu0 0.0
    %1653 = vmatprep.subr.mxu0 0.0
    %1654 = vmatpush1.msra.mxu0 0.0
    %1655 = vmatprep.subr.mxu0 0.0
    %1656 = vmatpush1.msra.mxu0 0.0
    %1657 = vmatprep.subr.mxu0 0.0
    %1658 = vmatpush1.msra.mxu0 0.0
    %1659 = vmatprep.subr.mxu0 0.0
    %1660 = vmatpush1.msra.mxu0 0.0
    %1661 = vmatprep.subr.mxu0 0.0
    %1662 = vmatpush1.msra.mxu0 0.0
    %1663 = vmatprep.subr.mxu0 0.0
    %1664 = vmatpush1.msra.mxu0 0.0
    %1665 = vmatprep.subr.mxu0 0.0
    %1666 = vmatpush1.msra.mxu0 0.0
    %1667 = vmatprep.subr.mxu0 0.0
    %1668 = vmatpush1.msra.mxu0 0.0
    %1669 = vmatprep.mubr.f32.mxu0 0.0
    %1670 = vmatmul.mubr.f32.gmra.mrb[0].mxu0 %v1603
    %v1671 = vpop.f32.mrb[0].mxu0
    %v1672 = vadd.f32 0.0, %v1671
    %v1673 = vpop.f32.mrb[0].mxu0
    %1674 = vdwg.mxu0
    %v1676 = vrot.slane %v1672, 6
    %v1678 = vadd.f32 %v219, %v1676
    %v1679 = vxor.u32 %v1678, 2147483648
    %v1680 = vmul.f32 %v1679, 1.442695
    %v1681 = vpow.pop %v1680
    %v1682 = vadd.f32 %v1681, 1.0
    %v1683 = vrcp.pop %v1682
    %v1684 = vmul.f32 1.0, %v1683
    %v1685 = vtanh.pop %v1678
    %v1687 = vrot.slane %v1485, 2
    %v1689 = vmul.f32 %v1684, %v1687
    %1691 = vrot.lane.b32.xlu0 %v1685, 64
    %v1692 = vpop.permute.xlu0 %1691
    %v1694 = vmul.f32 %v1684, %v1692
    %1696 = vrot.lane.b32.xlu0 %v1694, 32
    %v1697 = vpop.permute.xlu0 %1696
    %v1699 = vadd.f32 %v1689, %v1697
    %v1700 = vtanh.pop %v1699
    %1702 = vrot.lane.b32.xlu0 %v1700, 64
    %v1703 = vpop.permute.xlu0 %1702
    %v1705 = vmul.f32 %v1684, %v1703
    %v1707 = vrot.slane %v1598, 4
    %1708 = vrot.lane.b32.xlu0 %v1707, 32
    %v1709 = vpop.permute.xlu0 %1708
    %v1710 = vsel %vm143, %v1709, 0
    %1712 = vmatprep.subr.mxu0 0.0
    %1713 = vmatpush1.msra.mxu0 %v227
    %1714 = vmatprep.subr.mxu0 0.0
    %1715 = vmatpush1.msra.mxu0 %v228
    %1716 = vmatprep.subr.mxu0 0.0
    %1717 = vmatpush1.msra.mxu0 %v229
    %1718 = vmatprep.subr.mxu0 0.0
    %1719 = vmatpush1.msra.mxu0 %v230
    %1720 = vmatprep.subr.mxu0 0.0
    %1721 = vmatpush1.msra.mxu0 0.0
    %1722 = vmatprep.subr.mxu0 0.0
    %1723 = vmatpush1.msra.mxu0 0.0
    %1724 = vmatprep.subr.mxu0 0.0
    %1725 = vmatpush1.msra.mxu0 0.0
    %1726 = vmatprep.subr.mxu0 0.0
    %1727 = vmatpush1.msra.mxu0 0.0
    %1728 = vmatprep.subr.mxu0 0.0
    %1729 = vmatpush1.msra.mxu0 0.0
    %1730 = vmatprep.subr.mxu0 0.0
    %1731 = vmatpush1.msra.mxu0 0.0
    %1732 = vmatprep.subr.mxu0 0.0
    %1733 = vmatpush1.msra.mxu0 0.0
    %1734 = vmatprep.subr.mxu0 0.0
    %1735 = vmatpush1.msra.mxu0 0.0
    %1736 = vmatprep.subr.mxu0 0.0
    %1737 = vmatpush1.msra.mxu0 0.0
    %1738 = vmatprep.subr.mxu0 0.0
    %1739 = vmatpush1.msra.mxu0 0.0
    %1740 = vmatprep.subr.mxu0 0.0
    %1741 = vmatpush1.msra.mxu0 0.0
    %1742 = vmatprep.subr.mxu0 0.0
    %1743 = vmatpush1.msra.mxu0 0.0
    %1744 = vmatprep.subr.mxu0 0.0
    %1745 = vmatpush1.msra.mxu0 0.0
    %1746 = vmatprep.subr.mxu0 0.0
    %1747 = vmatpush1.msra.mxu0 0.0
    %1748 = vmatprep.subr.mxu0 0.0
    %1749 = vmatpush1.msra.mxu0 0.0
    %1750 = vmatprep.subr.mxu0 0.0
    %1751 = vmatpush1.msra.mxu0 0.0
    %1752 = vmatprep.subr.mxu0 0.0
    %1753 = vmatpush1.msra.mxu0 0.0
    %1754 = vmatprep.subr.mxu0 0.0
    %1755 = vmatpush1.msra.mxu0 0.0
    %1756 = vmatprep.subr.mxu0 0.0
    %1757 = vmatpush1.msra.mxu0 0.0
    %1758 = vmatprep.subr.mxu0 0.0
    %1759 = vmatpush1.msra.mxu0 0.0
    %1760 = vmatprep.subr.mxu0 0.0
    %1761 = vmatpush1.msra.mxu0 0.0
    %1762 = vmatprep.subr.mxu0 0.0
    %1763 = vmatpush1.msra.mxu0 0.0
    %1764 = vmatprep.subr.mxu0 0.0
    %1765 = vmatpush1.msra.mxu0 0.0
    %1766 = vmatprep.subr.mxu0 0.0
    %1767 = vmatpush1.msra.mxu0 0.0
    %1768 = vmatprep.subr.mxu0 0.0
    %1769 = vmatpush1.msra.mxu0 0.0
    %1770 = vmatprep.subr.mxu0 0.0
    %1771 = vmatpush1.msra.mxu0 0.0
    %1772 = vmatprep.subr.mxu0 0.0
    %1773 = vmatpush1.msra.mxu0 0.0
    %1774 = vmatprep.subr.mxu0 0.0
    %1775 = vmatpush1.msra.mxu0 0.0
    %1776 = vmatprep.mubr.f32.mxu0 0.0
    %1777 = vmatmul.mubr.f32.gmra.mrb[0].mxu0 %v1710
    %v1778 = vpop.f32.mrb[0].mxu0
    %v1779 = vadd.f32 0.0, %v1778
    %v1780 = vpop.f32.mrb[0].mxu0
    %1781 = vdwg.mxu0
    %v1783 = vrot.slane %v1779, 2
    %v1785 = vadd.f32 %v223, %v1783
    %v1786 = vxor.u32 %v1785, 2147483648
    %v1787 = vmul.f32 %v1786, 1.442695
    %v1788 = vpow.pop %v1787
    %v1789 = vadd.f32 %v1788, 1.0
    %v1790 = vrcp.pop %v1789
    %v1791 = vmul.f32 1.0, %v1790
    %v1792 = vtanh.pop %v1785
    %v1794 = vrot.slane %v1592, 6
    %v1796 = vmul.f32 %v1791, %v1794
    %1798 = vrot.lane.b32.xlu0 %v1792, 64
    %v1799 = vpop.permute.xlu0 %1798
    %v1801 = vmul.f32 %v1791, %v1799
    %1803 = vrot.lane.b32.xlu0 %v1801, 32
    %v1804 = vpop.permute.xlu0 %1803
    %v1806 = vadd.f32 %v1796, %v1804
    %v1807 = vtanh.pop %v1806
    %1809 = vrot.lane.b32.xlu0 %v1807, 64
    %v1810 = vpop.permute.xlu0 %1809
    %v1812 = vmul.f32 %v1791, %v1810
    %v1814 = vrot.slane %v1705, 2
    %1815 = vrot.lane.b32.xlu0 %v1814, 32
    %v1816 = vpop.permute.xlu0 %1815
    %v1817 = vsel %vm143, %v1816, 0
    %1819 = vmatprep.subr.mxu0 0.0
    %1820 = vmatpush1.msra.mxu0 %v231
    %1821 = vmatprep.subr.mxu0 0.0
    %1822 = vmatpush1.msra.mxu0 %v232
    %1823 = vmatprep.subr.mxu0 0.0
    %1824 = vmatpush1.msra.mxu0 %v233
    %1825 = vmatprep.subr.mxu0 0.0
    %1826 = vmatpush1.msra.mxu0 %v234
    %1827 = vmatprep.subr.mxu0 0.0
    %1828 = vmatpush1.msra.mxu0 0.0
    %1829 = vmatprep.subr.mxu0 0.0
    %1830 = vmatpush1.msra.mxu0 0.0
    %1831 = vmatprep.subr.mxu0 0.0
    %1832 = vmatpush1.msra.mxu0 0.0
    %1833 = vmatprep.subr.mxu0 0.0
    %1834 = vmatpush1.msra.mxu0 0.0
    %1835 = vmatprep.subr.mxu0 0.0
    %1836 = vmatpush1.msra.mxu0 0.0
    %1837 = vmatprep.subr.mxu0 0.0
    %1838 = vmatpush1.msra.mxu0 0.0
    %1839 = vmatprep.subr.mxu0 0.0
    %1840 = vmatpush1.msra.mxu0 0.0
    %1841 = vmatprep.subr.mxu0 0.0
    %1842 = vmatpush1.msra.mxu0 0.0
    %1843 = vmatprep.subr.mxu0 0.0
    %1844 = vmatpush1.msra.mxu0 0.0
    %1845 = vmatprep.subr.mxu0 0.0
    %1846 = vmatpush1.msra.mxu0 0.0
    %1847 = vmatprep.subr.mxu0 0.0
    %1848 = vmatpush1.msra.mxu0 0.0
    %1849 = vmatprep.subr.mxu0 0.0
    %1850 = vmatpush1.msra.mxu0 0.0
    %1851 = vmatprep.subr.mxu0 0.0
    %1852 = vmatpush1.msra.mxu0 0.0
    %1853 = vmatprep.subr.mxu0 0.0
    %1854 = vmatpush1.msra.mxu0 0.0
    %1855 = vmatprep.subr.mxu0 0.0
    %1856 = vmatpush1.msra.mxu0 0.0
    %1857 = vmatprep.subr.mxu0 0.0
    %1858 = vmatpush1.msra.mxu0 0.0
    %1859 = vmatprep.subr.mxu0 0.0
    %1860 = vmatpush1.msra.mxu0 0.0
    %1861 = vmatprep.subr.mxu0 0.0
    %1862 = vmatpush1.msra.mxu0 0.0
    %1863 = vmatprep.subr.mxu0 0.0
    %1864 = vmatpush1.msra.mxu0 0.0
    %1865 = vmatprep.subr.mxu0 0.0
    %1866 = vmatpush1.msra.mxu0 0.0
    %1867 = vmatprep.subr.mxu0 0.0
    %1868 = vmatpush1.msra.mxu0 0.0
    %1869 = vmatprep.subr.mxu0 0.0
    %1870 = vmatpush1.msra.mxu0 0.0
    %1871 = vmatprep.subr.mxu0 0.0
    %1872 = vmatpush1.msra.mxu0 0.0
    %1873 = vmatprep.subr.mxu0 0.0
    %1874 = vmatpush1.msra.mxu0 0.0
    %1875 = vmatprep.subr.mxu0 0.0
    %1876 = vmatpush1.msra.mxu0 0.0
    %1877 = vmatprep.subr.mxu0 0.0
    %1878 = vmatpush1.msra.mxu0 0.0
    %1879 = vmatprep.subr.mxu0 0.0
    %1880 = vmatpush1.msra.mxu0 0.0
    %1881 = vmatprep.subr.mxu0 0.0
    %1882 = vmatpush1.msra.mxu0 0.0
    %1883 = vmatprep.mubr.f32.mxu0 0.0
    %1884 = vmatmul.mubr.f32.gmra.mrb[0].mxu0 %v1817
    %v1885 = vpop.f32.mrb[0].mxu0
    %v1886 = vadd.f32 0.0, %v1885
    %v1887 = vpop.f32.mrb[0].mxu0
    %1888 = vdwg.mxu0
    %v1889 = vadd.f32 %v219, %v1886
    %v1890 = vxor.u32 %v1889, 2147483648
    %v1891 = vmul.f32 %v1890, 1.442695
    %v1892 = vpow.pop %v1891
    %v1893 = vadd.f32 %v1892, 1.0
    %v1894 = vrcp.pop %v1893
    %v1895 = vmul.f32 1.0, %v1894
    %v1896 = vtanh.pop %v1889
    %v1898 = vrot.slane %v1699, 2
    %v1900 = vmul.f32 %v1895, %v1898
    %1902 = vrot.lane.b32.xlu0 %v1896, 64
    %v1903 = vpop.permute.xlu0 %1902
    %v1905 = vmul.f32 %v1895, %v1903
    %1907 = vrot.lane.b32.xlu0 %v1905, 32
    %v1908 = vpop.permute.xlu0 %1907
    %v1910 = vadd.f32 %v1900, %v1908
    %v1911 = vtanh.pop %v1910
    %1913 = vrot.lane.b32.xlu0 %v1911, 64
    %v1914 = vpop.permute.xlu0 %1913
    %v1916 = vmul.f32 %v1895, %v1914
    %v1917 = vld [vmem:[#allocation7 + $0x38] sm:$0xff]
    %v1918 = vld [vmem:[#allocation7 + $0x80] sm:$0xff]
    %v1919 = vld [vmem:[#allocation7 + $0xc8] sm:$0xff]
    %v1920 = vld [vmem:[#allocation7 + $0x110] sm:$0xff]
    %v1921 = vld [vmem:[%s5 + $0x3] sm:$0x1]
    %v1923 = vlaneseq
    %v1924 = vshrl.u32 %v1923, 7
    %v1925 = vsub.s32 0, %v1924
    %v1926 = vrot.slane %v1921, %v1925
    %v1929 = vsel %vm143, %v55, 0
    %1931 = vmatprep.subr.mxu0 0.0
    %1932 = vmatpush1.msra.mxu0 %v1917
    %1933 = vmatprep.subr.mxu0 0.0
    %1934 = vmatpush1.msra.mxu0 %v1918
    %1935 = vmatprep.subr.mxu0 0.0
    %1936 = vmatpush1.msra.mxu0 %v1919
    %1937 = vmatprep.subr.mxu0 0.0
    %1938 = vmatpush1.msra.mxu0 %v1920
    %1939 = vmatprep.subr.mxu0 0.0
    %1940 = vmatpush1.msra.mxu0 0.0
    %1941 = vmatprep.subr.mxu0 0.0
    %1942 = vmatpush1.msra.mxu0 0.0
    %1943 = vmatprep.subr.mxu0 0.0
    %1944 = vmatpush1.msra.mxu0 0.0
    %1945 = vmatprep.subr.mxu0 0.0
    %1946 = vmatpush1.msra.mxu0 0.0
    %1947 = vmatprep.subr.mxu0 0.0
    %1948 = vmatpush1.msra.mxu0 0.0
    %1949 = vmatprep.subr.mxu0 0.0
    %1950 = vmatpush1.msra.mxu0 0.0
    %1951 = vmatprep.subr.mxu0 0.0
    %1952 = vmatpush1.msra.mxu0 0.0
    %1953 = vmatprep.subr.mxu0 0.0
    %1954 = vmatpush1.msra.mxu0 0.0
    %1955 = vmatprep.subr.mxu0 0.0
    %1956 = vmatpush1.msra.mxu0 0.0
    %1957 = vmatprep.subr.mxu0 0.0
    %1958 = vmatpush1.msra.mxu0 0.0
    %1959 = vmatprep.subr.mxu0 0.0
    %1960 = vmatpush1.msra.mxu0 0.0
    %1961 = vmatprep.subr.mxu0 0.0
    %1962 = vmatpush1.msra.mxu0 0.0
    %1963 = vmatprep.subr.mxu0 0.0
    %1964 = vmatpush1.msra.mxu0 0.0
    %1965 = vmatprep.subr.mxu0 0.0
    %1966 = vmatpush1.msra.mxu0 0.0
    %1967 = vmatprep.subr.mxu0 0.0
    %1968 = vmatpush1.msra.mxu0 0.0
    %1969 = vmatprep.subr.mxu0 0.0
    %1970 = vmatpush1.msra.mxu0 0.0
    %1971 = vmatprep.subr.mxu0 0.0
    %1972 = vmatpush1.msra.mxu0 0.0
    %1973 = vmatprep.subr.mxu0 0.0
    %1974 = vmatpush1.msra.mxu0 0.0
    %1975 = vmatprep.subr.mxu0 0.0
    %1976 = vmatpush1.msra.mxu0 0.0
    %1977 = vmatprep.subr.mxu0 0.0
    %1978 = vmatpush1.msra.mxu0 0.0
    %1979 = vmatprep.subr.mxu0 0.0
    %1980 = vmatpush1.msra.mxu0 0.0
    %1981 = vmatprep.subr.mxu0 0.0
    %1982 = vmatpush1.msra.mxu0 0.0
    %1983 = vmatprep.subr.mxu0 0.0
    %1984 = vmatpush1.msra.mxu0 0.0
    %1985 = vmatprep.subr.mxu0 0.0
    %1986 = vmatpush1.msra.mxu0 0.0
    %1987 = vmatprep.subr.mxu0 0.0
    %1988 = vmatpush1.msra.mxu0 0.0
    %1989 = vmatprep.subr.mxu0 0.0
    %1990 = vmatpush1.msra.mxu0 0.0
    %1991 = vmatprep.subr.mxu0 0.0
    %1992 = vmatpush1.msra.mxu0 0.0
    %1993 = vmatprep.subr.mxu0 0.0
    %1994 = vmatpush1.msra.mxu0 0.0
    %1995 = vmatprep.mubr.f32.mxu0 0.0
    %1996 = vmatmul.mubr.f32.gmra.mrb[0].mxu0 %v1929
    %v1997 = vpop.f32.mrb[0].mxu0
    %v1998 = vadd.f32 %v1926, %v1997
    %v1999 = vpop.f32.mrb[0].mxu0
    %2000 = vdwg.mxu0
    %2005 = vrot.lane.b32.xlu0 %v1917, 96
    %v2006 = vpop.permute.xlu0 %2005
    %2007 = vrot.lane.b32.xlu0 %v1918, 96
    %v2008 = vpop.permute.xlu0 %2007
    %2009 = vrot.lane.b32.xlu0 %v1919, 96
    %v2010 = vpop.permute.xlu0 %2009
    %2011 = vrot.lane.b32.xlu0 %v1920, 96
    %v2012 = vpop.permute.xlu0 %2011
    %v2018 = vsel %vm143, %v1998, 0
    %2020 = vmatprep.subr.mxu0 0.0
    %2021 = vmatpush1.msra.mxu0 %v2006
    %2022 = vmatprep.subr.mxu0 0.0
    %2023 = vmatpush1.msra.mxu0 %v2008
    %2024 = vmatprep.subr.mxu0 0.0
    %2025 = vmatpush1.msra.mxu0 %v2010
    %2026 = vmatprep.subr.mxu0 0.0
    %2027 = vmatpush1.msra.mxu0 %v2012
    %2028 = vmatprep.subr.mxu0 0.0
    %2029 = vmatpush1.msra.mxu0 0.0
    %2030 = vmatprep.subr.mxu0 0.0
    %2031 = vmatpush1.msra.mxu0 0.0
    %2032 = vmatprep.subr.mxu0 0.0
    %2033 = vmatpush1.msra.mxu0 0.0
    %2034 = vmatprep.subr.mxu0 0.0
    %2035 = vmatpush1.msra.mxu0 0.0
    %2036 = vmatprep.subr.mxu0 0.0
    %2037 = vmatpush1.msra.mxu0 0.0
    %2038 = vmatprep.subr.mxu0 0.0
    %2039 = vmatpush1.msra.mxu0 0.0
    %2040 = vmatprep.subr.mxu0 0.0
    %2041 = vmatpush1.msra.mxu0 0.0
    %2042 = vmatprep.subr.mxu0 0.0
    %2043 = vmatpush1.msra.mxu0 0.0
    %2044 = vmatprep.subr.mxu0 0.0
    %2045 = vmatpush1.msra.mxu0 0.0
    %2046 = vmatprep.subr.mxu0 0.0
    %2047 = vmatpush1.msra.mxu0 0.0
    %2048 = vmatprep.subr.mxu0 0.0
    %2049 = vmatpush1.msra.mxu0 0.0
    %2050 = vmatprep.subr.mxu0 0.0
    %2051 = vmatpush1.msra.mxu0 0.0
    %2052 = vmatprep.subr.mxu0 0.0
    %2053 = vmatpush1.msra.mxu0 0.0
    %2054 = vmatprep.subr.mxu0 0.0
    %2055 = vmatpush1.msra.mxu0 0.0
    %2056 = vmatprep.subr.mxu0 0.0
    %2057 = vmatpush1.msra.mxu0 0.0
    %2058 = vmatprep.subr.mxu0 0.0
    %2059 = vmatpush1.msra.mxu0 0.0
    %2060 = vmatprep.subr.mxu0 0.0
    %2061 = vmatpush1.msra.mxu0 0.0
    %2062 = vmatprep.subr.mxu0 0.0
    %2063 = vmatpush1.msra.mxu0 0.0
    %2064 = vmatprep.subr.mxu0 0.0
    %2065 = vmatpush1.msra.mxu0 0.0
    %2066 = vmatprep.subr.mxu0 0.0
    %2067 = vmatpush1.msra.mxu0 0.0
    %2068 = vmatprep.subr.mxu0 0.0
    %2069 = vmatpush1.msra.mxu0 0.0
    %2070 = vmatprep.subr.mxu0 0.0
    %2071 = vmatpush1.msra.mxu0 0.0
    %2072 = vmatprep.subr.mxu0 0.0
    %2073 = vmatpush1.msra.mxu0 0.0
    %2074 = vmatprep.subr.mxu0 0.0
    %2075 = vmatpush1.msra.mxu0 0.0
    %2076 = vmatprep.subr.mxu0 0.0
    %2077 = vmatpush1.msra.mxu0 0.0
    %2078 = vmatprep.subr.mxu0 0.0
    %2079 = vmatpush1.msra.mxu0 0.0
    %2080 = vmatprep.subr.mxu0 0.0
    %2081 = vmatpush1.msra.mxu0 0.0
    %2082 = vmatprep.subr.mxu0 0.0
    %2083 = vmatpush1.msra.mxu0 0.0
    %2084 = vmatprep.mubr.f32.mxu0 0.0
    %2085 = vmatmul.mubr.f32.gmra.mrb[0].mxu0 %v2018
    %v2086 = vpop.f32.mrb[0].mxu0
    %v2087 = vadd.f32 0.0, %v2086
    %v2088 = vpop.f32.mrb[0].mxu0
    %2089 = vdwg.mxu0
    %2091 = vrot.lane.b32.xlu0 %v2087, 96
    %v2092 = vpop.permute.xlu0 %2091
    %v2094 = vmul.f32 %v332, %v2092
    %2096 = vrot.lane.b32.xlu0 %v2094, 32
    %v2097 = vpop.permute.xlu0 %2096
    %vm2099 = vcmask 254976
    %v2100 = vsel %vm2099, %v2097, 0.0
    %2101 = vadd.xlane.f32.xlu0 %v2100
    %v2102 = vpop.xlane.xlu0 %2101
    %2103 = vrot.lane.b32.xlu0 %v2087, 64
    %v2104 = vpop.permute.xlu0 %2103
    %v2106 = vmul.f32 %v1916, %v2104
    %2108 = vrot.lane.b32.xlu0 %v2106, 32
    %v2109 = vpop.permute.xlu0 %2108
    %v2111 = vsel %vm2099, %v2109, 0.0
    %2112 = vadd.xlane.f32.xlu0 %v2111
    %v2113 = vpop.xlane.xlu0 %2112
    %v2114 = vadd.f32 %v2102, %v2113
    %v2115 = vmul.f32 %v2114, 0.17677669
    %v2116 = vrot.slane %v2087, 6
    %2117 = vrot.lane.b32.xlu0 %v2116, 96
    %v2118 = vpop.permute.xlu0 %2117
    %v2120 = vmul.f32 %v536, %v2118
    %2122 = vrot.lane.b32.xlu0 %v2120, 32
    %v2123 = vpop.permute.xlu0 %2122
    %vm2125 = vcmask 257026
    %v2126 = vsel %vm2125, %v2123, 0.0
    %2127 = vadd.xlane.f32.xlu0 %v2126
    %v2128 = vpop.xlane.xlu0 %2127
    %2129 = vrot.lane.b32.xlu0 %v2116, 64
    %v2130 = vpop.permute.xlu0 %2129
    %v2132 = vmul.f32 %v1705, %v2130
    %2134 = vrot.lane.b32.xlu0 %v2132, 32
    %v2135 = vpop.permute.xlu0 %2134
    %v2137 = vsel %vm2125, %v2135, 0.0
    %2138 = vadd.xlane.f32.xlu0 %v2137
    %v2139 = vpop.xlane.xlu0 %2138
    %v2140 = vadd.f32 %v2128, %v2139
    %v2141 = vmul.f32 %v2140, 0.17677669
    %v2142 = vrot.slane %v2087, 4
    %2143 = vrot.lane.b32.xlu0 %v2142, 96
    %v2144 = vpop.permute.xlu0 %2143
    %v2146 = vmul.f32 %v750, %v2144
    %2148 = vrot.lane.b32.xlu0 %v2146, 32
    %v2149 = vpop.permute.xlu0 %2148
    %vm2151 = vcmask 259076
    %v2152 = vsel %vm2151, %v2149, 0.0
    %2153 = vadd.xlane.f32.xlu0 %v2152
    %v2154 = vpop.xlane.xlu0 %2153
    %2155 = vrot.lane.b32.xlu0 %v2142, 64
    %v2156 = vpop.permute.xlu0 %2155
    %v2158 = vmul.f32 %v1491, %v2156
    %2160 = vrot.lane.b32.xlu0 %v2158, 32
    %v2161 = vpop.permute.xlu0 %2160
    %v2163 = vsel %vm2151, %v2161, 0.0
    %2164 = vadd.xlane.f32.xlu0 %v2163
    %v2165 = vpop.xlane.xlu0 %2164
    %v2166 = vadd.f32 %v2154, %v2165
    %v2167 = vmul.f32 %v2166, 0.17677669
    %v2168 = vrot.slane %v2087, 2
    %2169 = vrot.lane.b32.xlu0 %v2168, 96
    %v2170 = vpop.permute.xlu0 %2169
    %v2172 = vmul.f32 %v964, %v2170
    %2174 = vrot.lane.b32.xlu0 %v2172, 32
    %v2175 = vpop.permute.xlu0 %2174
    %vm2177 = vcmask 261126
    %v2178 = vsel %vm2177, %v2175, 0.0
    %2179 = vadd.xlane.f32.xlu0 %v2178
    %v2180 = vpop.xlane.xlu0 %2179
    %2181 = vrot.lane.b32.xlu0 %v2168, 64
    %v2182 = vpop.permute.xlu0 %2181
    %v2184 = vmul.f32 %v1278, %v2182
    %2186 = vrot.lane.b32.xlu0 %v2184, 32
    %v2187 = vpop.permute.xlu0 %2186
    %v2189 = vsel %vm2177, %v2187, 0.0
    %2190 = vadd.xlane.f32.xlu0 %v2189
    %v2191 = vpop.xlane.xlu0 %2190
    %v2192 = vadd.f32 %v2180, %v2191
    %v2193 = vmul.f32 %v2192, 0.17677669
    %v2194 = vmul.f32 %v1172, %v2092
    %2196 = vrot.lane.b32.xlu0 %v2194, 32
    %v2197 = vpop.permute.xlu0 %2196
    %v2199 = vsel %vm2099, %v2197, 0.0
    %2200 = vadd.xlane.f32.xlu0 %v2199
    %v2201 = vpop.xlane.xlu0 %2200
    %v2202 = vmul.f32 %v1068, %v2104
    %2204 = vrot.lane.b32.xlu0 %v2202, 32
    %v2205 = vpop.permute.xlu0 %2204
    %v2207 = vsel %vm2099, %v2205, 0.0
    %2208 = vadd.xlane.f32.xlu0 %v2207
    %v2209 = vpop.xlane.xlu0 %2208
    %v2210 = vadd.f32 %v2201, %v2209
    %v2211 = vmul.f32 %v2210, 0.17677669
    %v2212 = vmul.f32 %v1384, %v2118
    %2214 = vrot.lane.b32.xlu0 %v2212, 32
    %v2215 = vpop.permute.xlu0 %2214
    %v2217 = vsel %vm2125, %v2215, 0.0
    %2218 = vadd.xlane.f32.xlu0 %v2217
    %v2219 = vpop.xlane.xlu0 %2218
    %v2220 = vmul.f32 %v857, %v2130
    %2222 = vrot.lane.b32.xlu0 %v2220, 32
    %v2223 = vpop.permute.xlu0 %2222
    %v2225 = vsel %vm2125, %v2223, 0.0
    %2226 = vadd.xlane.f32.xlu0 %v2225
    %v2227 = vpop.xlane.xlu0 %2226
    %v2228 = vadd.f32 %v2219, %v2227
    %v2229 = vmul.f32 %v2228, 0.17677669
    %v2230 = vmul.f32 %v1598, %v2144
    %2232 = vrot.lane.b32.xlu0 %v2230, 32
    %v2233 = vpop.permute.xlu0 %2232
    %v2235 = vsel %vm2151, %v2233, 0.0
    %2236 = vadd.xlane.f32.xlu0 %v2235
    %v2237 = vpop.xlane.xlu0 %2236
    %v2238 = vmul.f32 %v643, %v2156
    %2240 = vrot.lane.b32.xlu0 %v2238, 32
    %v2241 = vpop.permute.xlu0 %2240
    %v2243 = vsel %vm2151, %v2241, 0.0
    %2244 = vadd.xlane.f32.xlu0 %v2243
    %v2245 = vpop.xlane.xlu0 %2244
    %v2246 = vadd.f32 %v2237, %v2245
    %v2247 = vmul.f32 %v2246, 0.17677669
    %v2248 = vmul.f32 %v1812, %v2170
    %2250 = vrot.lane.b32.xlu0 %v2248, 32
    %v2251 = vpop.permute.xlu0 %2250
    %v2253 = vsel %vm2177, %v2251, 0.0
    %2254 = vadd.xlane.f32.xlu0 %v2253
    %v2255 = vpop.xlane.xlu0 %2254
    %v2256 = vmul.f32 %v430, %v2182
    %2258 = vrot.lane.b32.xlu0 %v2256, 32
    %v2259 = vpop.permute.xlu0 %2258
    %v2261 = vsel %vm2177, %v2259, 0.0
    %2262 = vadd.xlane.f32.xlu0 %v2261
    %v2263 = vpop.xlane.xlu0 %2262
    %v2264 = vadd.f32 %v2255, %v2263
    %v2265 = vmul.f32 %v2264, 0.17677669
    %v2267 = vrot.slane %v2141, 2
    %v2269 = vmax.f32 %v2115, %v2267
    %v2271 = vrot.slane %v2167, 4
    %v2273 = vmax.f32 %v2269, %v2271
    %v2275 = vrot.slane %v2193, 6
    %v2277 = vmax.f32 %v2273, %v2275
    %v2278 = vmax.f32 %v2277, %v2211
    %v2280 = vrot.slane %v2229, 2
    %v2282 = vmax.f32 %v2278, %v2280
    %v2284 = vrot.slane %v2247, 4
    %v2286 = vmax.f32 %v2282, %v2284
    %v2288 = vrot.slane %v2265, 6
    %v2290 = vmax.f32 %v2286, %v2288
    %v2291 = vsub.f32 %v2115, %v2290
    %v2292 = vmul.f32 %v2291, 1.442695
    %v2293 = vpow.pop %v2292
    %v2295 = vrot.slane %v2290, 6
    %v2297 = vsub.f32 %v2141, %v2295
    %v2298 = vmul.f32 %v2297, 1.442695
    %v2299 = vpow.pop %v2298
    %v2300 = vrot.slane %v2290, 4
    %v2302 = vsub.f32 %v2167, %v2300
    %v2303 = vmul.f32 %v2302, 1.442695
    %v2304 = vpow.pop %v2303
    %v2305 = vrot.slane %v2290, 2
    %v2307 = vsub.f32 %v2193, %v2305
    %v2308 = vmul.f32 %v2307, 1.442695
    %v2309 = vpow.pop %v2308
    %v2310 = vsub.f32 %v2211, %v2290
    %v2311 = vmul.f32 %v2310, 1.442695
    %v2312 = vpow.pop %v2311
    %v2313 = vsub.f32 %v2229, %v2295
    %v2314 = vmul.f32 %v2313, 1.442695
    %v2315 = vpow.pop %v2314
    %v2316 = vsub.f32 %v2247, %v2300
    %v2317 = vmul.f32 %v2316, 1.442695
    %v2318 = vpow.pop %v2317
    %v2319 = vsub.f32 %v2265, %v2305
    %v2320 = vmul.f32 %v2319, 1.442695
    %v2321 = vpow.pop %v2320
    %v2323 = vrot.slane %v2299, 2
    %v2325 = vadd.f32 %v2293, %v2323
    %v2327 = vrot.slane %v2304, 4
    %v2329 = vadd.f32 %v2325, %v2327
    %v2331 = vrot.slane %v2309, 6
    %v2333 = vadd.f32 %v2329, %v2331
    %v2334 = vadd.f32 %v2333, %v2312
    %v2336 = vrot.slane %v2315, 2
    %v2338 = vadd.f32 %v2334, %v2336
    %v2340 = vrot.slane %v2318, 4
    %v2342 = vadd.f32 %v2338, %v2340
    %v2344 = vrot.slane %v2321, 6
    %v2346 = vadd.f32 %v2342, %v2344
    %v2347 = vrcp.pop %v2346
    %v2348 = vmul.f32 1.0, %v2347
    %v2349 = vmul.f32 %v2293, %v2348
    %2351 = vset.pattern.permute.xlu0 0
    %2352 = vperm.xlu0 %2351, %v2349
    %v2353 = vpop.permute.xlu0 %2352
    %v2355 = vmul.f32 %v2353, %v332
    %v2356 = vadd.f32 %v2355, 0.0
    %v2357 = vmul.f32 %v2353, %v1916
    %v2358 = vadd.f32 %v2357, 0.0
    %v2360 = vrot.slane %v2348, 6
    %v2362 = vmul.f32 %v2299, %v2360
    %2364 = vset.pattern.permute.xlu0 0
    %2365 = vperm.xlu0 %2364, %v2362
    %v2366 = vpop.permute.xlu0 %2365
    %v2368 = vmul.f32 %v2366, %v536
    %v2370 = vrot.slane %v2368, 2
    %v2372 = vadd.f32 %v2356, %v2370
    %v2373 = vmul.f32 %v2366, %v1705
    %v2375 = vrot.slane %v2373, 2
    %v2377 = vadd.f32 %v2358, %v2375
    %v2378 = vrot.slane %v2348, 4
    %v2380 = vmul.f32 %v2304, %v2378
    %2382 = vset.pattern.permute.xlu0 0
    %2383 = vperm.xlu0 %2382, %v2380
    %v2384 = vpop.permute.xlu0 %2383
    %v2386 = vmul.f32 %v2384, %v750
    %v2388 = vrot.slane %v2386, 4
    %v2390 = vadd.f32 %v2372, %v2388
    %v2391 = vmul.f32 %v2384, %v1491
    %v2393 = vrot.slane %v2391, 4
    %v2395 = vadd.f32 %v2377, %v2393
    %v2396 = vrot.slane %v2348, 2
    %v2398 = vmul.f32 %v2309, %v2396
    %2400 = vset.pattern.permute.xlu0 0
    %2401 = vperm.xlu0 %2400, %v2398
    %v2402 = vpop.permute.xlu0 %2401
    %v2404 = vmul.f32 %v2402, %v964
    %v2406 = vrot.slane %v2404, 6
    %v2408 = vadd.f32 %v2390, %v2406
    %v2409 = vmul.f32 %v2402, %v1278
    %v2411 = vrot.slane %v2409, 6
    %v2413 = vadd.f32 %v2395, %v2411
    %v2414 = vmul.f32 %v2312, %v2348
    %2416 = vset.pattern.permute.xlu0 0
    %2417 = vperm.xlu0 %2416, %v2414
    %v2418 = vpop.permute.xlu0 %2417
    %v2420 = vmul.f32 %v2418, %v1172
    %v2421 = vadd.f32 %v2408, %v2420
    %v2422 = vmul.f32 %v2418, %v1068
    %v2423 = vadd.f32 %v2413, %v2422
    %v2424 = vmul.f32 %v2315, %v2360
    %2426 = vset.pattern.permute.xlu0 0
    %2427 = vperm.xlu0 %2426, %v2424
    %v2428 = vpop.permute.xlu0 %2427
    %v2430 = vmul.f32 %v2428, %v1384
    %v2432 = vrot.slane %v2430, 2
    %v2434 = vadd.f32 %v2421, %v2432
    %v2435 = vmul.f32 %v2428, %v857
    %v2437 = vrot.slane %v2435, 2
    %v2439 = vadd.f32 %v2423, %v2437
    %v2440 = vmul.f32 %v2318, %v2378
    %2442 = vset.pattern.permute.xlu0 0
    %2443 = vperm.xlu0 %2442, %v2440
    %v2444 = vpop.permute.xlu0 %2443
    %v2446 = vmul.f32 %v2444, %v1598
    %v2448 = vrot.slane %v2446, 4
    %v2450 = vadd.f32 %v2434, %v2448
    %v2451 = vmul.f32 %v2444, %v643
    %v2453 = vrot.slane %v2451, 4
    %v2455 = vadd.f32 %v2439, %v2453
    %v2456 = vmul.f32 %v2321, %v2396
    %2458 = vset.pattern.permute.xlu0 0
    %2459 = vperm.xlu0 %2458, %v2456
    %v2460 = vpop.permute.xlu0 %2459
    %v2462 = vmul.f32 %v2460, %v1812
    %v2464 = vrot.slane %v2462, 6
    %v2466 = vadd.f32 %v2450, %v2464
    %v2467 = vmul.f32 %v2460, %v430
    %v2469 = vrot.slane %v2467, 6
    %v2471 = vadd.f32 %v2455, %v2469
    %v2472 = vld [vmem:[%s4] sm:$0xff]
    %v2473 = vld [vmem:[%s4 + $0x8] sm:$0xff]
    %v2474 = vld [vmem:[%s4 + $0x10] sm:$0xff]
    %v2475 = vld [vmem:[%s4 + $0x18] sm:$0xff]
    %v2476 = vld [vmem:[%s4 + $0x20] sm:$0xff]
    %v2477 = vld [vmem:[%s4 + $0x28] sm:$0xff]
    %v2478 = vld [vmem:[%s4 + $0x30] sm:$0xff]
    %v2479 = vld [vmem:[%s4 + $0x38] sm:$0xff]
    %2481 = vrot.lane.b32.xlu0 %v2471, 32
    %v2482 = vpop.permute.xlu0 %2481
    %v2483 = vsel %vm143, %v2482, 0
    %2485 = vmatprep.subr.mxu0 0.0
    %2486 = vmatpush1.msra.mxu0 %v2476
    %2487 = vmatprep.subr.mxu0 0.0
    %2488 = vmatpush1.msra.mxu0 %v2477
    %2489 = vmatprep.subr.mxu0 0.0
    %2490 = vmatpush1.msra.mxu0 %v2478
    %2491 = vmatprep.subr.mxu0 0.0
    %2492 = vmatpush1.msra.mxu0 %v2479
    %2493 = vmatprep.subr.mxu0 0.0
    %2494 = vmatpush1.msra.mxu0 0.0
    %2495 = vmatprep.subr.mxu0 0.0
    %2496 = vmatpush1.msra.mxu0 0.0
    %2497 = vmatprep.subr.mxu0 0.0
    %2498 = vmatpush1.msra.mxu0 0.0
    %2499 = vmatprep.subr.mxu0 0.0
    %2500 = vmatpush1.msra.mxu0 0.0
    %2501 = vmatprep.subr.mxu0 0.0
    %2502 = vmatpush1.msra.mxu0 0.0
    %2503 = vmatprep.subr.mxu0 0.0
    %2504 = vmatpush1.msra.mxu0 0.0
    %2505 = vmatprep.subr.mxu0 0.0
    %2506 = vmatpush1.msra.mxu0 0.0
    %2507 = vmatprep.subr.mxu0 0.0
    %2508 = vmatpush1.msra.mxu0 0.0
    %2509 = vmatprep.subr.mxu0 0.0
    %2510 = vmatpush1.msra.mxu0 0.0
    %2511 = vmatprep.subr.mxu0 0.0
    %2512 = vmatpush1.msra.mxu0 0.0
    %2513 = vmatprep.subr.mxu0 0.0
    %2514 = vmatpush1.msra.mxu0 0.0
    %2515 = vmatprep.subr.mxu0 0.0
    %2516 = vmatpush1.msra.mxu0 0.0
    %2517 = vmatprep.subr.mxu0 0.0
    %2518 = vmatpush1.msra.mxu0 0.0
    %2519 = vmatprep.subr.mxu0 0.0
    %2520 = vmatpush1.msra.mxu0 0.0
    %2521 = vmatprep.subr.mxu0 0.0
    %2522 = vmatpush1.msra.mxu0 0.0
    %2523 = vmatprep.subr.mxu0 0.0
    %2524 = vmatpush1.msra.mxu0 0.0
    %2525 = vmatprep.subr.mxu0 0.0
    %2526 = vmatpush1.msra.mxu0 0.0
    %2527 = vmatprep.subr.mxu0 0.0
    %2528 = vmatpush1.msra.mxu0 0.0
    %2529 = vmatprep.subr.mxu0 0.0
    %2530 = vmatpush1.msra.mxu0 0.0
    %2531 = vmatprep.subr.mxu0 0.0
    %2532 = vmatpush1.msra.mxu0 0.0
    %2533 = vmatprep.subr.mxu0 0.0
    %2534 = vmatpush1.msra.mxu0 0.0
    %2535 = vmatprep.subr.mxu0 0.0
    %2536 = vmatpush1.msra.mxu0 0.0
    %2537 = vmatprep.subr.mxu0 0.0
    %2538 = vmatpush1.msra.mxu0 0.0
    %2539 = vmatprep.subr.mxu0 0.0
    %2540 = vmatpush1.msra.mxu0 0.0
    %2541 = vmatprep.subr.mxu0 0.0
    %2542 = vmatpush1.msra.mxu0 0.0
    %2543 = vmatprep.subr.mxu0 0.0
    %2544 = vmatpush1.msra.mxu0 0.0
    %2545 = vmatprep.subr.mxu0 0.0
    %2546 = vmatpush1.msra.mxu0 0.0
    %2547 = vmatprep.subr.mxu0 0.0
    %2548 = vmatpush1.msra.mxu0 0.0
    %2549 = vmatprep.mubr.f32.mxu0 0.0
    %2550 = vmatmul.mubr.f32.gmra.mrb[0].mxu0 %v2483
    %v2551 = vpop.f32.mrb[0].mxu0
    %v2552 = vadd.f32 0.0, %v2551
    %v2553 = vpop.f32.mrb[0].mxu0
    %2554 = vdwg.mxu0
    %2556 = vrot.lane.b32.xlu0 %v2466, 32
    %v2557 = vpop.permute.xlu0 %2556
    %v2558 = vsel %vm143, %v2557, 0
    %2560 = vmatprep.subr.mxu0 0.0
    %2561 = vmatpush1.msra.mxu0 %v2472
    %2562 = vmatprep.subr.mxu0 0.0
    %2563 = vmatpush1.msra.mxu0 %v2473
    %2564 = vmatprep.subr.mxu0 0.0
    %2565 = vmatpush1.msra.mxu0 %v2474
    %2566 = vmatprep.subr.mxu0 0.0
    %2567 = vmatpush1.msra.mxu0 %v2475
    %2568 = vmatprep.subr.mxu0 0.0
    %2569 = vmatpush1.msra.mxu0 0.0
    %2570 = vmatprep.subr.mxu0 0.0
    %2571 = vmatpush1.msra.mxu0 0.0
    %2572 = vmatprep.subr.mxu0 0.0
    %2573 = vmatpush1.msra.mxu0 0.0
    %2574 = vmatprep.subr.mxu0 0.0
    %2575 = vmatpush1.msra.mxu0 0.0
    %2576 = vmatprep.subr.mxu0 0.0
    %2577 = vmatpush1.msra.mxu0 0.0
    %2578 = vmatprep.subr.mxu0 0.0
    %2579 = vmatpush1.msra.mxu0 0.0
    %2580 = vmatprep.subr.mxu0 0.0
    %2581 = vmatpush1.msra.mxu0 0.0
    %2582 = vmatprep.subr.mxu0 0.0
    %2583 = vmatpush1.msra.mxu0 0.0
    %2584 = vmatprep.subr.mxu0 0.0
    %2585 = vmatpush1.msra.mxu0 0.0
    %2586 = vmatprep.subr.mxu0 0.0
    %2587 = vmatpush1.msra.mxu0 0.0
    %2588 = vmatprep.subr.mxu0 0.0
    %2589 = vmatpush1.msra.mxu0 0.0
    %2590 = vmatprep.subr.mxu0 0.0
    %2591 = vmatpush1.msra.mxu0 0.0
    %2592 = vmatprep.subr.mxu0 0.0
    %2593 = vmatpush1.msra.mxu0 0.0
    %2594 = vmatprep.subr.mxu0 0.0
    %2595 = vmatpush1.msra.mxu0 0.0
    %2596 = vmatprep.subr.mxu0 0.0
    %2597 = vmatpush1.msra.mxu0 0.0
    %2598 = vmatprep.subr.mxu0 0.0
    %2599 = vmatpush1.msra.mxu0 0.0
    %2600 = vmatprep.subr.mxu0 0.0
    %2601 = vmatpush1.msra.mxu0 0.0
    %2602 = vmatprep.subr.mxu0 0.0
    %2603 = vmatpush1.msra.mxu0 0.0
    %2604 = vmatprep.subr.mxu0 0.0
    %2605 = vmatpush1.msra.mxu0 0.0
    %2606 = vmatprep.subr.mxu0 0.0
    %2607 = vmatpush1.msra.mxu0 0.0
    %2608 = vmatprep.subr.mxu0 0.0
    %2609 = vmatpush1.msra.mxu0 0.0
    %2610 = vmatprep.subr.mxu0 0.0
    %2611 = vmatpush1.msra.mxu0 0.0
    %2612 = vmatprep.subr.mxu0 0.0
    %2613 = vmatpush1.msra.mxu0 0.0
    %2614 = vmatprep.subr.mxu0 0.0
    %2615 = vmatpush1.msra.mxu0 0.0
    %2616 = vmatprep.subr.mxu0 0.0
    %2617 = vmatpush1.msra.mxu0 0.0
    %2618 = vmatprep.subr.mxu0 0.0
    %2619 = vmatpush1.msra.mxu0 0.0
    %2620 = vmatprep.subr.mxu0 0.0
    %2621 = vmatpush1.msra.mxu0 0.0
    %2622 = vmatprep.subr.mxu0 0.0
    %2623 = vmatpush1.msra.mxu0 0.0
    %2624 = vmatprep.mubr.f32.mxu0 0.0
    %2625 = vmatmul.mubr.f32.gmra.mrb[0].mxu0 %v2558
    %v2626 = vpop.f32.mrb[0].mxu0
    %v2627 = vadd.f32 %v2552, %v2626
    %v2628 = vpop.f32.mrb[0].mxu0
    %2629 = vdwg.mxu0
    %2630 = vrot.lane.b32.xlu0 %v1926, 96
    %v2631 = vpop.permute.xlu0 %2630
    %v2633 = vadd.f32 %v2627, %v2631
    %2634 = vrot.lane.b32.xlu0 %v1917, 32
    %v2635 = vpop.permute.xlu0 %2634
    %2636 = vrot.lane.b32.xlu0 %v1918, 32
    %v2637 = vpop.permute.xlu0 %2636
    %2638 = vrot.lane.b32.xlu0 %v1919, 32
    %v2639 = vpop.permute.xlu0 %2638
    %2640 = vrot.lane.b32.xlu0 %v1920, 32
    %v2641 = vpop.permute.xlu0 %2640
    %2646 = vrot.lane.b32.xlu0 %v1926, 64
    %v2647 = vpop.permute.xlu0 %2646
    %v2650 = vsel %vm143, %v2633, 0
    %2652 = vmatprep.subr.mxu0 0.0
    %2653 = vmatpush1.msra.mxu0 %v2635
    %2654 = vmatprep.subr.mxu0 0.0
    %2655 = vmatpush1.msra.mxu0 %v2637
    %2656 = vmatprep.subr.mxu0 0.0
    %2657 = vmatpush1.msra.mxu0 %v2639
    %2658 = vmatprep.subr.mxu0 0.0
    %2659 = vmatpush1.msra.mxu0 %v2641
    %2660 = vmatprep.subr.mxu0 0.0
    %2661 = vmatpush1.msra.mxu0 0.0
    %2662 = vmatprep.subr.mxu0 0.0
    %2663 = vmatpush1.msra.mxu0 0.0
    %2664 = vmatprep.subr.mxu0 0.0
    %2665 = vmatpush1.msra.mxu0 0.0
    %2666 = vmatprep.subr.mxu0 0.0
    %2667 = vmatpush1.msra.mxu0 0.0
    %2668 = vmatprep.subr.mxu0 0.0
    %2669 = vmatpush1.msra.mxu0 0.0
    %2670 = vmatprep.subr.mxu0 0.0
    %2671 = vmatpush1.msra.mxu0 0.0
    %2672 = vmatprep.subr.mxu0 0.0
    %2673 = vmatpush1.msra.mxu0 0.0
    %2674 = vmatprep.subr.mxu0 0.0
    %2675 = vmatpush1.msra.mxu0 0.0
    %2676 = vmatprep.subr.mxu0 0.0
    %2677 = vmatpush1.msra.mxu0 0.0
    %2678 = vmatprep.subr.mxu0 0.0
    %2679 = vmatpush1.msra.mxu0 0.0
    %2680 = vmatprep.subr.mxu0 0.0
    %2681 = vmatpush1.msra.mxu0 0.0
    %2682 = vmatprep.subr.mxu0 0.0
    %2683 = vmatpush1.msra.mxu0 0.0
    %2684 = vmatprep.subr.mxu0 0.0
    %2685 = vmatpush1.msra.mxu0 0.0
    %2686 = vmatprep.subr.mxu0 0.0
    %2687 = vmatpush1.msra.mxu0 0.0
    %2688 = vmatprep.subr.mxu0 0.0
    %2689 = vmatpush1.msra.mxu0 0.0
    %2690 = vmatprep.subr.mxu0 0.0
    %2691 = vmatpush1.msra.mxu0 0.0
    %2692 = vmatprep.subr.mxu0 0.0
    %2693 = vmatpush1.msra.mxu0 0.0
    %2694 = vmatprep.subr.mxu0 0.0
    %2695 = vmatpush1.msra.mxu0 0.0
    %2696 = vmatprep.subr.mxu0 0.0
    %2697 = vmatpush1.msra.mxu0 0.0
    %2698 = vmatprep.subr.mxu0 0.0
    %2699 = vmatpush1.msra.mxu0 0.0
    %2700 = vmatprep.subr.mxu0 0.0
    %2701 = vmatpush1.msra.mxu0 0.0
    %2702 = vmatprep.subr.mxu0 0.0
    %2703 = vmatpush1.msra.mxu0 0.0
    %2704 = vmatprep.subr.mxu0 0.0
    %2705 = vmatpush1.msra.mxu0 0.0
    %2706 = vmatprep.subr.mxu0 0.0
    %2707 = vmatpush1.msra.mxu0 0.0
    %2708 = vmatprep.subr.mxu0 0.0
    %2709 = vmatpush1.msra.mxu0 0.0
    %2710 = vmatprep.subr.mxu0 0.0
    %2711 = vmatpush1.msra.mxu0 0.0
    %2712 = vmatprep.subr.mxu0 0.0
    %2713 = vmatpush1.msra.mxu0 0.0
    %2714 = vmatprep.subr.mxu0 0.0
    %2715 = vmatpush1.msra.mxu0 0.0
    %2716 = vmatprep.mubr.f32.mxu0 0.0
    %2717 = vmatmul.mubr.f32.gmra.mrb[0].mxu0 %v2650
    %v2718 = vpop.f32.mrb[0].mxu0
    %v2719 = vadd.f32 %v2647, %v2718
    %v2720 = vpop.f32.mrb[0].mxu0
    %2721 = vdwg.mxu0
    %v2722 = vld [vmem:[#allocation7 + $0x30] sm:$0xff]
    %v2723 = vld [vmem:[#allocation7 + $0x78] sm:$0xff]
    %v2724 = vld [vmem:[#allocation7 + $0xc0] sm:$0xff]
    %v2725 = vld [vmem:[#allocation7 + $0x108] sm:$0xff]
    %v2726 = vld [vmem:[#allocation7 + $0x28] sm:$0xff]
    %v2727 = vld [vmem:[#allocation7 + $0x70] sm:$0xff]
    %v2728 = vld [vmem:[#allocation7 + $0xb8] sm:$0xff]
    %v2729 = vld [vmem:[#allocation7 + $0x100] sm:$0xff]
    %v2731 = vsel %vm143, %v2719, 0
    %2733 = vmatprep.subr.mxu0 0.0
    %2734 = vmatpush1.msra.mxu0 %v2726
    %2735 = vmatprep.subr.mxu0 0.0
    %2736 = vmatpush1.msra.mxu0 %v2727
    %2737 = vmatprep.subr.mxu0 0.0
    %2738 = vmatpush1.msra.mxu0 %v2728
    %2739 = vmatprep.subr.mxu0 0.0
    %2740 = vmatpush1.msra.mxu0 %v2729
    %2741 = vmatprep.subr.mxu0 0.0
    %2742 = vmatpush1.msra.mxu0 0.0
    %2743 = vmatprep.subr.mxu0 0.0
    %2744 = vmatpush1.msra.mxu0 0.0
    %2745 = vmatprep.subr.mxu0 0.0
    %2746 = vmatpush1.msra.mxu0 0.0
    %2747 = vmatprep.subr.mxu0 0.0
    %2748 = vmatpush1.msra.mxu0 0.0
    %2749 = vmatprep.subr.mxu0 0.0
    %2750 = vmatpush1.msra.mxu0 0.0
    %2751 = vmatprep.subr.mxu0 0.0
    %2752 = vmatpush1.msra.mxu0 0.0
    %2753 = vmatprep.subr.mxu0 0.0
    %2754 = vmatpush1.msra.mxu0 0.0
    %2755 = vmatprep.subr.mxu0 0.0
    %2756 = vmatpush1.msra.mxu0 0.0
    %2757 = vmatprep.subr.mxu0 0.0
    %2758 = vmatpush1.msra.mxu0 0.0
    %2759 = vmatprep.subr.mxu0 0.0
    %2760 = vmatpush1.msra.mxu0 0.0
    %2761 = vmatprep.subr.mxu0 0.0
    %2762 = vmatpush1.msra.mxu0 0.0
    %2763 = vmatprep.subr.mxu0 0.0
    %2764 = vmatpush1.msra.mxu0 0.0
    %2765 = vmatprep.subr.mxu0 0.0
    %2766 = vmatpush1.msra.mxu0 0.0
    %2767 = vmatprep.subr.mxu0 0.0
    %2768 = vmatpush1.msra.mxu0 0.0
    %2769 = vmatprep.subr.mxu0 0.0
    %2770 = vmatpush1.msra.mxu0 0.0
    %2771 = vmatprep.subr.mxu0 0.0
    %2772 = vmatpush1.msra.mxu0 0.0
    %2773 = vmatprep.subr.mxu0 0.0
    %2774 = vmatpush1.msra.mxu0 0.0
    %2775 = vmatprep.subr.mxu0 0.0
    %2776 = vmatpush1.msra.mxu0 0.0
    %2777 = vmatprep.subr.mxu0 0.0
    %2778 = vmatpush1.msra.mxu0 0.0
    %2779 = vmatprep.subr.mxu0 0.0
    %2780 = vmatpush1.msra.mxu0 0.0
    %2781 = vmatprep.subr.mxu0 0.0
    %2782 = vmatpush1.msra.mxu0 0.0
    %2783 = vmatprep.subr.mxu0 0.0
    %2784 = vmatpush1.msra.mxu0 0.0
    %2785 = vmatprep.subr.mxu0 0.0
    %2786 = vmatpush1.msra.mxu0 0.0
    %2787 = vmatprep.subr.mxu0 0.0
    %2788 = vmatpush1.msra.mxu0 0.0
    %2789 = vmatprep.subr.mxu0 0.0
    %2790 = vmatpush1.msra.mxu0 0.0
    %2791 = vmatprep.subr.mxu0 0.0
    %2792 = vmatpush1.msra.mxu0 0.0
    %2793 = vmatprep.subr.mxu0 0.0
    %2794 = vmatpush1.msra.mxu0 0.0
    %2795 = vmatprep.subr.mxu0 0.0
    %2796 = vmatpush1.msra.mxu0 0.0
    %2797 = vmatprep.mubr.f32.mxu0 0.0
    %2798 = vmatmul.mubr.f32.gmra.mrb[0].mxu0 %v2731
    %v2799 = vpop.f32.mrb[0].mxu0
    %v2800 = vadd.f32 0.0, %v2799
    %v2801 = vpop.f32.mrb[0].mxu0
    %2802 = vdwg.mxu0
    %2803 = vmatprep.subr.mxu0 0.0
    %2804 = vmatpush1.msra.mxu0 %v2722
    %2805 = vmatprep.subr.mxu0 0.0
    %2806 = vmatpush1.msra.mxu0 %v2723
    %2807 = vmatprep.subr.mxu0 0.0
    %2808 = vmatpush1.msra.mxu0 %v2724
    %2809 = vmatprep.subr.mxu0 0.0
    %2810 = vmatpush1.msra.mxu0 %v2725
    %2811 = vmatprep.subr.mxu0 0.0
    %2812 = vmatpush1.msra.mxu0 0.0
    %2813 = vmatprep.subr.mxu0 0.0
    %2814 = vmatpush1.msra.mxu0 0.0
    %2815 = vmatprep.subr.mxu0 0.0
    %2816 = vmatpush1.msra.mxu0 0.0
    %2817 = vmatprep.subr.mxu0 0.0
    %2818 = vmatpush1.msra.mxu0 0.0
    %2819 = vmatprep.subr.mxu0 0.0
    %2820 = vmatpush1.msra.mxu0 0.0
    %2821 = vmatprep.subr.mxu0 0.0
    %2822 = vmatpush1.msra.mxu0 0.0
    %2823 = vmatprep.subr.mxu0 0.0
    %2824 = vmatpush1.msra.mxu0 0.0
    %2825 = vmatprep.subr.mxu0 0.0
    %2826 = vmatpush1.msra.mxu0 0.0
    %2827 = vmatprep.subr.mxu0 0.0
    %2828 = vmatpush1.msra.mxu0 0.0
    %2829 = vmatprep.subr.mxu0 0.0
    %2830 = vmatpush1.msra.mxu0 0.0
    %2831 = vmatprep.subr.mxu0 0.0
    %2832 = vmatpush1.msra.mxu0 0.0
    %2833 = vmatprep.subr.mxu0 0.0
    %2834 = vmatpush1.msra.mxu0 0.0
    %2835 = vmatprep.subr.mxu0 0.0
    %2836 = vmatpush1.msra.mxu0 0.0
    %2837 = vmatprep.subr.mxu0 0.0
    %2838 = vmatpush1.msra.mxu0 0.0
    %2839 = vmatprep.subr.mxu0 0.0
    %2840 = vmatpush1.msra.mxu0 0.0
    %2841 = vmatprep.subr.mxu0 0.0
    %2842 = vmatpush1.msra.mxu0 0.0
    %2843 = vmatprep.subr.mxu0 0.0
    %2844 = vmatpush1.msra.mxu0 0.0
    %2845 = vmatprep.subr.mxu0 0.0
    %2846 = vmatpush1.msra.mxu0 0.0
    %2847 = vmatprep.subr.mxu0 0.0
    %2848 = vmatpush1.msra.mxu0 0.0
    %2849 = vmatprep.subr.mxu0 0.0
    %2850 = vmatpush1.msra.mxu0 0.0
    %2851 = vmatprep.subr.mxu0 0.0
    %2852 = vmatpush1.msra.mxu0 0.0
    %2853 = vmatprep.subr.mxu0 0.0
    %2854 = vmatpush1.msra.mxu0 0.0
    %2855 = vmatprep.subr.mxu0 0.0
    %2856 = vmatpush1.msra.mxu0 0.0
    %2857 = vmatprep.subr.mxu0 0.0
    %2858 = vmatpush1.msra.mxu0 0.0
    %2859 = vmatprep.subr.mxu0 0.0
    %2860 = vmatpush1.msra.mxu0 0.0
    %2861 = vmatprep.subr.mxu0 0.0
    %2862 = vmatpush1.msra.mxu0 0.0
    %2863 = vmatprep.subr.mxu0 0.0
    %2864 = vmatpush1.msra.mxu0 0.0
    %2865 = vmatprep.subr.mxu0 0.0
    %2866 = vmatpush1.msra.mxu0 0.0
    %2867 = vmatprep.mubr.f32.mxu0 0.0
    %2868 = vmatmul.mubr.f32.gmra.mrb[0].mxu0 %v1929
    %v2869 = vpop.f32.mrb[0].mxu0
    %v2870 = vadd.f32 %v2800, %v2869
    %v2871 = vpop.f32.mrb[0].mxu0
    %2872 = vdwg.mxu0
    %v2873 = vld [vmem:[%s5 + $0x2] sm:$0x1]
    %v2875 = vlaneseq
    %v2876 = vshrl.u32 %v2875, 7
    %v2877 = vsub.s32 0, %v2876
    %v2878 = vrot.slane %v2873, %v2877
    %v2880 = vadd.f32 %v2870, %v2878
    %v2881 = vld [vmem:[#allocation7 + $0x20] sm:$0xff]
    %v2882 = vld [vmem:[#allocation7 + $0x68] sm:$0xff]
    %v2883 = vld [vmem:[#allocation7 + $0xb0] sm:$0xff]
    %v2884 = vld [vmem:[#allocation7 + $0xf8] sm:$0xff]
    %v2886 = vrot.slane %v1812, 6
    %2887 = vrot.lane.b32.xlu0 %v2886, 32
    %v2888 = vpop.permute.xlu0 %2887
    %v2889 = vsel %vm143, %v2888, 0
    %2891 = vmatprep.subr.mxu0 0.0
    %2892 = vmatpush1.msra.mxu0 %v2881
    %2893 = vmatprep.subr.mxu0 0.0
    %2894 = vmatpush1.msra.mxu0 %v2882
    %2895 = vmatprep.subr.mxu0 0.0
    %2896 = vmatpush1.msra.mxu0 %v2883
    %2897 = vmatprep.subr.mxu0 0.0
    %2898 = vmatpush1.msra.mxu0 %v2884
    %2899 = vmatprep.subr.mxu0 0.0
    %2900 = vmatpush1.msra.mxu0 0.0
    %2901 = vmatprep.subr.mxu0 0.0
    %2902 = vmatpush1.msra.mxu0 0.0
    %2903 = vmatprep.subr.mxu0 0.0
    %2904 = vmatpush1.msra.mxu0 0.0
    %2905 = vmatprep.subr.mxu0 0.0
    %2906 = vmatpush1.msra.mxu0 0.0
    %2907 = vmatprep.subr.mxu0 0.0
    %2908 = vmatpush1.msra.mxu0 0.0
    %2909 = vmatprep.subr.mxu0 0.0
    %2910 = vmatpush1.msra.mxu0 0.0
    %2911 = vmatprep.subr.mxu0 0.0
    %2912 = vmatpush1.msra.mxu0 0.0
    %2913 = vmatprep.subr.mxu0 0.0
    %2914 = vmatpush1.msra.mxu0 0.0
    %2915 = vmatprep.subr.mxu0 0.0
    %2916 = vmatpush1.msra.mxu0 0.0
    %2917 = vmatprep.subr.mxu0 0.0
    %2918 = vmatpush1.msra.mxu0 0.0
    %2919 = vmatprep.subr.mxu0 0.0
    %2920 = vmatpush1.msra.mxu0 0.0
    %2921 = vmatprep.subr.mxu0 0.0
    %2922 = vmatpush1.msra.mxu0 0.0
    %2923 = vmatprep.subr.mxu0 0.0
    %2924 = vmatpush1.msra.mxu0 0.0
    %2925 = vmatprep.subr.mxu0 0.0
    %2926 = vmatpush1.msra.mxu0 0.0
    %2927 = vmatprep.subr.mxu0 0.0
    %2928 = vmatpush1.msra.mxu0 0.0
    %2929 = vmatprep.subr.mxu0 0.0
    %2930 = vmatpush1.msra.mxu0 0.0
    %2931 = vmatprep.subr.mxu0 0.0
    %2932 = vmatpush1.msra.mxu0 0.0
    %2933 = vmatprep.subr.mxu0 0.0
    %2934 = vmatpush1.msra.mxu0 0.0
    %2935 = vmatprep.subr.mxu0 0.0
    %2936 = vmatpush1.msra.mxu0 0.0
    %2937 = vmatprep.subr.mxu0 0.0
    %2938 = vmatpush1.msra.mxu0 0.0
    %2939 = vmatprep.subr.mxu0 0.0
    %2940 = vmatpush1.msra.mxu0 0.0
    %2941 = vmatprep.subr.mxu0 0.0
    %2942 = vmatpush1.msra.mxu0 0.0
    %2943 = vmatprep.subr.mxu0 0.0
    %2944 = vmatpush1.msra.mxu0 0.0
    %2945 = vmatprep.subr.mxu0 0.0
    %2946 = vmatpush1.msra.mxu0 0.0
    %2947 = vmatprep.subr.mxu0 0.0
    %2948 = vmatpush1.msra.mxu0 0.0
    %2949 = vmatprep.subr.mxu0 0.0
    %2950 = vmatpush1.msra.mxu0 0.0
    %2951 = vmatprep.subr.mxu0 0.0
    %2952 = vmatpush1.msra.mxu0 0.0
    %2953 = vmatprep.subr.mxu0 0.0
    %2954 = vmatpush1.msra.mxu0 0.0
    %2955 = vmatprep.mubr.f32.mxu0 0.0
    %2956 = vmatmul.mubr.f32.gmra.mrb[0].mxu0 %v2889
    %v2957 = vpop.f32.mrb[0].mxu0
    %v2958 = vadd.f32 0.0, %v2957
    %v2959 = vpop.f32.mrb[0].mxu0
    %2960 = vdwg.mxu0
    %v2961 = vadd.f32 %v2880, %v2958
    %v2962 = vxor.u32 %v2961, 2147483648
    %v2963 = vmul.f32 %v2962, 1.442695
    %v2964 = vpow.pop %v2963
    %v2965 = vadd.f32 %v2964, 1.0
    %v2966 = vrcp.pop %v2965
    %v2967 = vmul.f32 1.0, %v2966
    %v2968 = vtanh.pop %v2961
    %v2969 = vmul.f32 %v2967, 0.0
    %2971 = vrot.lane.b32.xlu0 %v2968, 64
    %v2972 = vpop.permute.xlu0 %2971
    %v2974 = vmul.f32 %v2967, %v2972
    %2976 = vrot.lane.b32.xlu0 %v2974, 32
    %v2977 = vpop.permute.xlu0 %2976
    %v2979 = vadd.f32 %v2969, %v2977
    %v2980 = vtanh.pop %v2979
    %2982 = vrot.lane.b32.xlu0 %v2980, 64
    %v2983 = vpop.permute.xlu0 %2982
    %v2985 = vmul.f32 %v2967, %v2983
    %v2986 = vld [vmem:[%s5 + $0x4] sm:$0x1]
    %v2988 = vlaneseq
    %v2989 = vshrl.u32 %v2988, 7
    %v2990 = vsub.s32 0, %v2989
    %v2991 = vrot.slane %v2986, %v2990
    %2992 = vrot.lane.b32.xlu0 %v2991, 96
    %v2993 = vpop.permute.xlu0 %2992
    %v2995 = vmul.f32 %v2985, %v2993
    %2997 = vrot.lane.b32.xlu0 %v2995, 32
    %v2998 = vpop.permute.xlu0 %2997
    %v3000 = vsel %vm2099, %v2998, 0.0
    %3001 = vadd.xlane.f32.xlu0 %v3000
    %v3002 = vpop.xlane.xlu0 %3001
    %v3003 = vmul.f32 %v2719, %v2993
    %v3004 = vsel %vm2099, %v3003, 0.0
    %3005 = vadd.xlane.f32.xlu0 %v3004
    %v3006 = vpop.xlane.xlu0 %3005
    %v3007 = vadd.f32 %v3002, %v3006
    %v3009 = vadd.f32 %v3007, %v2991
    %v3010 = vxor.u32 %v3009, 2147483648
    %v3011 = vmul.f32 %v3010, 1.442695
    %v3012 = vpow.pop %v3011
    %v3013 = vadd.f32 %v3012, 1.0
    %v3014 = vrcp.pop %v3013
    %v3015 = vmul.f32 1.0, %v3014
    %v3016 = vld [vmem:[#allocation7 + $0x40] sm:$0xff]
    %v3017 = vld [vmem:[#allocation7 + $0x88] sm:$0xff]
    %v3018 = vld [vmem:[#allocation7 + $0xd0] sm:$0xff]
    %v3019 = vld [vmem:[#allocation7 + $0x118] sm:$0xff]
    %3024 = vrot.lane.b32.xlu0 %v3016, 96
    %v3025 = vpop.permute.xlu0 %3024
    %3026 = vrot.lane.b32.xlu0 %v3017, 96
    %v3027 = vpop.permute.xlu0 %3026
    %3028 = vrot.lane.b32.xlu0 %v3018, 96
    %v3029 = vpop.permute.xlu0 %3028
    %3030 = vrot.lane.b32.xlu0 %v3019, 96
    %v3031 = vpop.permute.xlu0 %3030
    %3036 = vmatprep.subr.mxu0 0.0
    %3037 = vmatpush1.msra.mxu0 %v3025
    %3038 = vmatprep.subr.mxu0 0.0
    %3039 = vmatpush1.msra.mxu0 %v3027
    %3040 = vmatprep.subr.mxu0 0.0
    %3041 = vmatpush1.msra.mxu0 %v3029
    %3042 = vmatprep.subr.mxu0 0.0
    %3043 = vmatpush1.msra.mxu0 %v3031
    %3044 = vmatprep.subr.mxu0 0.0
    %3045 = vmatpush1.msra.mxu0 0.0
    %3046 = vmatprep.subr.mxu0 0.0
    %3047 = vmatpush1.msra.mxu0 0.0
    %3048 = vmatprep.subr.mxu0 0.0
    %3049 = vmatpush1.msra.mxu0 0.0
    %3050 = vmatprep.subr.mxu0 0.0
    %3051 = vmatpush1.msra.mxu0 0.0
    %3052 = vmatprep.subr.mxu0 0.0
    %3053 = vmatpush1.msra.mxu0 0.0
    %3054 = vmatprep.subr.mxu0 0.0
    %3055 = vmatpush1.msra.mxu0 0.0
    %3056 = vmatprep.subr.mxu0 0.0
    %3057 = vmatpush1.msra.mxu0 0.0
    %3058 = vmatprep.subr.mxu0 0.0
    %3059 = vmatpush1.msra.mxu0 0.0
    %3060 = vmatprep.subr.mxu0 0.0
    %3061 = vmatpush1.msra.mxu0 0.0
    %3062 = vmatprep.subr.mxu0 0.0
    %3063 = vmatpush1.msra.mxu0 0.0
    %3064 = vmatprep.subr.mxu0 0.0
    %3065 = vmatpush1.msra.mxu0 0.0
    %3066 = vmatprep.subr.mxu0 0.0
    %3067 = vmatpush1.msra.mxu0 0.0
    %3068 = vmatprep.subr.mxu0 0.0
    %3069 = vmatpush1.msra.mxu0 0.0
    %3070 = vmatprep.subr.mxu0 0.0
    %3071 = vmatpush1.msra.mxu0 0.0
    %3072 = vmatprep.subr.mxu0 0.0
    %3073 = vmatpush1.msra.mxu0 0.0
    %3074 = vmatprep.subr.mxu0 0.0
    %3075 = vmatpush1.msra.mxu0 0.0
    %3076 = vmatprep.subr.mxu0 0.0
    %3077 = vmatpush1.msra.mxu0 0.0
    %3078 = vmatprep.subr.mxu0 0.0
    %3079 = vmatpush1.msra.mxu0 0.0
    %3080 = vmatprep.subr.mxu0 0.0
    %3081 = vmatpush1.msra.mxu0 0.0
    %3082 = vmatprep.subr.mxu0 0.0
    %3083 = vmatpush1.msra.mxu0 0.0
    %3084 = vmatprep.subr.mxu0 0.0
    %3085 = vmatpush1.msra.mxu0 0.0
    %3086 = vmatprep.subr.mxu0 0.0
    %3087 = vmatpush1.msra.mxu0 0.0
    %3088 = vmatprep.subr.mxu0 0.0
    %3089 = vmatpush1.msra.mxu0 0.0
    %3090 = vmatprep.subr.mxu0 0.0
    %3091 = vmatpush1.msra.mxu0 0.0
    %3092 = vmatprep.subr.mxu0 0.0
    %3093 = vmatpush1.msra.mxu0 0.0
    %3094 = vmatprep.subr.mxu0 0.0
    %3095 = vmatpush1.msra.mxu0 0.0
    %3096 = vmatprep.subr.mxu0 0.0
    %3097 = vmatpush1.msra.mxu0 0.0
    %3098 = vmatprep.subr.mxu0 0.0
    %3099 = vmatpush1.msra.mxu0 0.0
    %3100 = vmatprep.mubr.f32.mxu0 0.0
    %3101 = vmatmul.mubr.f32.gmra.mrb[0].mxu0 %v2731
    %v3102 = vpop.f32.mrb[0].mxu0
    %v3103 = vadd.f32 0.0, %v3102
    %v3104 = vpop.f32.mrb[0].mxu0
    %3105 = vdwg.mxu0
    %3107 = vrot.lane.b32.xlu0 %v2985, 32
    %v3108 = vpop.permute.xlu0 %3107
    %v3109 = vsel %vm143, %v3108, 0
    %3111 = vmatprep.subr.mxu0 0.0
    %3112 = vmatpush1.msra.mxu0 %v3016
    %3113 = vmatprep.subr.mxu0 0.0
    %3114 = vmatpush1.msra.mxu0 %v3017
    %3115 = vmatprep.subr.mxu0 0.0
    %3116 = vmatpush1.msra.mxu0 %v3018
    %3117 = vmatprep.subr.mxu0 0.0
    %3118 = vmatpush1.msra.mxu0 %v3019
    %3119 = vmatprep.subr.mxu0 0.0
    %3120 = vmatpush1.msra.mxu0 0.0
    %3121 = vmatprep.subr.mxu0 0.0
    %3122 = vmatpush1.msra.mxu0 0.0
    %3123 = vmatprep.subr.mxu0 0.0
    %3124 = vmatpush1.msra.mxu0 0.0
    %3125 = vmatprep.subr.mxu0 0.0
    %3126 = vmatpush1.msra.mxu0 0.0
    %3127 = vmatprep.subr.mxu0 0.0
    %3128 = vmatpush1.msra.mxu0 0.0
    %3129 = vmatprep.subr.mxu0 0.0
    %3130 = vmatpush1.msra.mxu0 0.0
    %3131 = vmatprep.subr.mxu0 0.0
    %3132 = vmatpush1.msra.mxu0 0.0
    %3133 = vmatprep.subr.mxu0 0.0
    %3134 = vmatpush1.msra.mxu0 0.0
    %3135 = vmatprep.subr.mxu0 0.0
    %3136 = vmatpush1.msra.mxu0 0.0
    %3137 = vmatprep.subr.mxu0 0.0
    %3138 = vmatpush1.msra.mxu0 0.0
    %3139 = vmatprep.subr.mxu0 0.0
    %3140 = vmatpush1.msra.mxu0 0.0
    %3141 = vmatprep.subr.mxu0 0.0
    %3142 = vmatpush1.msra.mxu0 0.0
    %3143 = vmatprep.subr.mxu0 0.0
    %3144 = vmatpush1.msra.mxu0 0.0
    %3145 = vmatprep.subr.mxu0 0.0
    %3146 = vmatpush1.msra.mxu0 0.0
    %3147 = vmatprep.subr.mxu0 0.0
    %3148 = vmatpush1.msra.mxu0 0.0
    %3149 = vmatprep.subr.mxu0 0.0
    %3150 = vmatpush1.msra.mxu0 0.0
    %3151 = vmatprep.subr.mxu0 0.0
    %3152 = vmatpush1.msra.mxu0 0.0
    %3153 = vmatprep.subr.mxu0 0.0
    %3154 = vmatpush1.msra.mxu0 0.0
    %3155 = vmatprep.subr.mxu0 0.0
    %3156 = vmatpush1.msra.mxu0 0.0
    %3157 = vmatprep.subr.mxu0 0.0
    %3158 = vmatpush1.msra.mxu0 0.0
    %3159 = vmatprep.subr.mxu0 0.0
    %3160 = vmatpush1.msra.mxu0 0.0
    %3161 = vmatprep.subr.mxu0 0.0
    %3162 = vmatpush1.msra.mxu0 0.0
    %3163 = vmatprep.subr.mxu0 0.0
    %3164 = vmatpush1.msra.mxu0 0.0
    %3165 = vmatprep.subr.mxu0 0.0
    %3166 = vmatpush1.msra.mxu0 0.0
    %3167 = vmatprep.subr.mxu0 0.0
    %3168 = vmatpush1.msra.mxu0 0.0
    %3169 = vmatprep.subr.mxu0 0.0
    %3170 = vmatpush1.msra.mxu0 0.0
    %3171 = vmatprep.subr.mxu0 0.0
    %3172 = vmatpush1.msra.mxu0 0.0
    %3173 = vmatprep.subr.mxu0 0.0
    %3174 = vmatpush1.msra.mxu0 0.0
    %3175 = vmatprep.mubr.f32.mxu0 0.0
    %3176 = vmatmul.mubr.f32.gmra.mrb[0].mxu0 %v3109
    %v3177 = vpop.f32.mrb[0].mxu0
    %v3178 = vadd.f32 %v3103, %v3177
    %v3179 = vpop.f32.mrb[0].mxu0
    %3180 = vdwg.mxu0
    %3181 = vrot.lane.b32.xlu0 %v1926, 32
    %v3182 = vpop.permute.xlu0 %3181
    %v3184 = vadd.f32 %v3178, %v3182
    %v3185 = vsel %vm2099, %v3184, -inf
    %3186 = vmax.xlane.f32.xlu0 %v3185
    %v3187 = vpop.xlane.xlu0 %3186
    %v3188 = vsub.f32 %v3184, %v3187
    %v3189 = vmul.f32 %v3188, 1.442695
    %v3190 = vpow.pop %v3189
    %v3191 = vsel %vm2099, %v3190, 0.0
    %3192 = vadd.xlane.f32.xlu0 %v3191
    %v3193 = vpop.xlane.xlu0 %3192
    %v3194 = vlog2.pop %v3193
    %v3195 = vmul.f32 %v3194, 0.6931472
    %v3196 = vsub.f32 %v3188, %v3195
    %v3197 = vsel %vm2099, %v2719, -inf
    %3198 = vmax.xlane.f32.xlu0 %v3197
    %v3199 = vpop.xlane.xlu0 %3198
    %v3200 = vsub.f32 %v2719, %v3199
    %v3201 = vmul.f32 %v3200, 1.442695
    %v3202 = vpow.pop %v3201
    %v3203 = vsel %vm2099, %v3202, 0.0
    %3204 = vadd.xlane.f32.xlu0 %v3203
    %v3205 = vpop.xlane.xlu0 %3204
    %v3206 = vrcp.pop %v3205
    %v3207 = vmul.f32 %v3202, %v3206
    %3209 = vset.pattern.permute.xlu0 64
    %3210 = vperm.xlu0 %3209, %v3015
    %v3211 = vpop.permute.xlu0 %3210
    %v3213 = vmul.f32 %v3211, %v3207
    %v3214 = vsub.f32 1.0, %v3015
    %3216 = vset.pattern.permute.xlu0 64
    %3217 = vperm.xlu0 %3216, %v3214
    %v3218 = vpop.permute.xlu0 %3217
    %v3220 = vmul.f32 %v3218, %v3196
    %v3221 = vadd.f32 %v3213, %v3220
    %3222 = vst.msk [vmem:[#allocation8] sm:$0x3] %vm2099, %v3221
    %3224 = vst.msk [vmem:[#allocation9] sm:$0x3] %vm2099, %v3108
    %3226 = vrot.lane.b32.xlu0 %v2979, 96
    %v3227 = vpop.permute.xlu0 %3226
    %3229 = vst.msk [vmem:[#allocation11] sm:$0x3] %vm2099, %v3227
    // Predicated region
    $region34: #{summarizer_forward.1} parent=1 // pred_check
      _
    $region35: #{summarizer_forward.1} parent=1 // pred_check_branch
      %3231 = sbr.rel (0) target = $region37
    $region36: #{summarizer_forward.1} parent=1 // pred_region
      %s3233 = ssub.s32 32, 32
      %3234 = vsyncadd [#allocation5], %s3233
      %s3236 = sshll.u32 [#allocation8], 4
      %s3237 = int_to_ptr.vmem [resolvable:$true] %s3236
      %3239 = dma.vmem_to_hbm [thread:$0]  %s3237, 32, %s6, [#allocation5]
    $region37: #{summarizer_forward.1} parent=1 // pred_fallthru
      _
    // Predicated region
    $region38: #{summarizer_forward.1} parent=1 // pred_check
      _
    $region39: #{summarizer_forward.1} parent=1 // pred_check_branch
      %3241 = sbr.rel (0) target = $region41
    $region40: #{summarizer_forward.1} parent=1 // pred_region
      %s3243 = ssub.s32 32, 32
      %3244 = vsyncadd [#allocation10], %s3243
      %s3246 = sshll.u32 [#allocation9], 4
      %s3247 = int_to_ptr.vmem [resolvable:$true] %s3246
      %3249 = dma.vmem_to_hbm [thread:$0]  %s3247, 32, %s7, [#allocation10]
    $region41: #{summarizer_forward.1} parent=1 // pred_fallthru
      _
    // Predicated region
    $region42: #{summarizer_forward.1} parent=1 // pred_check
      _
    $region43: #{summarizer_forward.1} parent=1 // pred_check_branch
      %3251 = sbr.rel (0) target = $region45
    $region44: #{summarizer_forward.1} parent=1 // pred_region
      %s3253 = ssub.s32 32, 32
      %3254 = vsyncadd [#allocation10], %s3253
      %s3256 = sshll.u32 [#allocation11], 4
      %s3257 = int_to_ptr.vmem [resolvable:$true] %s3256
      %3259 = dma.vmem_to_hbm [thread:$0]  %s3257, 32, %s8, [#allocation10]
    $region45: #{summarizer_forward.1} parent=1 // pred_fallthru
      _
    // Predicated region
    $region46: #{summarizer_forward.1} parent=1 // pred_check
      _
    $region47: #{summarizer_forward.1} parent=1 // pred_check_branch
      %3261 = sbr.rel (0) target = $region49
    $region48: #{summarizer_forward.1} parent=1 // pred_region
      %3262 = dma.done [#allocation5], 32
    $region49: #{summarizer_forward.1} parent=1 // pred_fallthru
      _
    // Predicated region
    $region50: #{summarizer_forward.1} parent=1 // pred_check
      _
    $region51: #{summarizer_forward.1} parent=1 // pred_check_branch
      %3264 = sbr.rel (0) target = $region53
    $region52: #{summarizer_forward.1} parent=1 // pred_region
      %3265 = dma.done [#allocation10], 32
    $region53: #{summarizer_forward.1} parent=1 // pred_fallthru
      _
    // Predicated region
    $region54: #{summarizer_forward.1} parent=1 // pred_check
      _
    $region55: #{summarizer_forward.1} parent=1 // pred_check_branch
      %3267 = sbr.rel (0) target = $region57
    $region56: #{summarizer_forward.1} parent=1 // pred_region
      %3268 = dma.done [#allocation10], 32
    $region57: #{summarizer_forward.1} parent=1 // pred_fallthru
      _
    %3269 = vsyncpa [#allocation4], 1
    %3270 = vsyncpa [#allocation5], 1
    %3271 = vsyncpa [#allocation10], 1
    %3272 = vsyncpa [#allocation6], 1

</llo_original>
